<compile_context>
chip_gen: v5e
topology: v5e:2x2
jax: 0.10.0
libtpu: 0.0.40
codegen_flags: <defaults>
</compile_context>

<pallas_src>
import jax
import jax.numpy as jnp
from jax.experimental import pallas as pl
from jax.experimental.pallas import tpu as pltpu

# ----------------------------- model dimensions ------------------------------
EMB_DIM = 300          # Baseline encoder => u, v are [B, 300], classifier input = 4*300
D_PAD = 384            # 3 * 128: lane-aligned feature-chunk stride inside VMEM only
HID_DIM = 512          # classifier hidden size (standard InferSent fc_dim)
N_CLASSES = 3          # entailment / neutral / contradiction
OUT_PAD = 128          # lane-dense padded output width (wrapper slices [:, :3])
MAX_TILE_B = 128       # MXU-aligned M
MAX_TILE_L = 32        # L-chunk size (bounds VMEM regardless of sequence length)


def _round_up(x, m):
    return ((x + m - 1) // m) * m


def nli_kernel(pe_ref, he_ref, lens_ref,
               w1_ref, b1_ref, w2_ref, b2_ref, w3_ref, b3_ref,
               out_ref, acc_u_ref, acc_v_ref, feats_ref):
    """One (batch tile, L chunk) step of the NLINet forward (post-embedding).

    pe/he   : [tile_b, tile_l, 300] bf16 premise / hypothesis embedding chunks
    lens    : [tile_b, 4] f32 packed (plen, hlen, 1/plen, 1/hlen)
    w1      : [4*D_PAD, H] bf16 fused first classifier layer (zero rows at pad cols)
    w2      : [H, H] bf16 ; w3: [H, OUT_PAD] bf16 ; biases f32 [1, H] / [1, OUT_PAD]
    out     : [tile_b, OUT_PAD] f32 lane-dense logits (cols 3: are zero-padding)
    acc_u/v : [tile_b, 300] f32 partial-sum accumulators across L chunks
    feats   : [tile_b, 4*D_PAD] bf16 staging for cat(u, v, |u-v|, u*v), 384-strided chunks
    """
    j = pl.program_id(1)
    tb, tl, _ = pe_ref.shape

    @pl.when(j == 0)
    def _init():
        acc_u_ref[...] = jnp.zeros_like(acc_u_ref)
        acc_v_ref[...] = jnp.zeros_like(acc_v_ref)

    # Baseline encoder: masked sum over this L chunk. Mask is built in-kernel from lengths;
    # the multiply stays in bf16 (exact for 0/1), only the reduction is accumulated in f32.
    pos = (jax.lax.broadcasted_iota(jnp.int32, (tb, tl, 1), 1) + j * tl).astype(jnp.float32)
    plen = lens_ref[:, 0:1][:, None, :]                        # [tb, 1, 1]
    hlen = lens_ref[:, 1:2][:, None, :]
    pmask = (pos < plen).astype(pe_ref.dtype)                  # [tb, tl, 1] bf16 0/1
    hmask = (pos < hlen).astype(he_ref.dtype)

    acc_u_ref[...] += jnp.sum((pe_ref[...] * pmask).astype(jnp.float32), axis=1)
    acc_v_ref[...] += jnp.sum((he_ref[...] * hmask).astype(jnp.float32), axis=1)

    @pl.when(j == pl.num_programs(1) - 1)
    def _finalize():
        pinv = lens_ref[:, 2:3]                                # [tb, 1] f32
        hinv = lens_ref[:, 3:4]
        u = acc_u_ref[...] * pinv                              # masked mean
        v = acc_v_ref[...] * hinv

        # features = cat([u, v, |u-v|, u*v]) staged at lane-aligned 384-strided offsets so W1
        # is applied as a single K=1536 bf16 MXU matmul; the pad gaps are explicitly zeroed
        # (w1 rows there are zero too, but scratch must not hold stale NaNs).
        pad = jnp.zeros((tb, D_PAD - EMB_DIM), jnp.bfloat16)
        chunks = (u, v, jnp.abs(u - v), u * v)
        for c, x in enumerate(chunks):
            feats_ref[:, c * D_PAD:c * D_PAD + EMB_DIM] = x.astype(jnp.bfloat16)
            feats_ref[:, c * D_PAD + EMB_DIM:(c + 1) * D_PAD] = pad

        h1 = jnp.tanh(jnp.dot(feats_ref[...], w1_ref[...],
                              preferred_element_type=jnp.float32) + b1_ref[...])
        h2 = jnp.tanh(jnp.dot(h1.astype(jnp.bfloat16), w2_ref[...],
                              preferred_element_type=jnp.float32) + b2_ref[...])
        out_ref[...] = (jnp.dot(h2.astype(jnp.bfloat16), w3_ref[...],
                                preferred_element_type=jnp.float32)
                        + b3_ref[...]).astype(out_ref.dtype)


def prepare_params(params):
    """One-time repack of torch-layout params into kernel layout (bf16 weights)."""
    emb = params["embeddings"].astype(jnp.bfloat16)            # [V, 300] bf16, no padded columns

    w1 = params["w1"]
    w1_pad = jnp.zeros((4 * D_PAD, HID_DIM), jnp.float32)
    for c in range(4):
        w1_pad = w1_pad.at[c * D_PAD:c * D_PAD + EMB_DIM].set(
            w1[c * EMB_DIM:(c + 1) * EMB_DIM])

    w3_pad = jnp.zeros((HID_DIM, OUT_PAD), jnp.float32).at[:, :N_CLASSES].set(params["w3"])
    b3_pad = jnp.zeros((OUT_PAD,), jnp.float32).at[:N_CLASSES].set(params["b3"])

    return {
        "emb": emb,
        "w1": w1_pad.astype(jnp.bfloat16), "b1": params["b1"][None, :].astype(jnp.float32),
        "w2": params["w2"].astype(jnp.bfloat16), "b2": params["b2"][None, :].astype(jnp.float32),
        "w3": w3_pad.astype(jnp.bfloat16), "b3": b3_pad[None, :],
    }


def _select_tiles(B, L):
    if B >= 2 * MAX_TILE_B:
        tile_b = MAX_TILE_B           # v6e could go 256; keep 128 as the safe cross-gen default
    elif B > 8:
        # >= 2 grid steps on the parallel axis so both v7x TensorCores get work
        tile_b = max(8, _round_up((B + 1) // 2, 8))
    else:
        tile_b = 8
    tile_l = min(MAX_TILE_L, _round_up(L, 8))
    return tile_b, tile_l


def _vmem_limit_bytes(tile_b, tile_l):
    stream = 2 * 2 * tile_b * tile_l * EMB_DIM * 2             # pe+he, double-buffered, bf16
    lens = 2 * tile_b * 4 * 4
    weights = 2 * 2 * (4 * D_PAD * HID_DIM + HID_DIM * HID_DIM + HID_DIM * OUT_PAD)
    biases = 2 * 4 * (HID_DIM + HID_DIM + OUT_PAD)
    out = 2 * tile_b * OUT_PAD * 4
    scratch = tile_b * (2 * EMB_DIM * 4 + 4 * D_PAD * 2)
    temps = 2 * 2 * tile_b * tile_l * EMB_DIM * 4              # f32 chunk temporaries (slack x2)
    total = stream + lens + weights + biases + out + scratch + temps
    # generous headroom, but stay well inside v7x's 64 MiB physical VMEM
    return int(min(56 * 2 ** 20, max(16 * 2 ** 20, total * 1.5)))


def nlinet_forward(prem_ids, p_lengths, hyp_ids, h_lengths, kparams):
    """Embedding gather + one 2-D-grid pallas_call over the fused NLI head."""
    emb = kparams["emb"]                                       # [V, 300] bf16 (frozen)
    B, L = prem_ids.shape
    tile_b, tile_l = _select_tiles(B, L)
    B_pad = _round_up(B, tile_b)
    L_pad = _round_up(L, tile_l)
    n_btiles = B_pad // tile_b
    n_ltiles = L_pad // tile_l

    def pad_ids(x):
        return jnp.pad(x, ((0, B_pad - B), (0, L_pad - L)), constant_values=0)

    def pad_len(x):
        return jnp.pad(x, (0, B_pad - B), constant_values=1) if B_pad != B else x

    prem_ids = pad_ids(prem_ids)
    hyp_ids = pad_ids(hyp_ids)
    p_len = pad_len(p_lengths).astype(jnp.float32)
    h_len = pad_len(h_lengths).astype(jnp.float32)
    lens = jnp.stack([p_len, h_len,
                      1.0 / jnp.maximum(p_len, 1.0),
                      1.0 / jnp.maximum(h_len, 1.0)], axis=1)  # [B_pad, 4] f32

    # TODO(synk): fuse this gather into the kernel (scalar-prefetched token ids + per-row DMA or
    # VMEM-resident table when it fits) to remove the [B, L, 300] bf16 HBM round trip.
    pe = jnp.take(emb, prem_ids, axis=0)                       # [B_pad, L_pad, 300] bf16
    he = jnp.take(emb, hyp_ids, axis=0)

    batch_l = lambda i, j: (i, j, 0)     # streamed per (batch tile, L chunk)
    batch = lambda i, j: (i, 0)          # per batch tile, constant over L chunks
    const = lambda i, j: (0, 0)          # VMEM-resident across the grid (weights / biases)

    out = pl.pallas_call(
        nli_kernel,
        out_shape=jax.ShapeDtypeStruct((B_pad, OUT_PAD), jnp.float32),
        grid=(n_btiles, n_ltiles),
        in_specs=[
            pl.BlockSpec((tile_b, tile_l, EMB_DIM), batch_l),   # pe
            pl.BlockSpec((tile_b, tile_l, EMB_DIM), batch_l),   # he
            pl.BlockSpec((tile_b, 4), batch),                   # packed lengths / inverses
            pl.BlockSpec((4 * D_PAD, HID_DIM), const),          # w1 (bf16)
            pl.BlockSpec((1, HID_DIM), const),                  # b1
            pl.BlockSpec((HID_DIM, HID_DIM), const),            # w2 (bf16)
            pl.BlockSpec((1, HID_DIM), const),                  # b2
            pl.BlockSpec((HID_DIM, OUT_PAD), const),            # w3 (bf16)
            pl.BlockSpec((1, OUT_PAD), const),                  # b3
        ],
        out_specs=pl.BlockSpec((tile_b, OUT_PAD), batch),
        scratch_shapes=[
            pltpu.VMEM((tile_b, EMB_DIM), jnp.float32),         # acc_u
            pltpu.VMEM((tile_b, EMB_DIM), jnp.float32),         # acc_v
            pltpu.VMEM((tile_b, 4 * D_PAD), jnp.bfloat16),      # feats staging
        ],
        compiler_params=pltpu.CompilerParams(
            dimension_semantics=("parallel", "arbitrary"),
            vmem_limit_bytes=_vmem_limit_bytes(tile_b, tile_l),
        ),
    )(pe, he, lens,
      kparams["w1"], kparams["b1"], kparams["w2"], kparams["b2"],
      kparams["w3"], kparams["b3"])

    return out[:B, :N_CLASSES]


def init_params(key, vocab_size):
    ks = jax.random.split(key, 6)
    scale = 0.1
    return {
        "embeddings": scale * jax.random.normal(ks[0], (vocab_size, EMB_DIM), jnp.float32),
        "w1": scale * jax.random.normal(ks[1], (4 * EMB_DIM, HID_DIM), jnp.float32),
        "b1": jnp.zeros((HID_DIM,), jnp.float32),
        "w2": scale * jax.random.normal(ks[2], (HID_DIM, HID_DIM), jnp.float32),
        "b2": jnp.zeros((HID_DIM,), jnp.float32),
        "w3": scale * jax.random.normal(ks[3], (HID_DIM, N_CLASSES), jnp.float32),
        "b3": jnp.zeros((N_CLASSES,), jnp.float32),
    }


if __name__ == "__main__":
    key = jax.random.PRNGKey(0)
    k_param, k_prem, k_hyp = jax.random.split(key, 3)

    VOCAB = 50
    B, L = 2, 8

    params = init_params(k_param, VOCAB)
    kparams = prepare_params(params)

    prem_ids = jax.random.randint(k_prem, (B, L), 0, VOCAB, dtype=jnp.int32)
    hyp_ids = jax.random.randint(k_hyp, (B, L), 0, VOCAB, dtype=jnp.int32)
    p_lengths = jnp.array([8, 5], dtype=jnp.int32)
    h_lengths = jnp.array([6, 8], dtype=jnp.int32)

    run = jax.jit(nlinet_forward)
    out = run(prem_ids, p_lengths, hyp_ids, h_lengths, kparams)
    out = jax.block_until_ready(out)

    # Pure-JAX reference of the same forward pass (same bf16-rounded embeddings / weights).
    def ref_forward():
        r = lambda w: w.astype(jnp.bfloat16).astype(jnp.float32)
        emb = kparams["emb"].astype(jnp.float32)
        pe = jnp.take(emb, prem_ids, axis=0)
        he = jnp.take(emb, hyp_ids, axis=0)
        pos = jnp.arange(L)[None, :]
        pmask = (pos < p_lengths[:, None]).astype(jnp.float32)[:, :, None]
        hmask = (pos < h_lengths[:, None]).astype(jnp.float32)[:, :, None]
        pinv = (1.0 / jnp.maximum(p_lengths.astype(jnp.float32), 1.0))[:, None]
        hinv = (1.0 / jnp.maximum(h_lengths.astype(jnp.float32), 1.0))[:, None]
        u = jnp.sum(pe * pmask, axis=1) * pinv
        v = jnp.sum(he * hmask, axis=1) * hinv
        feats = jnp.concatenate([u, v, jnp.abs(u - v), u * v], axis=1)
        h1 = jnp.tanh(feats @ r(params["w1"]) + params["b1"])
        h2 = jnp.tanh(h1 @ r(params["w2"]) + params["b2"])
        return h2 @ r(params["w3"]) + params["b3"]

    ref = ref_forward()
    assert out.shape == (B, N_CLASSES)
    assert jnp.allclose(out, ref, atol=3e-2, rtol=3e-2), (out, ref)

    print("KERNEL_OK")
</pallas_src>

<mosaic_0001>
module attributes {stable_mosaic.version = 11 : i64} {
  func.func @nli_kernel(%arg0: i32, %arg1: i32, %arg2: memref<8x8x300xbf16, #tpu.memory_space<vmem>>, %arg3: memref<8x8x300xbf16, #tpu.memory_space<vmem>>, %arg4: memref<8x4xf32, #tpu.memory_space<vmem>>, %arg5: memref<1536x512xbf16, #tpu.memory_space<vmem>>, %arg6: memref<1x512xf32, #tpu.memory_space<vmem>>, %arg7: memref<512x512xbf16, #tpu.memory_space<vmem>>, %arg8: memref<1x512xf32, #tpu.memory_space<vmem>>, %arg9: memref<512x128xbf16, #tpu.memory_space<vmem>>, %arg10: memref<1x128xf32, #tpu.memory_space<vmem>>, %arg11: memref<8x128xf32, #tpu.memory_space<vmem>>, %arg12: memref<8x300xf32, #tpu.memory_space<vmem>>, %arg13: memref<8x300xf32, #tpu.memory_space<vmem>>, %arg14: memref<8x1536xbf16, #tpu.memory_space<vmem>>) attributes {dimension_semantics = [#tpu.dimension_semantics<parallel>, #tpu.dimension_semantics<arbitrary>], iteration_bounds = array<i64: 1, 1>, scalar_prefetch = 0 : i64, scratch_operands = 3 : i64, tpu.core_type = #tpu.core_type<tc>, window_params = [{transform_indices = @transform_0, window_bounds = array<i64: 8, 8, 300>}, {transform_indices = @transform_1, window_bounds = array<i64: 8, 8, 300>}, {transform_indices = @transform_2, window_bounds = array<i64: 8, 4>}, {pipeline_mode = #tpu.pipeline_mode<synchronous>, transform_indices = @transform_3, window_bounds = array<i64: 1536, 512>}, {pipeline_mode = #tpu.pipeline_mode<synchronous>, transform_indices = @transform_4, window_bounds = array<i64: 1, 512>}, {pipeline_mode = #tpu.pipeline_mode<synchronous>, transform_indices = @transform_5, window_bounds = array<i64: 512, 512>}, {pipeline_mode = #tpu.pipeline_mode<synchronous>, transform_indices = @transform_6, window_bounds = array<i64: 1, 512>}, {pipeline_mode = #tpu.pipeline_mode<synchronous>, transform_indices = @transform_7, window_bounds = array<i64: 512, 128>}, {pipeline_mode = #tpu.pipeline_mode<synchronous>, transform_indices = @transform_8, window_bounds = array<i64: 1, 128>}, {transform_indices = @transform_9, window_bounds = array<i64: 8, 128>}]} {
    %c0_i32 = arith.constant 0 : i32
    %0 = arith.cmpi eq, %arg1, %c0_i32 : i32
    %1 = arith.extui %0 : i1 to i32
    %c0_i32_0 = arith.constant 0 : i32
    %2 = arith.cmpi ne, %1, %c0_i32_0 : i32
    scf.if %2 {
      %cst_20 = arith.constant 0.000000e+00 : f32
      %41 = vector.broadcast %cst_20 : f32 to vector<8x300xf32>
      %c0_21 = arith.constant 0 : index
      %c0_22 = arith.constant 0 : index
      %42 = vector.load %arg12[%c0_21, %c0_22] : memref<8x300xf32, #tpu.memory_space<vmem>>, vector<8x300xf32>
      tpu.vector_store %arg12[%c0_21, %c0_22], %41 {strides = array<i32>} : memref<8x300xf32, #tpu.memory_space<vmem>>, vector<8x300xf32>,
      %cst_23 = arith.constant 0.000000e+00 : f32
      %43 = vector.broadcast %cst_23 : f32 to vector<8x300xf32>
      %c0_24 = arith.constant 0 : index
      %c0_25 = arith.constant 0 : index
      %44 = vector.load %arg13[%c0_24, %c0_25] : memref<8x300xf32, #tpu.memory_space<vmem>>, vector<8x300xf32>
      tpu.vector_store %arg13[%c0_24, %c0_25], %43 {strides = array<i32>} : memref<8x300xf32, #tpu.memory_space<vmem>>, vector<8x300xf32>,
    } else {
    }
    %3 = tpu.iota {dimensions = array<i32: 1>} : vector<8x8x1xi32>
    %c8_i32 = arith.constant 8 : i32
    %4 = arith.muli %arg1, %c8_i32 : i32
    %5 = vector.broadcast %4 : i32 to vector<8x8x1xi32>
    %6 = arith.addi %3, %5 : vector<8x8x1xi32>
    %7 = arith.sitofp %6 : vector<8x8x1xi32> to vector<8x8x1xf32>
    %c0 = arith.constant 0 : index
    %c0_1 = arith.constant 0 : index
    %8 = vector.load %arg4[%c0, %c0_1] : memref<8x4xf32, #tpu.memory_space<vmem>>, vector<8x1xf32>
    %9 = vector.shape_cast %8 : vector<8x1xf32> to vector<8x1x1xf32>
    %c0_2 = arith.constant 0 : index
    %c1 = arith.constant 1 : index
    %10 = vector.load %arg4[%c0_2, %c1] : memref<8x4xf32, #tpu.memory_space<vmem>>, vector<8x1xf32>
    %11 = vector.shape_cast %10 : vector<8x1xf32> to vector<8x1x1xf32>
    %12 = vector.broadcast %9 : vector<8x1x1xf32> to vector<8x8x1xf32>
    %13 = arith.cmpf olt, %7, %12 : vector<8x8x1xf32>
    %14 = arith.extui %13 : vector<8x8x1xi1> to vector<8x8x1xi32>
    %15 = arith.sitofp %14 : vector<8x8x1xi32> to vector<8x8x1xf32>
    %16 = arith.truncf %15 : vector<8x8x1xf32> to vector<8x8x1xbf16>
    %17 = vector.broadcast %11 : vector<8x1x1xf32> to vector<8x8x1xf32>
    %18 = arith.cmpf olt, %7, %17 : vector<8x8x1xf32>
    %19 = arith.extui %18 : vector<8x8x1xi1> to vector<8x8x1xi32>
    %20 = arith.sitofp %19 : vector<8x8x1xi32> to vector<8x8x1xf32>
    %21 = arith.truncf %20 : vector<8x8x1xf32> to vector<8x8x1xbf16>
    %c0_3 = arith.constant 0 : index
    %c0_4 = arith.constant 0 : index
    %22 = vector.load %arg12[%c0_3, %c0_4] : memref<8x300xf32, #tpu.memory_space<vmem>>, vector<8x300xf32>
    %c0_5 = arith.constant 0 : index
    %c0_6 = arith.constant 0 : index
    %c0_7 = arith.constant 0 : index
    %23 = vector.load %arg2[%c0_5, %c0_6, %c0_7] : memref<8x8x300xbf16, #tpu.memory_space<vmem>>, vector<8x8x300xbf16>
    %24 = vector.broadcast %16 : vector<8x8x1xbf16> to vector<8x8x300xbf16>
    %25 = arith.mulf %23, %24 : vector<8x8x300xbf16>
    %26 = arith.extf %25 : vector<8x8x300xbf16> to vector<8x8x300xf32>
    %cst = arith.constant dense<0.000000e+00> : vector<8x300xf32>
    %27 = vector.multi_reduction <add>, %26, %cst [1] : vector<8x8x300xf32> to vector<8x300xf32>
    %28 = arith.addf %22, %27 : vector<8x300xf32>
    %c0_8 = arith.constant 0 : index
    %c0_9 = arith.constant 0 : index
    %29 = vector.load %arg12[%c0_8, %c0_9] : memref<8x300xf32, #tpu.memory_space<vmem>>, vector<8x300xf32>
    tpu.vector_store %arg12[%c0_8, %c0_9], %28 {strides = array<i32>} : memref<8x300xf32, #tpu.memory_space<vmem>>, vector<8x300xf32>,
    %c0_10 = arith.constant 0 : index
    %c0_11 = arith.constant 0 : index
    %30 = vector.load %arg13[%c0_10, %c0_11] : memref<8x300xf32, #tpu.memory_space<vmem>>, vector<8x300xf32>
    %c0_12 = arith.constant 0 : index
    %c0_13 = arith.constant 0 : index
    %c0_14 = arith.constant 0 : index
    %31 = vector.load %arg3[%c0_12, %c0_13, %c0_14] : memref<8x8x300xbf16, #tpu.memory_space<vmem>>, vector<8x8x300xbf16>
    %32 = vector.broadcast %21 : vector<8x8x1xbf16> to vector<8x8x300xbf16>
    %33 = arith.mulf %31, %32 : vector<8x8x300xbf16>
    %34 = arith.extf %33 : vector<8x8x300xbf16> to vector<8x8x300xf32>
    %cst_15 = arith.constant dense<0.000000e+00> : vector<8x300xf32>
    %35 = vector.multi_reduction <add>, %34, %cst_15 [1] : vector<8x8x300xf32> to vector<8x300xf32>
    %36 = arith.addf %30, %35 : vector<8x300xf32>
    %c0_16 = arith.constant 0 : index
    %c0_17 = arith.constant 0 : index
    %37 = vector.load %arg13[%c0_16, %c0_17] : memref<8x300xf32, #tpu.memory_space<vmem>>, vector<8x300xf32>
    tpu.vector_store %arg13[%c0_16, %c0_17], %36 {strides = array<i32>} : memref<8x300xf32, #tpu.memory_space<vmem>>, vector<8x300xf32>,
    %c0_i32_18 = arith.constant 0 : i32
    %38 = arith.cmpi eq, %arg1, %c0_i32_18 : i32
    %39 = arith.extui %38 : i1 to i32
    %c0_i32_19 = arith.constant 0 : i32
    %40 = arith.cmpi ne, %39, %c0_i32_19 : i32
    scf.if %40 {
      %c0_20 = arith.constant 0 : index
      %c2 = arith.constant 2 : index
      %41 = vector.load %arg4[%c0_20, %c2] : memref<8x4xf32, #tpu.memory_space<vmem>>, vector<8x1xf32>
      %c0_21 = arith.constant 0 : index
      %c3 = arith.constant 3 : index
      %42 = vector.load %arg4[%c0_21, %c3] : memref<8x4xf32, #tpu.memory_space<vmem>>, vector<8x1xf32>
      %c0_22 = arith.constant 0 : index
      %c0_23 = arith.constant 0 : index
      %43 = vector.load %arg12[%c0_22, %c0_23] : memref<8x300xf32, #tpu.memory_space<vmem>>, vector<8x300xf32>
      %44 = vector.broadcast %41 : vector<8x1xf32> to vector<8x300xf32>
      %45 = arith.mulf %43, %44 : vector<8x300xf32>
      %c0_24 = arith.constant 0 : index
      %c0_25 = arith.constant 0 : index
      %46 = vector.load %arg13[%c0_24, %c0_25] : memref<8x300xf32, #tpu.memory_space<vmem>>, vector<8x300xf32>
      %47 = vector.broadcast %42 : vector<8x1xf32> to vector<8x300xf32>
      %48 = arith.mulf %46, %47 : vector<8x300xf32>
      %cst_26 = arith.constant 0.000000e+00 : bf16
      %49 = vector.broadcast %cst_26 : bf16 to vector<8x84xbf16>
      %50 = arith.subf %45, %48 : vector<8x300xf32>
      %51 = math.absf %50 : vector<8x300xf32>
      %52 = arith.mulf %45, %48 : vector<8x300xf32>
      %53 = arith.truncf %45 : vector<8x300xf32> to vector<8x300xbf16>
      %c0_27 = arith.constant 0 : index
      %c0_28 = arith.constant 0 : index
      %54 = vector.load %arg14[%c0_27, %c0_28] : memref<8x1536xbf16, #tpu.memory_space<vmem>>, vector<8x300xbf16>
      tpu.vector_store %arg14[%c0_27, %c0_28], %53 {strides = array<i32>} : memref<8x1536xbf16, #tpu.memory_space<vmem>>, vector<8x300xbf16>,
      %c0_29 = arith.constant 0 : index
      %c300 = arith.constant 300 : index
      %55 = vector.load %arg14[%c0_29, %c300] : memref<8x1536xbf16, #tpu.memory_space<vmem>>, vector<8x84xbf16>
      tpu.vector_store %arg14[%c0_29, %c300], %49 {strides = array<i32>} : memref<8x1536xbf16, #tpu.memory_space<vmem>>, vector<8x84xbf16>,
      %56 = arith.truncf %48 : vector<8x300xf32> to vector<8x300xbf16>
      %c0_30 = arith.constant 0 : index
      %c384 = arith.constant 384 : index
      %57 = vector.load %arg14[%c0_30, %c384] : memref<8x1536xbf16, #tpu.memory_space<vmem>>, vector<8x300xbf16>
      tpu.vector_store %arg14[%c0_30, %c384], %56 {strides = array<i32>} : memref<8x1536xbf16, #tpu.memory_space<vmem>>, vector<8x300xbf16>,
      %c0_31 = arith.constant 0 : index
      %c684 = arith.constant 684 : index
      %58 = vector.load %arg14[%c0_31, %c684] : memref<8x1536xbf16, #tpu.memory_space<vmem>>, vector<8x84xbf16>
      tpu.vector_store %arg14[%c0_31, %c684], %49 {strides = array<i32>} : memref<8x1536xbf16, #tpu.memory_space<vmem>>, vector<8x84xbf16>,
      %59 = arith.truncf %51 : vector<8x300xf32> to vector<8x300xbf16>
      %c0_32 = arith.constant 0 : index
      %c768 = arith.constant 768 : index
      %60 = vector.load %arg14[%c0_32, %c768] : memref<8x1536xbf16, #tpu.memory_space<vmem>>, vector<8x300xbf16>
      tpu.vector_store %arg14[%c0_32, %c768], %59 {strides = array<i32>} : memref<8x1536xbf16, #tpu.memory_space<vmem>>, vector<8x300xbf16>,
      %c0_33 = arith.constant 0 : index
      %c1068 = arith.constant 1068 : index
      %61 = vector.load %arg14[%c0_33, %c1068] : memref<8x1536xbf16, #tpu.memory_space<vmem>>, vector<8x84xbf16>
      tpu.vector_store %arg14[%c0_33, %c1068], %49 {strides = array<i32>} : memref<8x1536xbf16, #tpu.memory_space<vmem>>, vector<8x84xbf16>,
      %62 = arith.truncf %52 : vector<8x300xf32> to vector<8x300xbf16>
      %c0_34 = arith.constant 0 : index
      %c1152 = arith.constant 1152 : index
      %63 = vector.load %arg14[%c0_34, %c1152] : memref<8x1536xbf16, #tpu.memory_space<vmem>>, vector<8x300xbf16>
      tpu.vector_store %arg14[%c0_34, %c1152], %62 {strides = array<i32>} : memref<8x1536xbf16, #tpu.memory_space<vmem>>, vector<8x300xbf16>,
      %c0_35 = arith.constant 0 : index
      %c1452 = arith.constant 1452 : index
      %64 = vector.load %arg14[%c0_35, %c1452] : memref<8x1536xbf16, #tpu.memory_space<vmem>>, vector<8x84xbf16>
      tpu.vector_store %arg14[%c0_35, %c1452], %49 {strides = array<i32>} : memref<8x1536xbf16, #tpu.memory_space<vmem>>, vector<8x84xbf16>,
      %c0_36 = arith.constant 0 : index
      %c0_37 = arith.constant 0 : index
      %65 = vector.load %arg14[%c0_36, %c0_37] : memref<8x1536xbf16, #tpu.memory_space<vmem>>, vector<8x1536xbf16>
      %c0_38 = arith.constant 0 : index
      %c0_39 = arith.constant 0 : index
      %66 = vector.load %arg5[%c0_38, %c0_39] : memref<1536x512xbf16, #tpu.memory_space<vmem>>, vector<1536x512xbf16>
      %cst_40 = arith.constant dense<0.000000e+00> : vector<8x512xf32>
      %67 = tpu.matmul %65, %66, %cst_40 {dimension_numbers = #tpu.dot_dimension_numbers<[1], [0], [0], [1], [0, 0, 1, 1], [], []>} : vector<8x1536xbf16>, vector<1536x512xbf16>, vector<8x512xf32> -> vector<8x512xf32>
      %c0_41 = arith.constant 0 : index
      %c0_42 = arith.constant 0 : index
      %68 = vector.load %arg6[%c0_41, %c0_42] : memref<1x512xf32, #tpu.memory_space<vmem>>, vector<1x512xf32>
      %69 = vector.broadcast %68 : vector<1x512xf32> to vector<8x512xf32>
      %70 = arith.addf %67, %69 : vector<8x512xf32>
      %71 = math.tanh %70 : vector<8x512xf32>
      %72 = arith.truncf %71 : vector<8x512xf32> to vector<8x512xbf16>
      %c0_43 = arith.constant 0 : index
      %c0_44 = arith.constant 0 : index
      %73 = vector.load %arg7[%c0_43, %c0_44] : memref<512x512xbf16, #tpu.memory_space<vmem>>, vector<512x512xbf16>
      %cst_45 = arith.constant dense<0.000000e+00> : vector<8x512xf32>
      %74 = tpu.matmul %72, %73, %cst_45 {dimension_numbers = #tpu.dot_dimension_numbers<[1], [0], [0], [1], [0, 0, 1, 1], [], []>} : vector<8x512xbf16>, vector<512x512xbf16>, vector<8x512xf32> -> vector<8x512xf32>
      %c0_46 = arith.constant 0 : index
      %c0_47 = arith.constant 0 : index
      %75 = vector.load %arg8[%c0_46, %c0_47] : memref<1x512xf32, #tpu.memory_space<vmem>>, vector<1x512xf32>
      %76 = vector.broadcast %75 : vector<1x512xf32> to vector<8x512xf32>
      %77 = arith.addf %74, %76 : vector<8x512xf32>
      %78 = math.tanh %77 : vector<8x512xf32>
      %79 = arith.truncf %78 : vector<8x512xf32> to vector<8x512xbf16>
      %c0_48 = arith.constant 0 : index
      %c0_49 = arith.constant 0 : index
      %80 = vector.load %arg9[%c0_48, %c0_49] : memref<512x128xbf16, #tpu.memory_space<vmem>>, vector<512x128xbf16>
      %cst_50 = arith.constant dense<0.000000e+00> : vector<8x128xf32>
      %81 = tpu.matmul %79, %80, %cst_50 {dimension_numbers = #tpu.dot_dimension_numbers<[1], [0], [0], [1], [0, 0, 1, 1], [], []>} : vector<8x512xbf16>, vector<512x128xbf16>, vector<8x128xf32> -> vector<8x128xf32>
      %c0_51 = arith.constant 0 : index
      %c0_52 = arith.constant 0 : index
      %82 = vector.load %arg10[%c0_51, %c0_52] : memref<1x128xf32, #tpu.memory_space<vmem>>, vector<1x128xf32>
      %83 = vector.broadcast %82 : vector<1x128xf32> to vector<8x128xf32>
      %84 = arith.addf %81, %83 : vector<8x128xf32>
      %c0_53 = arith.constant 0 : index
      %c0_54 = arith.constant 0 : index
      %85 = vector.load %arg11[%c0_53, %c0_54] : memref<8x128xf32, #tpu.memory_space<vmem>>, vector<8x128xf32>
      tpu.vector_store %arg11[%c0_53, %c0_54], %84 {strides = array<i32>} : memref<8x128xf32, #tpu.memory_space<vmem>>, vector<8x128xf32>,
    } else {
    }
    return
  }
  func.func @transform_0(%arg0: i32, %arg1: i32) -> (i32, i32, i32) {
    %c0_i32 = arith.constant 0 : i32
    %c0_i32_0 = arith.constant 0 : i32
    return %arg0, %arg1, %c0_i32 : i32, i32, i32
  }
  func.func @transform_1(%arg0: i32, %arg1: i32) -> (i32, i32, i32) {
    %c0_i32 = arith.constant 0 : i32
    %c0_i32_0 = arith.constant 0 : i32
    return %arg0, %arg1, %c0_i32 : i32, i32, i32
  }
  func.func @transform_2(%arg0: i32, %arg1: i32) -> (i32, i32) {
    %c0_i32 = arith.constant 0 : i32
    %c0_i32_0 = arith.constant 0 : i32
    return %arg0, %c0_i32 : i32, i32
  }
  func.func @transform_3(%arg0: i32, %arg1: i32) -> (i32, i32) {
    %c0_i32 = arith.constant 0 : i32
    %c0_i32_0 = arith.constant 0 : i32
    %c0_i32_1 = arith.constant 0 : i32
    return %c0_i32, %c0_i32_0 : i32, i32
  }
  func.func @transform_4(%arg0: i32, %arg1: i32) -> (i32, i32) {
    %c0_i32 = arith.constant 0 : i32
    %c0_i32_0 = arith.constant 0 : i32
    %c0_i32_1 = arith.constant 0 : i32
    return %c0_i32, %c0_i32_0 : i32, i32
  }
  func.func @transform_5(%arg0: i32, %arg1: i32) -> (i32, i32) {
    %c0_i32 = arith.constant 0 : i32
    %c0_i32_0 = arith.constant 0 : i32
    %c0_i32_1 = arith.constant 0 : i32
    return %c0_i32, %c0_i32_0 : i32, i32
  }
  func.func @transform_6(%arg0: i32, %arg1: i32) -> (i32, i32) {
    %c0_i32 = arith.constant 0 : i32
    %c0_i32_0 = arith.constant 0 : i32
    %c0_i32_1 = arith.constant 0 : i32
    return %c0_i32, %c0_i32_0 : i32, i32
  }
  func.func @transform_7(%arg0: i32, %arg1: i32) -> (i32, i32) {
    %c0_i32 = arith.constant 0 : i32
    %c0_i32_0 = arith.constant 0 : i32
    %c0_i32_1 = arith.constant 0 : i32
    return %c0_i32, %c0_i32_0 : i32, i32
  }
  func.func @transform_8(%arg0: i32, %arg1: i32) -> (i32, i32) {
    %c0_i32 = arith.constant 0 : i32
    %c0_i32_0 = arith.constant 0 : i32
    %c0_i32_1 = arith.constant 0 : i32
    return %c0_i32, %c0_i32_0 : i32, i32
  }
  func.func @transform_9(%arg0: i32, %arg1: i32) -> (i32, i32) {
    %c0_i32 = arith.constant 0 : i32
    %c0_i32_0 = arith.constant 0 : i32
    return %arg0, %c0_i32 : i32, i32
  }
}

</mosaic_0001>

<llo_original>
// kernel: nlinet_forward.1
$region0: #{nlinet_forward.1}
  #allocation0 [shape = 'u32[]', space=smem, size = 0x4, offset = 0x4, fixed_abs, tag = 'smem constant byte address 0x4 - core index']
  #allocation1 [shape = 'u32[72,128]{1,0:T(1,128)}', space=vmem, size = 0x9000, scoped, tag = 'internal scratch']
  #allocation2 [shape = 'f32[8,300]{1,0:T(8,128)}', space=vmem, size = 0x3000, scoped, tag = 'scratch operand']
  #allocation3 [shape = 'f32[8,300]{1,0:T(8,128)}', space=vmem, size = 0x3000, scoped, tag = 'scratch operand']
  #allocation4 [shape = 'bf16[8,1536]{1,0:T(8,128)(2,1)}', space=vmem, size = 0x6000, scoped, tag = 'scratch operand']
  %s0 = inlined_call_operand.vmem [shape: bf16[8,8,300], index: 0, kind: input, shape index: {}]
  %s1 = inlined_call_operand.vmem [shape: bf16[8,8,300], index: 1, kind: input, shape index: {}]
  %s2 = inlined_call_operand.vmem [shape: f32[8,4], index: 2, kind: input, shape index: {}]
  %s3 = inlined_call_operand.hbm [shape: bf16[1536,512], index: 3, kind: input, shape index: {}]
  %s4 = inlined_call_operand.hbm [shape: f32[1,512], index: 4, kind: input, shape index: {}]
  %s5 = inlined_call_operand.hbm [shape: bf16[512,512], index: 5, kind: input, shape index: {}]
  %s6 = inlined_call_operand.hbm [shape: f32[1,512], index: 6, kind: input, shape index: {}]
  %s7 = inlined_call_operand.hbm [shape: bf16[512,128], index: 7, kind: input, shape index: {}]
  %s8 = inlined_call_operand.hbm [shape: f32[1,128], index: 8, kind: input, shape index: {}]
  %s9 = inlined_call_operand.vmem [shape: f32[8,128], index: 9, kind: output, shape index: {}]
  %s10 = sld [smem:[#allocation0]]
  $region78: #{nlinet_forward.1} parent=0
    _
  %s12 = ssub.s32 1, %s10
  %s13 = scalar_select 0, %s12, %s10
  $region1: #{nlinet_forward.1} parent=0
    #allocation5 [shape = 'u8[1572864]{0}', space=vmem, size = 0x180000, scoped, tag = 'input window, operand 3, single buffered']
    #allocation6 [shape = 's32[1]{0}', space=sflag, size = 0x4, scoped, tag = 'scoped memory for nlinet_forward.1']
    #allocation7 [shape = 'u8[2048]{0}', space=vmem, size = 0x800, scoped, tag = 'input window, operand 4, single buffered']
    #allocation8 [shape = 's32[1]{0}', space=sflag, size = 0x4, scoped, tag = 'scoped memory for nlinet_forward.1']
    #allocation9 [shape = 'u8[524288]{0}', space=vmem, size = 0x80000, scoped, tag = 'input window, operand 5, single buffered']
    #allocation10 [shape = 'u8[2048]{0}', space=vmem, size = 0x800, scoped, tag = 'input window, operand 6, single buffered']
    #allocation11 [shape = 's32[1]{0}', space=sflag, size = 0x4, scoped, tag = 'scoped memory for nlinet_forward.1']
    #allocation12 [shape = 'u8[131072]{0}', space=vmem, size = 0x20000, scoped, tag = 'input window, operand 7, single buffered']
    #allocation13 [shape = 'u8[512]{0}', space=vmem, size = 0x400, scoped, tag = 'input window, operand 8, single buffered']
    #allocation14 [shape = 's32[1]{0}', space=sflag, size = 0x4, scoped, tag = 'scoped memory for nlinet_forward.1']
    %14 = vsyncpa [#allocation6], 0
    %15 = vsyncpa [#allocation8], 0
    %16 = vsyncpa [#allocation11], 0
    %17 = vsyncpa [#allocation14], 0
    // Predicated region
    $region2: #{nlinet_forward.1} parent=1 // pred_check
      _
    $region3: #{nlinet_forward.1} parent=1 // pred_check_branch
      %19 = sbr.rel (0) target = $region5
    $region4: #{nlinet_forward.1} parent=1 // pred_region
      _
    $region5: #{nlinet_forward.1} parent=1 // pred_fallthru
      _
    // Predicated region
    $region6: #{nlinet_forward.1} parent=1 // pred_check
      _
    $region7: #{nlinet_forward.1} parent=1 // pred_check_branch
      %21 = sbr.rel (0) target = $region9
    $region8: #{nlinet_forward.1} parent=1 // pred_region
      _
    $region9: #{nlinet_forward.1} parent=1 // pred_fallthru
      _
    // Predicated region
    $region10: #{nlinet_forward.1} parent=1 // pred_check
      _
    $region11: #{nlinet_forward.1} parent=1 // pred_check_branch
      %23 = sbr.rel (0) target = $region13
    $region12: #{nlinet_forward.1} parent=1 // pred_region
      _
    $region13: #{nlinet_forward.1} parent=1 // pred_fallthru
      _
    // Predicated region
    $region14: #{nlinet_forward.1} parent=1 // pred_check
      _
    $region15: #{nlinet_forward.1} parent=1 // pred_check_branch
      %25 = sbr.rel (0) target = $region17
    $region16: #{nlinet_forward.1} parent=1 // pred_region
      %27 = vsyncadd [#allocation6], 0
      %s28 = sshll.u32 %s3, 4
      %s29 = int_to_ptr.hbm [resolvable:$true] %s28
      %s30 = sshll.u32 [#allocation5], 4
      %s31 = int_to_ptr.vmem [resolvable:$true] %s30
      %36 = dma.hbm_to_vmem [thread:$0]  %s29, 49152, %s31, [#allocation6], 256, 256, 16
    $region17: #{nlinet_forward.1} parent=1 // pred_fallthru
      _
    // Predicated region
    $region18: #{nlinet_forward.1} parent=1 // pred_check
      _
    $region19: #{nlinet_forward.1} parent=1 // pred_check_branch
      %38 = sbr.rel (0) target = $region21
    $region20: #{nlinet_forward.1} parent=1 // pred_region
      %40 = vsyncadd [#allocation8], 0
      %s42 = sshll.u32 %s4, 4
      %s43 = int_to_ptr.hbm [resolvable:$true] %s42
      %s44 = sshll.u32 [#allocation7], 4
      %s45 = int_to_ptr.vmem [resolvable:$true] %s44
      %47 = dma.hbm_to_vmem [thread:$0]  %s43, 64, %s45, [#allocation8]
    $region21: #{nlinet_forward.1} parent=1 // pred_fallthru
      _
    // Predicated region
    $region22: #{nlinet_forward.1} parent=1 // pred_check
      _
    $region23: #{nlinet_forward.1} parent=1 // pred_check_branch
      %49 = sbr.rel (0) target = $region25
    $region24: #{nlinet_forward.1} parent=1 // pred_region
      %51 = vsyncadd [#allocation8], 0
      %s52 = sshll.u32 %s5, 4
      %s53 = int_to_ptr.hbm [resolvable:$true] %s52
      %s54 = sshll.u32 [#allocation9], 4
      %s55 = int_to_ptr.vmem [resolvable:$true] %s54
      %60 = dma.hbm_to_vmem [thread:$0]  %s53, 16384, %s55, [#allocation8], 256, 256, 16
    $region25: #{nlinet_forward.1} parent=1 // pred_fallthru
      _
    // Predicated region
    $region26: #{nlinet_forward.1} parent=1 // pred_check
      _
    $region27: #{nlinet_forward.1} parent=1 // pred_check_branch
      %62 = sbr.rel (0) target = $region29
    $region28: #{nlinet_forward.1} parent=1 // pred_region
      %64 = vsyncadd [#allocation11], 0
      %s66 = sshll.u32 %s6, 4
      %s67 = int_to_ptr.hbm [resolvable:$true] %s66
      %s68 = sshll.u32 [#allocation10], 4
      %s69 = int_to_ptr.vmem [resolvable:$true] %s68
      %71 = dma.hbm_to_vmem [thread:$0]  %s67, 64, %s69, [#allocation11]
    $region29: #{nlinet_forward.1} parent=1 // pred_fallthru
      _
    // Predicated region
    $region30: #{nlinet_forward.1} parent=1 // pred_check
      _
    $region31: #{nlinet_forward.1} parent=1 // pred_check_branch
      %73 = sbr.rel (0) target = $region33
    $region32: #{nlinet_forward.1} parent=1 // pred_region
      %75 = vsyncadd [#allocation11], 0
      %s76 = sshll.u32 %s7, 4
      %s77 = int_to_ptr.hbm [resolvable:$true] %s76
      %s78 = sshll.u32 [#allocation12], 4
      %s79 = int_to_ptr.vmem [resolvable:$true] %s78
      %84 = dma.hbm_to_vmem [thread:$0]  %s77, 4096, %s79, [#allocation11], 64, 64, 4
    $region33: #{nlinet_forward.1} parent=1 // pred_fallthru
      _
    // Predicated region
    $region34: #{nlinet_forward.1} parent=1 // pred_check
      _
    $region35: #{nlinet_forward.1} parent=1 // pred_check_branch
      %86 = sbr.rel (0) target = $region37
    $region36: #{nlinet_forward.1} parent=1 // pred_region
      %88 = vsyncadd [#allocation14], 0
      %s90 = sshll.u32 %s8, 4
      %s91 = int_to_ptr.hbm [resolvable:$true] %s90
      %s92 = sshll.u32 [#allocation13], 4
      %s93 = int_to_ptr.vmem [resolvable:$true] %s92
      %95 = dma.hbm_to_vmem [thread:$0]  %s91, 16, %s93, [#allocation14]
    $region37: #{nlinet_forward.1} parent=1 // pred_fallthru
      _
    // Predicated region
    $region38: #{nlinet_forward.1} parent=1 // pred_check
      _
    $region39: #{nlinet_forward.1} parent=1 // pred_check_branch
      %97 = sbr.rel (0) target = $region41
    $region40: #{nlinet_forward.1} parent=1 // pred_region
      %99 = dma.done [#allocation6], 49152
    $region41: #{nlinet_forward.1} parent=1 // pred_fallthru
      _
    // Predicated region
    $region42: #{nlinet_forward.1} parent=1 // pred_check
      _
    $region43: #{nlinet_forward.1} parent=1 // pred_check_branch
      %101 = sbr.rel (0) target = $region45
    $region44: #{nlinet_forward.1} parent=1 // pred_region
      %103 = dma.done [#allocation8], 64
    $region45: #{nlinet_forward.1} parent=1 // pred_fallthru
      _
    // Predicated region
    $region46: #{nlinet_forward.1} parent=1 // pred_check
      _
    $region47: #{nlinet_forward.1} parent=1 // pred_check_branch
      %105 = sbr.rel (0) target = $region49
    $region48: #{nlinet_forward.1} parent=1 // pred_region
      %107 = dma.done [#allocation8], 16384
    $region49: #{nlinet_forward.1} parent=1 // pred_fallthru
      _
    // Predicated region
    $region50: #{nlinet_forward.1} parent=1 // pred_check
      _
    $region51: #{nlinet_forward.1} parent=1 // pred_check_branch
      %109 = sbr.rel (0) target = $region53
    $region52: #{nlinet_forward.1} parent=1 // pred_region
      %111 = dma.done [#allocation11], 64
    $region53: #{nlinet_forward.1} parent=1 // pred_fallthru
      _
    // Predicated region
    $region54: #{nlinet_forward.1} parent=1 // pred_check
      _
    $region55: #{nlinet_forward.1} parent=1 // pred_check_branch
      %113 = sbr.rel (0) target = $region57
    $region56: #{nlinet_forward.1} parent=1 // pred_region
      %115 = dma.done [#allocation11], 4096
    $region57: #{nlinet_forward.1} parent=1 // pred_fallthru
      _
    // Predicated region
    $region58: #{nlinet_forward.1} parent=1 // pred_check
      _
    $region59: #{nlinet_forward.1} parent=1 // pred_check_branch
      %117 = sbr.rel (0) target = $region61
    $region60: #{nlinet_forward.1} parent=1 // pred_region
      %119 = dma.done [#allocation14], 16
    $region61: #{nlinet_forward.1} parent=1 // pred_fallthru
      _
    %p121 = scmp.eq.s32.totalorder 0, 0
    // Predicated region
    $region62: #{nlinet_forward.1} parent=1 // pred_check
      %p122 = pneg %p121
    $region63: #{nlinet_forward.1} parent=1 // pred_check_branch
      %124 = sbr.rel (%p122) target = $region65
    $region64: #{nlinet_forward.1} parent=1 // pred_region
      %125 = vst [vmem:[#allocation2] sm:$0xff] 0.0
      %126 = vst [vmem:[#allocation2 + $0x8] sm:$0xff] 0.0
      %vm127 = vcmask 359424
      %128 = vst.msk [vmem:[#allocation2 + $0x10] sm:$0xff] %vm127, 0.0
      %129 = vst [vmem:[#allocation3] sm:$0xff] 0.0
      %130 = vst [vmem:[#allocation3 + $0x8] sm:$0xff] 0.0
      %131 = vst.msk [vmem:[#allocation3 + $0x10] sm:$0xff] %vm127, 0.0
    $region65: #{nlinet_forward.1} parent=1 // pred_fallthru
      _
    %v132 = vlaneseq
    %v133 = vshrl.u32 %v132, 7
    %s134 = smul.u32 0, 8
    %v135 = vstv %s134
    %v136 = vadd.s32 %v133, %v135
    %v137 = vcvt.s32.f32 %v136
    %v138 = vld [vmem:[%s2] sm:$0xff]
    %v140 = vrot.slane %v138, 1
    %v141 = vrot.slane %v138, 2
    %v142 = vrot.slane %v138, 3
    %v143 = vrot.slane %v138, 4
    %v144 = vrot.slane %v138, 5
    %v145 = vrot.slane %v138, 6
    %v146 = vrot.slane %v138, 7
    %v147 = vperm.slane %v138, 0
    %v148 = vperm.slane %v140, 0
    %v149 = vperm.slane %v141, 0
    %v150 = vperm.slane %v142, 0
    %v151 = vperm.slane %v143, 0
    %v152 = vperm.slane %v144, 0
    %v153 = vperm.slane %v145, 0
    %v154 = vperm.slane %v146, 0
    %vm163 = vcmp.lt.f32.partialorder %v137, %v147
    %vm164 = vcmp.lt.f32.partialorder %v137, %v148
    %vm165 = vcmp.lt.f32.partialorder %v137, %v149
    %vm166 = vcmp.lt.f32.partialorder %v137, %v150
    %vm167 = vcmp.lt.f32.partialorder %v137, %v151
    %vm168 = vcmp.lt.f32.partialorder %v137, %v152
    %vm169 = vcmp.lt.f32.partialorder %v137, %v153
    %vm170 = vcmp.lt.f32.partialorder %v137, %v154
    %v171 = vsel %vm163, 1, 0
    %v172 = vsel %vm164, 1, 0
    %v173 = vsel %vm165, 1, 0
    %v174 = vsel %vm166, 1, 0
    %v175 = vsel %vm167, 1, 0
    %v176 = vsel %vm168, 1, 0
    %v177 = vsel %vm169, 1, 0
    %v178 = vsel %vm170, 1, 0
    %v179 = vcvt.s32.f32 %v171
    %v180 = vcvt.s32.f32 %v172
    %v181 = vcvt.s32.f32 %v173
    %v182 = vcvt.s32.f32 %v174
    %v183 = vcvt.s32.f32 %v175
    %v184 = vcvt.s32.f32 %v176
    %v185 = vcvt.s32.f32 %v177
    %v186 = vcvt.s32.f32 %v178
    %v187 = vpack.c.bf16 %v179, %v179
    %v188 = vpack.c.bf16 %v180, %v180
    %v189 = vpack.c.bf16 %v181, %v181
    %v190 = vpack.c.bf16 %v182, %v182
    %v191 = vpack.c.bf16 %v183, %v183
    %v192 = vpack.c.bf16 %v184, %v184
    %v193 = vpack.c.bf16 %v185, %v185
    %v194 = vpack.c.bf16 %v186, %v186
    %v195 = vld [vmem:[#allocation2] sm:$0xff]
    %v196 = vld [vmem:[#allocation2 + $0x8] sm:$0xff]
    %v197 = vld [vmem:[#allocation2 + $0x10] sm:$0xff]
    %v198 = vld [vmem:[%s0] sm:$0xff]
    %v199 = vld [vmem:[%s0 + $0x8] sm:$0xf]
    %v200 = vld [vmem:[%s0 + $0xc] sm:$0xff]
    %v201 = vld [vmem:[%s0 + $0x14] sm:$0xf]
    %v202 = vld [vmem:[%s0 + $0x18] sm:$0xff]
    %v203 = vld [vmem:[%s0 + $0x20] sm:$0xf]
    %v204 = vld [vmem:[%s0 + $0x24] sm:$0xff]
    %v205 = vld [vmem:[%s0 + $0x2c] sm:$0xf]
    %v206 = vld [vmem:[%s0 + $0x30] sm:$0xff]
    %v207 = vld [vmem:[%s0 + $0x38] sm:$0xf]
    %v208 = vld [vmem:[%s0 + $0x3c] sm:$0xff]
    %v209 = vld [vmem:[%s0 + $0x44] sm:$0xf]
    %v210 = vld [vmem:[%s0 + $0x48] sm:$0xff]
    %v211 = vld [vmem:[%s0 + $0x50] sm:$0xf]
    %v212 = vld [vmem:[%s0 + $0x54] sm:$0xff]
    %v213 = vld [vmem:[%s0 + $0x5c] sm:$0xf]
    %215 = vset.pattern.permute.xlu0 0
    %216 = vperm.xlu0 %215, %v187
    %v217 = vpop.permute.xlu0 %216
    %v220 = vunpack.c.l.s4 839922192
    %v221 = vunpack.c.0.s8 %v220
    %v222 = vperm.slane %v217, %v221
    %224 = vset.pattern.permute.xlu0 0
    %225 = vperm.xlu0 %224, %v188
    %v226 = vpop.permute.xlu0 %225
    %v229 = vunpack.c.l.s4 839922192
    %v230 = vunpack.c.0.s8 %v229
    %v231 = vperm.slane %v226, %v230
    %233 = vset.pattern.permute.xlu0 0
    %234 = vperm.xlu0 %233, %v189
    %v235 = vpop.permute.xlu0 %234
    %v238 = vunpack.c.l.s4 839922192
    %v239 = vunpack.c.0.s8 %v238
    %v240 = vperm.slane %v235, %v239
    %242 = vset.pattern.permute.xlu0 0
    %243 = vperm.xlu0 %242, %v190
    %v244 = vpop.permute.xlu0 %243
    %v247 = vunpack.c.l.s4 839922192
    %v248 = vunpack.c.0.s8 %v247
    %v249 = vperm.slane %v244, %v248
    %251 = vset.pattern.permute.xlu0 0
    %252 = vperm.xlu0 %251, %v191
    %v253 = vpop.permute.xlu0 %252
    %v256 = vunpack.c.l.s4 839922192
    %v257 = vunpack.c.0.s8 %v256
    %v258 = vperm.slane %v253, %v257
    %260 = vset.pattern.permute.xlu0 0
    %261 = vperm.xlu0 %260, %v192
    %v262 = vpop.permute.xlu0 %261
    %v265 = vunpack.c.l.s4 839922192
    %v266 = vunpack.c.0.s8 %v265
    %v267 = vperm.slane %v262, %v266
    %269 = vset.pattern.permute.xlu0 0
    %270 = vperm.xlu0 %269, %v193
    %v271 = vpop.permute.xlu0 %270
    %v274 = vunpack.c.l.s4 839922192
    %v275 = vunpack.c.0.s8 %v274
    %v276 = vperm.slane %v271, %v275
    %278 = vset.pattern.permute.xlu0 0
    %279 = vperm.xlu0 %278, %v194
    %v280 = vpop.permute.xlu0 %279
    %v283 = vunpack.c.l.s4 839922192
    %v284 = vunpack.c.0.s8 %v283
    %v285 = vperm.slane %v280, %v284
    %v286 = vunpack.c.l.bf16 %v198
    %v287 = vunpack.c.h.bf16 %v198
    %v288 = vunpack.c.l.bf16 %v199
    %v289 = vunpack.c.l.bf16 %v200
    %v290 = vunpack.c.h.bf16 %v200
    %v291 = vunpack.c.l.bf16 %v201
    %v292 = vunpack.c.l.bf16 %v202
    %v293 = vunpack.c.h.bf16 %v202
    %v294 = vunpack.c.l.bf16 %v203
    %v295 = vunpack.c.l.bf16 %v204
    %v296 = vunpack.c.h.bf16 %v204
    %v297 = vunpack.c.l.bf16 %v205
    %v298 = vunpack.c.l.bf16 %v206
    %v299 = vunpack.c.h.bf16 %v206
    %v300 = vunpack.c.l.bf16 %v207
    %v301 = vunpack.c.l.bf16 %v208
    %v302 = vunpack.c.h.bf16 %v208
    %v303 = vunpack.c.l.bf16 %v209
    %v304 = vunpack.c.l.bf16 %v210
    %v305 = vunpack.c.h.bf16 %v210
    %v306 = vunpack.c.l.bf16 %v211
    %v307 = vunpack.c.l.bf16 %v212
    %v308 = vunpack.c.h.bf16 %v212
    %v309 = vunpack.c.l.bf16 %v213
    %v310 = vunpack.c.l.bf16 %v222
    %v311 = vunpack.c.l.bf16 %v231
    %v312 = vunpack.c.l.bf16 %v240
    %v313 = vunpack.c.l.bf16 %v249
    %v314 = vunpack.c.l.bf16 %v258
    %v315 = vunpack.c.l.bf16 %v267
    %v316 = vunpack.c.l.bf16 %v276
    %v317 = vunpack.c.l.bf16 %v285
    %v318 = vmul.f32 %v286, %v310
    %v319 = vmul.f32 %v287, %v310
    %v320 = vmul.f32 %v288, %v310
    %v321 = vmul.f32 %v289, %v311
    %v322 = vmul.f32 %v290, %v311
    %v323 = vmul.f32 %v291, %v311
    %v324 = vmul.f32 %v292, %v312
    %v325 = vmul.f32 %v293, %v312
    %v326 = vmul.f32 %v294, %v312
    %v327 = vmul.f32 %v295, %v313
    %v328 = vmul.f32 %v296, %v313
    %v329 = vmul.f32 %v297, %v313
    %v330 = vmul.f32 %v298, %v314
    %v331 = vmul.f32 %v299, %v314
    %v332 = vmul.f32 %v300, %v314
    %v333 = vmul.f32 %v301, %v315
    %v334 = vmul.f32 %v302, %v315
    %v335 = vmul.f32 %v303, %v315
    %v336 = vmul.f32 %v304, %v316
    %v337 = vmul.f32 %v305, %v316
    %v338 = vmul.f32 %v306, %v316
    %v339 = vmul.f32 %v307, %v317
    %v340 = vmul.f32 %v308, %v317
    %v341 = vmul.f32 %v309, %v317
    %v342 = vpack.c.bf16 %v318, %v318
    %v343 = vpack.c.bf16 %v319, %v319
    %v344 = vpack.c.bf16 %v320, %v320
    %v345 = vpack.c.bf16 %v321, %v321
    %v346 = vpack.c.bf16 %v322, %v322
    %v347 = vpack.c.bf16 %v323, %v323
    %v348 = vpack.c.bf16 %v324, %v324
    %v349 = vpack.c.bf16 %v325, %v325
    %v350 = vpack.c.bf16 %v326, %v326
    %v351 = vpack.c.bf16 %v327, %v327
    %v352 = vpack.c.bf16 %v328, %v328
    %v353 = vpack.c.bf16 %v329, %v329
    %v354 = vpack.c.bf16 %v330, %v330
    %v355 = vpack.c.bf16 %v331, %v331
    %v356 = vpack.c.bf16 %v332, %v332
    %v357 = vpack.c.bf16 %v333, %v333
    %v358 = vpack.c.bf16 %v334, %v334
    %v359 = vpack.c.bf16 %v335, %v335
    %v360 = vpack.c.bf16 %v336, %v336
    %v361 = vpack.c.bf16 %v337, %v337
    %v362 = vpack.c.bf16 %v338, %v338
    %v363 = vpack.c.bf16 %v339, %v339
    %v364 = vpack.c.bf16 %v340, %v340
    %v365 = vpack.c.bf16 %v341, %v341
    %v366 = vunpack.c.l.bf16 %v342
    %v367 = vunpack.c.l.bf16 %v343
    %v368 = vunpack.c.l.bf16 %v344
    %v369 = vunpack.c.l.bf16 %v345
    %v370 = vunpack.c.l.bf16 %v346
    %v371 = vunpack.c.l.bf16 %v347
    %v372 = vunpack.c.l.bf16 %v348
    %v373 = vunpack.c.l.bf16 %v349
    %v374 = vunpack.c.l.bf16 %v350
    %v375 = vunpack.c.l.bf16 %v351
    %v376 = vunpack.c.l.bf16 %v352
    %v377 = vunpack.c.l.bf16 %v353
    %v378 = vunpack.c.l.bf16 %v354
    %v379 = vunpack.c.l.bf16 %v355
    %v380 = vunpack.c.l.bf16 %v356
    %v381 = vunpack.c.l.bf16 %v357
    %v382 = vunpack.c.l.bf16 %v358
    %v383 = vunpack.c.l.bf16 %v359
    %v384 = vunpack.c.l.bf16 %v360
    %v385 = vunpack.c.l.bf16 %v361
    %v386 = vunpack.c.l.bf16 %v362
    %v387 = vunpack.c.l.bf16 %v363
    %v388 = vunpack.c.l.bf16 %v364
    %v389 = vunpack.c.l.bf16 %v365
    %v390 = vrot.slane %v366, 4
    %v391 = vadd.f32 %v366, %v390
    %v392 = vrot.slane %v391, 2
    %v393 = vadd.f32 %v391, %v392
    %v394 = vrot.slane %v393, 1
    %v395 = vadd.f32 %v393, %v394
    %v396 = vrot.slane %v367, 4
    %v397 = vadd.f32 %v367, %v396
    %v398 = vrot.slane %v397, 2
    %v399 = vadd.f32 %v397, %v398
    %v400 = vrot.slane %v399, 1
    %v401 = vadd.f32 %v399, %v400
    %vm402 = vcmask 359424
    %v403 = vsel %vm402, %v368, 0.0
    %v404 = vrot.slane %v403, 4
    %v405 = vadd.f32 %v403, %v404
    %v406 = vrot.slane %v405, 2
    %v407 = vadd.f32 %v405, %v406
    %v408 = vrot.slane %v407, 1
    %v409 = vadd.f32 %v407, %v408
    %v410 = vrot.slane %v369, 4
    %v411 = vadd.f32 %v369, %v410
    %v412 = vrot.slane %v411, 2
    %v413 = vadd.f32 %v411, %v412
    %v414 = vrot.slane %v413, 1
    %v415 = vadd.f32 %v413, %v414
    %v416 = vrot.slane %v370, 4
    %v417 = vadd.f32 %v370, %v416
    %v418 = vrot.slane %v417, 2
    %v419 = vadd.f32 %v417, %v418
    %v420 = vrot.slane %v419, 1
    %v421 = vadd.f32 %v419, %v420
    %v422 = vsel %vm402, %v371, 0.0
    %v423 = vrot.slane %v422, 4
    %v424 = vadd.f32 %v422, %v423
    %v425 = vrot.slane %v424, 2
    %v426 = vadd.f32 %v424, %v425
    %v427 = vrot.slane %v426, 1
    %v428 = vadd.f32 %v426, %v427
    %v429 = vrot.slane %v372, 4
    %v430 = vadd.f32 %v372, %v429
    %v431 = vrot.slane %v430, 2
    %v432 = vadd.f32 %v430, %v431
    %v433 = vrot.slane %v432, 1
    %v434 = vadd.f32 %v432, %v433
    %v435 = vrot.slane %v373, 4
    %v436 = vadd.f32 %v373, %v435
    %v437 = vrot.slane %v436, 2
    %v438 = vadd.f32 %v436, %v437
    %v439 = vrot.slane %v438, 1
    %v440 = vadd.f32 %v438, %v439
    %v441 = vsel %vm402, %v374, 0.0
    %v442 = vrot.slane %v441, 4
    %v443 = vadd.f32 %v441, %v442
    %v444 = vrot.slane %v443, 2
    %v445 = vadd.f32 %v443, %v444
    %v446 = vrot.slane %v445, 1
    %v447 = vadd.f32 %v445, %v446
    %v448 = vrot.slane %v375, 4
    %v449 = vadd.f32 %v375, %v448
    %v450 = vrot.slane %v449, 2
    %v451 = vadd.f32 %v449, %v450
    %v452 = vrot.slane %v451, 1
    %v453 = vadd.f32 %v451, %v452
    %v454 = vrot.slane %v376, 4
    %v455 = vadd.f32 %v376, %v454
    %v456 = vrot.slane %v455, 2
    %v457 = vadd.f32 %v455, %v456
    %v458 = vrot.slane %v457, 1
    %v459 = vadd.f32 %v457, %v458
    %v460 = vsel %vm402, %v377, 0.0
    %v461 = vrot.slane %v460, 4
    %v462 = vadd.f32 %v460, %v461
    %v463 = vrot.slane %v462, 2
    %v464 = vadd.f32 %v462, %v463
    %v465 = vrot.slane %v464, 1
    %v466 = vadd.f32 %v464, %v465
    %v467 = vrot.slane %v378, 4
    %v468 = vadd.f32 %v378, %v467
    %v469 = vrot.slane %v468, 2
    %v470 = vadd.f32 %v468, %v469
    %v471 = vrot.slane %v470, 1
    %v472 = vadd.f32 %v470, %v471
    %v473 = vrot.slane %v379, 4
    %v474 = vadd.f32 %v379, %v473
    %v475 = vrot.slane %v474, 2
    %v476 = vadd.f32 %v474, %v475
    %v477 = vrot.slane %v476, 1
    %v478 = vadd.f32 %v476, %v477
    %v479 = vsel %vm402, %v380, 0.0
    %v480 = vrot.slane %v479, 4
    %v481 = vadd.f32 %v479, %v480
    %v482 = vrot.slane %v481, 2
    %v483 = vadd.f32 %v481, %v482
    %v484 = vrot.slane %v483, 1
    %v485 = vadd.f32 %v483, %v484
    %v486 = vrot.slane %v381, 4
    %v487 = vadd.f32 %v381, %v486
    %v488 = vrot.slane %v487, 2
    %v489 = vadd.f32 %v487, %v488
    %v490 = vrot.slane %v489, 1
    %v491 = vadd.f32 %v489, %v490
    %v492 = vrot.slane %v382, 4
    %v493 = vadd.f32 %v382, %v492
    %v494 = vrot.slane %v493, 2
    %v495 = vadd.f32 %v493, %v494
    %v496 = vrot.slane %v495, 1
    %v497 = vadd.f32 %v495, %v496
    %v498 = vsel %vm402, %v383, 0.0
    %v499 = vrot.slane %v498, 4
    %v500 = vadd.f32 %v498, %v499
    %v501 = vrot.slane %v500, 2
    %v502 = vadd.f32 %v500, %v501
    %v503 = vrot.slane %v502, 1
    %v504 = vadd.f32 %v502, %v503
    %v505 = vrot.slane %v384, 4
    %v506 = vadd.f32 %v384, %v505
    %v507 = vrot.slane %v506, 2
    %v508 = vadd.f32 %v506, %v507
    %v509 = vrot.slane %v508, 1
    %v510 = vadd.f32 %v508, %v509
    %v511 = vrot.slane %v385, 4
    %v512 = vadd.f32 %v385, %v511
    %v513 = vrot.slane %v512, 2
    %v514 = vadd.f32 %v512, %v513
    %v515 = vrot.slane %v514, 1
    %v516 = vadd.f32 %v514, %v515
    %v517 = vsel %vm402, %v386, 0.0
    %v518 = vrot.slane %v517, 4
    %v519 = vadd.f32 %v517, %v518
    %v520 = vrot.slane %v519, 2
    %v521 = vadd.f32 %v519, %v520
    %v522 = vrot.slane %v521, 1
    %v523 = vadd.f32 %v521, %v522
    %v524 = vrot.slane %v387, 4
    %v525 = vadd.f32 %v387, %v524
    %v526 = vrot.slane %v525, 2
    %v527 = vadd.f32 %v525, %v526
    %v528 = vrot.slane %v527, 1
    %v529 = vadd.f32 %v527, %v528
    %v530 = vrot.slane %v388, 4
    %v531 = vadd.f32 %v388, %v530
    %v532 = vrot.slane %v531, 2
    %v533 = vadd.f32 %v531, %v532
    %v534 = vrot.slane %v533, 1
    %v535 = vadd.f32 %v533, %v534
    %v536 = vsel %vm402, %v389, 0.0
    %v537 = vrot.slane %v536, 4
    %v538 = vadd.f32 %v536, %v537
    %v539 = vrot.slane %v538, 2
    %v540 = vadd.f32 %v538, %v539
    %v541 = vrot.slane %v540, 1
    %v542 = vadd.f32 %v540, %v541
    %vm567 = vcmask 1041409
    %v568 = vsel %vm567, %v415, %v395
    %vm569 = vcmask 1042434
    %v570 = vsel %vm569, %v434, %v568
    %vm571 = vcmask 1043459
    %v572 = vsel %vm571, %v453, %v570
    %vm573 = vcmask 1044484
    %v574 = vsel %vm573, %v472, %v572
    %vm575 = vcmask 1045509
    %v576 = vsel %vm575, %v491, %v574
    %vm577 = vcmask 1046534
    %v578 = vsel %vm577, %v510, %v576
    %vm579 = vcmask 1047559
    %v580 = vsel %vm579, %v529, %v578
    %v581 = vsel %vm567, %v421, %v401
    %v582 = vsel %vm569, %v440, %v581
    %v583 = vsel %vm571, %v459, %v582
    %v584 = vsel %vm573, %v478, %v583
    %v585 = vsel %vm575, %v497, %v584
    %v586 = vsel %vm577, %v516, %v585
    %v587 = vsel %vm579, %v535, %v586
    %v588 = vsel %vm567, %v428, %v409
    %v589 = vsel %vm569, %v447, %v588
    %v590 = vsel %vm571, %v466, %v589
    %v591 = vsel %vm573, %v485, %v590
    %v592 = vsel %vm575, %v504, %v591
    %v593 = vsel %vm577, %v523, %v592
    %v594 = vsel %vm579, %v542, %v593
    %v598 = vadd.f32 %v195, %v580
    %v599 = vadd.f32 %v196, %v587
    %v600 = vadd.f32 %v197, %v594
    %601 = vst [vmem:[#allocation2] sm:$0xff] %v598
    %602 = vst [vmem:[#allocation2 + $0x8] sm:$0xff] %v599
    %603 = vst.msk [vmem:[#allocation2 + $0x10] sm:$0xff] %vm402, %v600
    %v604 = vld [vmem:[#allocation3] sm:$0xff]
    %v605 = vld [vmem:[#allocation3 + $0x8] sm:$0xff]
    %v606 = vld [vmem:[#allocation3 + $0x10] sm:$0xff]
    %v607 = vld [vmem:[%s1] sm:$0xff]
    %v608 = vld [vmem:[%s1 + $0x8] sm:$0xf]
    %v609 = vld [vmem:[%s1 + $0xc] sm:$0xff]
    %v610 = vld [vmem:[%s1 + $0x14] sm:$0xf]
    %v611 = vld [vmem:[%s1 + $0x18] sm:$0xff]
    %v612 = vld [vmem:[%s1 + $0x20] sm:$0xf]
    %v613 = vld [vmem:[%s1 + $0x24] sm:$0xff]
    %v614 = vld [vmem:[%s1 + $0x2c] sm:$0xf]
    %v615 = vld [vmem:[%s1 + $0x30] sm:$0xff]
    %v616 = vld [vmem:[%s1 + $0x38] sm:$0xf]
    %v617 = vld [vmem:[%s1 + $0x3c] sm:$0xff]
    %v618 = vld [vmem:[%s1 + $0x44] sm:$0xf]
    %v619 = vld [vmem:[%s1 + $0x48] sm:$0xff]
    %v620 = vld [vmem:[%s1 + $0x50] sm:$0xf]
    %v621 = vld [vmem:[%s1 + $0x54] sm:$0xff]
    %v622 = vld [vmem:[%s1 + $0x5c] sm:$0xf]
    %623 = vset.pattern.permute.xlu0 1
    %624 = vperm.xlu0 %623, %v187
    %v625 = vpop.permute.xlu0 %624
    %v628 = vunpack.c.l.s4 839922192
    %v629 = vunpack.c.0.s8 %v628
    %v630 = vperm.slane %v625, %v629
    %631 = vset.pattern.permute.xlu0 1
    %632 = vperm.xlu0 %631, %v188
    %v633 = vpop.permute.xlu0 %632
    %v636 = vunpack.c.l.s4 839922192
    %v637 = vunpack.c.0.s8 %v636
    %v638 = vperm.slane %v633, %v637
    %639 = vset.pattern.permute.xlu0 1
    %640 = vperm.xlu0 %639, %v189
    %v641 = vpop.permute.xlu0 %640
    %v644 = vunpack.c.l.s4 839922192
    %v645 = vunpack.c.0.s8 %v644
    %v646 = vperm.slane %v641, %v645
    %647 = vset.pattern.permute.xlu0 1
    %648 = vperm.xlu0 %647, %v190
    %v649 = vpop.permute.xlu0 %648
    %v652 = vunpack.c.l.s4 839922192
    %v653 = vunpack.c.0.s8 %v652
    %v654 = vperm.slane %v649, %v653
    %655 = vset.pattern.permute.xlu0 1
    %656 = vperm.xlu0 %655, %v191
    %v657 = vpop.permute.xlu0 %656
    %v660 = vunpack.c.l.s4 839922192
    %v661 = vunpack.c.0.s8 %v660
    %v662 = vperm.slane %v657, %v661
    %663 = vset.pattern.permute.xlu0 1
    %664 = vperm.xlu0 %663, %v192
    %v665 = vpop.permute.xlu0 %664
    %v668 = vunpack.c.l.s4 839922192
    %v669 = vunpack.c.0.s8 %v668
    %v670 = vperm.slane %v665, %v669
    %671 = vset.pattern.permute.xlu0 1
    %672 = vperm.xlu0 %671, %v193
    %v673 = vpop.permute.xlu0 %672
    %v676 = vunpack.c.l.s4 839922192
    %v677 = vunpack.c.0.s8 %v676
    %v678 = vperm.slane %v673, %v677
    %679 = vset.pattern.permute.xlu0 1
    %680 = vperm.xlu0 %679, %v194
    %v681 = vpop.permute.xlu0 %680
    %v684 = vunpack.c.l.s4 839922192
    %v685 = vunpack.c.0.s8 %v684
    %v686 = vperm.slane %v681, %v685
    %v687 = vunpack.c.l.bf16 %v607
    %v688 = vunpack.c.h.bf16 %v607
    %v689 = vunpack.c.l.bf16 %v608
    %v690 = vunpack.c.l.bf16 %v609
    %v691 = vunpack.c.h.bf16 %v609
    %v692 = vunpack.c.l.bf16 %v610
    %v693 = vunpack.c.l.bf16 %v611
    %v694 = vunpack.c.h.bf16 %v611
    %v695 = vunpack.c.l.bf16 %v612
    %v696 = vunpack.c.l.bf16 %v613
    %v697 = vunpack.c.h.bf16 %v613
    %v698 = vunpack.c.l.bf16 %v614
    %v699 = vunpack.c.l.bf16 %v615
    %v700 = vunpack.c.h.bf16 %v615
    %v701 = vunpack.c.l.bf16 %v616
    %v702 = vunpack.c.l.bf16 %v617
    %v703 = vunpack.c.h.bf16 %v617
    %v704 = vunpack.c.l.bf16 %v618
    %v705 = vunpack.c.l.bf16 %v619
    %v706 = vunpack.c.h.bf16 %v619
    %v707 = vunpack.c.l.bf16 %v620
    %v708 = vunpack.c.l.bf16 %v621
    %v709 = vunpack.c.h.bf16 %v621
    %v710 = vunpack.c.l.bf16 %v622
    %v711 = vunpack.c.l.bf16 %v630
    %v712 = vunpack.c.l.bf16 %v638
    %v713 = vunpack.c.l.bf16 %v646
    %v714 = vunpack.c.l.bf16 %v654
    %v715 = vunpack.c.l.bf16 %v662
    %v716 = vunpack.c.l.bf16 %v670
    %v717 = vunpack.c.l.bf16 %v678
    %v718 = vunpack.c.l.bf16 %v686
    %v719 = vmul.f32 %v687, %v711
    %v720 = vmul.f32 %v688, %v711
    %v721 = vmul.f32 %v689, %v711
    %v722 = vmul.f32 %v690, %v712
    %v723 = vmul.f32 %v691, %v712
    %v724 = vmul.f32 %v692, %v712
    %v725 = vmul.f32 %v693, %v713
    %v726 = vmul.f32 %v694, %v713
    %v727 = vmul.f32 %v695, %v713
    %v728 = vmul.f32 %v696, %v714
    %v729 = vmul.f32 %v697, %v714
    %v730 = vmul.f32 %v698, %v714
    %v731 = vmul.f32 %v699, %v715
    %v732 = vmul.f32 %v700, %v715
    %v733 = vmul.f32 %v701, %v715
    %v734 = vmul.f32 %v702, %v716
    %v735 = vmul.f32 %v703, %v716
    %v736 = vmul.f32 %v704, %v716
    %v737 = vmul.f32 %v705, %v717
    %v738 = vmul.f32 %v706, %v717
    %v739 = vmul.f32 %v707, %v717
    %v740 = vmul.f32 %v708, %v718
    %v741 = vmul.f32 %v709, %v718
    %v742 = vmul.f32 %v710, %v718
    %v743 = vpack.c.bf16 %v719, %v719
    %v744 = vpack.c.bf16 %v720, %v720
    %v745 = vpack.c.bf16 %v721, %v721
    %v746 = vpack.c.bf16 %v722, %v722
    %v747 = vpack.c.bf16 %v723, %v723
    %v748 = vpack.c.bf16 %v724, %v724
    %v749 = vpack.c.bf16 %v725, %v725
    %v750 = vpack.c.bf16 %v726, %v726
    %v751 = vpack.c.bf16 %v727, %v727
    %v752 = vpack.c.bf16 %v728, %v728
    %v753 = vpack.c.bf16 %v729, %v729
    %v754 = vpack.c.bf16 %v730, %v730
    %v755 = vpack.c.bf16 %v731, %v731
    %v756 = vpack.c.bf16 %v732, %v732
    %v757 = vpack.c.bf16 %v733, %v733
    %v758 = vpack.c.bf16 %v734, %v734
    %v759 = vpack.c.bf16 %v735, %v735
    %v760 = vpack.c.bf16 %v736, %v736
    %v761 = vpack.c.bf16 %v737, %v737
    %v762 = vpack.c.bf16 %v738, %v738
    %v763 = vpack.c.bf16 %v739, %v739
    %v764 = vpack.c.bf16 %v740, %v740
    %v765 = vpack.c.bf16 %v741, %v741
    %v766 = vpack.c.bf16 %v742, %v742
    %v767 = vunpack.c.l.bf16 %v743
    %v768 = vunpack.c.l.bf16 %v744
    %v769 = vunpack.c.l.bf16 %v745
    %v770 = vunpack.c.l.bf16 %v746
    %v771 = vunpack.c.l.bf16 %v747
    %v772 = vunpack.c.l.bf16 %v748
    %v773 = vunpack.c.l.bf16 %v749
    %v774 = vunpack.c.l.bf16 %v750
    %v775 = vunpack.c.l.bf16 %v751
    %v776 = vunpack.c.l.bf16 %v752
    %v777 = vunpack.c.l.bf16 %v753
    %v778 = vunpack.c.l.bf16 %v754
    %v779 = vunpack.c.l.bf16 %v755
    %v780 = vunpack.c.l.bf16 %v756
    %v781 = vunpack.c.l.bf16 %v757
    %v782 = vunpack.c.l.bf16 %v758
    %v783 = vunpack.c.l.bf16 %v759
    %v784 = vunpack.c.l.bf16 %v760
    %v785 = vunpack.c.l.bf16 %v761
    %v786 = vunpack.c.l.bf16 %v762
    %v787 = vunpack.c.l.bf16 %v763
    %v788 = vunpack.c.l.bf16 %v764
    %v789 = vunpack.c.l.bf16 %v765
    %v790 = vunpack.c.l.bf16 %v766
    %v791 = vrot.slane %v767, 4
    %v792 = vadd.f32 %v767, %v791
    %v793 = vrot.slane %v792, 2
    %v794 = vadd.f32 %v792, %v793
    %v795 = vrot.slane %v794, 1
    %v796 = vadd.f32 %v794, %v795
    %v797 = vrot.slane %v768, 4
    %v798 = vadd.f32 %v768, %v797
    %v799 = vrot.slane %v798, 2
    %v800 = vadd.f32 %v798, %v799
    %v801 = vrot.slane %v800, 1
    %v802 = vadd.f32 %v800, %v801
    %v803 = vsel %vm402, %v769, 0.0
    %v804 = vrot.slane %v803, 4
    %v805 = vadd.f32 %v803, %v804
    %v806 = vrot.slane %v805, 2
    %v807 = vadd.f32 %v805, %v806
    %v808 = vrot.slane %v807, 1
    %v809 = vadd.f32 %v807, %v808
    %v810 = vrot.slane %v770, 4
    %v811 = vadd.f32 %v770, %v810
    %v812 = vrot.slane %v811, 2
    %v813 = vadd.f32 %v811, %v812
    %v814 = vrot.slane %v813, 1
    %v815 = vadd.f32 %v813, %v814
    %v816 = vrot.slane %v771, 4
    %v817 = vadd.f32 %v771, %v816
    %v818 = vrot.slane %v817, 2
    %v819 = vadd.f32 %v817, %v818
    %v820 = vrot.slane %v819, 1
    %v821 = vadd.f32 %v819, %v820
    %v822 = vsel %vm402, %v772, 0.0
    %v823 = vrot.slane %v822, 4
    %v824 = vadd.f32 %v822, %v823
    %v825 = vrot.slane %v824, 2
    %v826 = vadd.f32 %v824, %v825
    %v827 = vrot.slane %v826, 1
    %v828 = vadd.f32 %v826, %v827
    %v829 = vrot.slane %v773, 4
    %v830 = vadd.f32 %v773, %v829
    %v831 = vrot.slane %v830, 2
    %v832 = vadd.f32 %v830, %v831
    %v833 = vrot.slane %v832, 1
    %v834 = vadd.f32 %v832, %v833
    %v835 = vrot.slane %v774, 4
    %v836 = vadd.f32 %v774, %v835
    %v837 = vrot.slane %v836, 2
    %v838 = vadd.f32 %v836, %v837
    %v839 = vrot.slane %v838, 1
    %v840 = vadd.f32 %v838, %v839
    %v841 = vsel %vm402, %v775, 0.0
    %v842 = vrot.slane %v841, 4
    %v843 = vadd.f32 %v841, %v842
    %v844 = vrot.slane %v843, 2
    %v845 = vadd.f32 %v843, %v844
    %v846 = vrot.slane %v845, 1
    %v847 = vadd.f32 %v845, %v846
    %v848 = vrot.slane %v776, 4
    %v849 = vadd.f32 %v776, %v848
    %v850 = vrot.slane %v849, 2
    %v851 = vadd.f32 %v849, %v850
    %v852 = vrot.slane %v851, 1
    %v853 = vadd.f32 %v851, %v852
    %v854 = vrot.slane %v777, 4
    %v855 = vadd.f32 %v777, %v854
    %v856 = vrot.slane %v855, 2
    %v857 = vadd.f32 %v855, %v856
    %v858 = vrot.slane %v857, 1
    %v859 = vadd.f32 %v857, %v858
    %v860 = vsel %vm402, %v778, 0.0
    %v861 = vrot.slane %v860, 4
    %v862 = vadd.f32 %v860, %v861
    %v863 = vrot.slane %v862, 2
    %v864 = vadd.f32 %v862, %v863
    %v865 = vrot.slane %v864, 1
    %v866 = vadd.f32 %v864, %v865
    %v867 = vrot.slane %v779, 4
    %v868 = vadd.f32 %v779, %v867
    %v869 = vrot.slane %v868, 2
    %v870 = vadd.f32 %v868, %v869
    %v871 = vrot.slane %v870, 1
    %v872 = vadd.f32 %v870, %v871
    %v873 = vrot.slane %v780, 4
    %v874 = vadd.f32 %v780, %v873
    %v875 = vrot.slane %v874, 2
    %v876 = vadd.f32 %v874, %v875
    %v877 = vrot.slane %v876, 1
    %v878 = vadd.f32 %v876, %v877
    %v879 = vsel %vm402, %v781, 0.0
    %v880 = vrot.slane %v879, 4
    %v881 = vadd.f32 %v879, %v880
    %v882 = vrot.slane %v881, 2
    %v883 = vadd.f32 %v881, %v882
    %v884 = vrot.slane %v883, 1
    %v885 = vadd.f32 %v883, %v884
    %v886 = vrot.slane %v782, 4
    %v887 = vadd.f32 %v782, %v886
    %v888 = vrot.slane %v887, 2
    %v889 = vadd.f32 %v887, %v888
    %v890 = vrot.slane %v889, 1
    %v891 = vadd.f32 %v889, %v890
    %v892 = vrot.slane %v783, 4
    %v893 = vadd.f32 %v783, %v892
    %v894 = vrot.slane %v893, 2
    %v895 = vadd.f32 %v893, %v894
    %v896 = vrot.slane %v895, 1
    %v897 = vadd.f32 %v895, %v896
    %v898 = vsel %vm402, %v784, 0.0
    %v899 = vrot.slane %v898, 4
    %v900 = vadd.f32 %v898, %v899
    %v901 = vrot.slane %v900, 2
    %v902 = vadd.f32 %v900, %v901
    %v903 = vrot.slane %v902, 1
    %v904 = vadd.f32 %v902, %v903
    %v905 = vrot.slane %v785, 4
    %v906 = vadd.f32 %v785, %v905
    %v907 = vrot.slane %v906, 2
    %v908 = vadd.f32 %v906, %v907
    %v909 = vrot.slane %v908, 1
    %v910 = vadd.f32 %v908, %v909
    %v911 = vrot.slane %v786, 4
    %v912 = vadd.f32 %v786, %v911
    %v913 = vrot.slane %v912, 2
    %v914 = vadd.f32 %v912, %v913
    %v915 = vrot.slane %v914, 1
    %v916 = vadd.f32 %v914, %v915
    %v917 = vsel %vm402, %v787, 0.0
    %v918 = vrot.slane %v917, 4
    %v919 = vadd.f32 %v917, %v918
    %v920 = vrot.slane %v919, 2
    %v921 = vadd.f32 %v919, %v920
    %v922 = vrot.slane %v921, 1
    %v923 = vadd.f32 %v921, %v922
    %v924 = vrot.slane %v788, 4
    %v925 = vadd.f32 %v788, %v924
    %v926 = vrot.slane %v925, 2
    %v927 = vadd.f32 %v925, %v926
    %v928 = vrot.slane %v927, 1
    %v929 = vadd.f32 %v927, %v928
    %v930 = vrot.slane %v789, 4
    %v931 = vadd.f32 %v789, %v930
    %v932 = vrot.slane %v931, 2
    %v933 = vadd.f32 %v931, %v932
    %v934 = vrot.slane %v933, 1
    %v935 = vadd.f32 %v933, %v934
    %v936 = vsel %vm402, %v790, 0.0
    %v937 = vrot.slane %v936, 4
    %v938 = vadd.f32 %v936, %v937
    %v939 = vrot.slane %v938, 2
    %v940 = vadd.f32 %v938, %v939
    %v941 = vrot.slane %v940, 1
    %v942 = vadd.f32 %v940, %v941
    %v967 = vsel %vm567, %v815, %v796
    %v968 = vsel %vm569, %v834, %v967
    %v969 = vsel %vm571, %v853, %v968
    %v970 = vsel %vm573, %v872, %v969
    %v971 = vsel %vm575, %v891, %v970
    %v972 = vsel %vm577, %v910, %v971
    %v973 = vsel %vm579, %v929, %v972
    %v974 = vsel %vm567, %v821, %v802
    %v975 = vsel %vm569, %v840, %v974
    %v976 = vsel %vm571, %v859, %v975
    %v977 = vsel %vm573, %v878, %v976
    %v978 = vsel %vm575, %v897, %v977
    %v979 = vsel %vm577, %v916, %v978
    %v980 = vsel %vm579, %v935, %v979
    %v981 = vsel %vm567, %v828, %v809
    %v982 = vsel %vm569, %v847, %v981
    %v983 = vsel %vm571, %v866, %v982
    %v984 = vsel %vm573, %v885, %v983
    %v985 = vsel %vm575, %v904, %v984
    %v986 = vsel %vm577, %v923, %v985
    %v987 = vsel %vm579, %v942, %v986
    %v991 = vadd.f32 %v604, %v973
    %v992 = vadd.f32 %v605, %v980
    %v993 = vadd.f32 %v606, %v987
    %994 = vst [vmem:[#allocation3] sm:$0xff] %v991
    %995 = vst [vmem:[#allocation3 + $0x8] sm:$0xff] %v992
    %996 = vst.msk [vmem:[#allocation3 + $0x10] sm:$0xff] %vm402, %v993
    // Predicated region
    $region66: #{nlinet_forward.1} parent=1 // pred_check
      %p997 = pneg %p121
    $region67: #{nlinet_forward.1} parent=1 // pred_check_branch
      %999 = sbr.rel (%p997) target = $region69
    $region68: #{nlinet_forward.1} parent=1 // pred_region
      %v1000 = vld [vmem:[%s2] sm:$0xff]
      %v1001 = vld [vmem:[#allocation2] sm:$0xff]
      %v1002 = vld [vmem:[#allocation2 + $0x8] sm:$0xff]
      %v1003 = vld [vmem:[#allocation2 + $0x10] sm:$0xff]
      %1005 = vset.pattern.permute.xlu0 2
      %1006 = vperm.xlu0 %1005, %v1000
      %v1007 = vpop.permute.xlu0 %1006
      %v1009 = vmul.f32 %v1001, %v1007
      %v1010 = vmul.f32 %v1002, %v1007
      %v1011 = vmul.f32 %v1003, %v1007
      %v1012 = vld [vmem:[#allocation3] sm:$0xff]
      %v1013 = vld [vmem:[#allocation3 + $0x8] sm:$0xff]
      %v1014 = vld [vmem:[#allocation3 + $0x10] sm:$0xff]
      %1015 = vset.pattern.permute.xlu0 3
      %1016 = vperm.xlu0 %1015, %v1000
      %v1017 = vpop.permute.xlu0 %1016
      %v1019 = vmul.f32 %v1012, %v1017
      %v1020 = vmul.f32 %v1013, %v1017
      %v1021 = vmul.f32 %v1014, %v1017
      %v1022 = vsub.f32 %v1009, %v1019
      %v1023 = vsub.f32 %v1010, %v1020
      %v1024 = vsub.f32 %v1011, %v1021
      %v1025 = vand.u32 2147483647, %v1022
      %v1026 = vand.u32 2147483647, %v1023
      %v1027 = vand.u32 2147483647, %v1024
      %v1028 = vmul.f32 %v1009, %v1019
      %v1029 = vmul.f32 %v1010, %v1020
      %v1030 = vmul.f32 %v1011, %v1021
      %v1031 = vpack.c.bf16 %v1010, %v1009
      %v1032 = vpack.c.bf16 %v1011, %v1011
      %1033 = vst [vmem:[#allocation4] sm:$0xff] %v1031
      %vm1034 = vcmask 355328
      %1035 = vst.msk [vmem:[#allocation4 + $0x8] sm:$0xf] %vm1034, %v1032
      %vm1036 = vcmask 1043808
      %1037 = vst.msk [vmem:[#allocation4 + $0x8] sm:$0xf] %vm1036, 0
      %v1038 = vpack.c.bf16 %v1020, %v1019
      %v1039 = vpack.c.bf16 %v1021, %v1021
      %1040 = vst [vmem:[#allocation4 + $0xc] sm:$0xff] %v1038
      %1041 = vst.msk [vmem:[#allocation4 + $0x14] sm:$0xf] %vm1034, %v1039
      %1042 = vst.msk [vmem:[#allocation4 + $0x14] sm:$0xf] %vm1036, 0
      %v1043 = vpack.c.bf16 %v1026, %v1025
      %v1044 = vpack.c.bf16 %v1027, %v1027
      %1045 = vst [vmem:[#allocation4 + $0x18] sm:$0xff] %v1043
      %1046 = vst.msk [vmem:[#allocation4 + $0x20] sm:$0xf] %vm1034, %v1044
      %1047 = vst.msk [vmem:[#allocation4 + $0x20] sm:$0xf] %vm1036, 0
      %v1048 = vpack.c.bf16 %v1029, %v1028
      %v1049 = vpack.c.bf16 %v1030, %v1030
      %1050 = vst [vmem:[#allocation4 + $0x24] sm:$0xff] %v1048
      %1051 = vst.msk [vmem:[#allocation4 + $0x2c] sm:$0xf] %vm1034, %v1049
      %1052 = vst.msk [vmem:[#allocation4 + $0x2c] sm:$0xf] %vm1036, 0
      %v1053 = vld [vmem:[#allocation4] sm:$0xff]
      %v1054 = vld [vmem:[#allocation4 + $0x8] sm:$0xff]
      %v1055 = vld [vmem:[#allocation4 + $0x10] sm:$0xff]
      %v1056 = vld [vmem:[#allocation4 + $0x18] sm:$0xff]
      %v1057 = vld [vmem:[#allocation4 + $0x20] sm:$0xff]
      %v1058 = vld [vmem:[#allocation4 + $0x28] sm:$0xff]
      %v1059 = vld [vmem:[#allocation5] sm:$0xff]
      %v1060 = vld [vmem:[#allocation5 + $0x8] sm:$0xff]
      %v1061 = vld [vmem:[#allocation5 + $0x10] sm:$0xff]
      %v1062 = vld [vmem:[#allocation5 + $0x18] sm:$0xff]
      %v1063 = vld [vmem:[#allocation5 + $0x20] sm:$0xff]
      %v1064 = vld [vmem:[#allocation5 + $0x28] sm:$0xff]
      %v1065 = vld [vmem:[#allocation5 + $0x30] sm:$0xff]
      %v1066 = vld [vmem:[#allocation5 + $0x38] sm:$0xff]
      %v1067 = vld [vmem:[#allocation5 + $0x40] sm:$0xff]
      %v1068 = vld [vmem:[#allocation5 + $0x48] sm:$0xff]
      %v1069 = vld [vmem:[#allocation5 + $0x50] sm:$0xff]
      %v1070 = vld [vmem:[#allocation5 + $0x58] sm:$0xff]
      %v1071 = vld [vmem:[#allocation5 + $0x60] sm:$0xff]
      %v1072 = vld [vmem:[#allocation5 + $0x68] sm:$0xff]
      %v1073 = vld [vmem:[#allocation5 + $0x70] sm:$0xff]
      %v1074 = vld [vmem:[#allocation5 + $0x78] sm:$0xff]
      %v1075 = vld [vmem:[#allocation5 + $0x80] sm:$0xff]
      %v1076 = vld [vmem:[#allocation5 + $0x88] sm:$0xff]
      %v1077 = vld [vmem:[#allocation5 + $0x90] sm:$0xff]
      %v1078 = vld [vmem:[#allocation5 + $0x98] sm:$0xff]
      %v1079 = vld [vmem:[#allocation5 + $0xa0] sm:$0xff]
      %v1080 = vld [vmem:[#allocation5 + $0xa8] sm:$0xff]
      %v1081 = vld [vmem:[#allocation5 + $0xb0] sm:$0xff]
      %v1082 = vld [vmem:[#allocation5 + $0xb8] sm:$0xff]
      %v1083 = vld [vmem:[#allocation5 + $0xc0] sm:$0xff]
      %v1084 = vld [vmem:[#allocation5 + $0xc8] sm:$0xff]
      %v1085 = vld [vmem:[#allocation5 + $0xd0] sm:$0xff]
      %v1086 = vld [vmem:[#allocation5 + $0xd8] sm:$0xff]
      %v1087 = vld [vmem:[#allocation5 + $0xe0] sm:$0xff]
      %v1088 = vld [vmem:[#allocation5 + $0xe8] sm:$0xff]
      %v1089 = vld [vmem:[#allocation5 + $0xf0] sm:$0xff]
      %v1090 = vld [vmem:[#allocation5 + $0xf8] sm:$0xff]
      %v1091 = vld [vmem:[#allocation5 + $0x100] sm:$0xff]
      %v1092 = vld [vmem:[#allocation5 + $0x108] sm:$0xff]
      %v1093 = vld [vmem:[#allocation5 + $0x110] sm:$0xff]
      %v1094 = vld [vmem:[#allocation5 + $0x118] sm:$0xff]
      %v1095 = vld [vmem:[#allocation5 + $0x120] sm:$0xff]
      %v1096 = vld [vmem:[#allocation5 + $0x128] sm:$0xff]
      %v1097 = vld [vmem:[#allocation5 + $0x130] sm:$0xff]
      %v1098 = vld [vmem:[#allocation5 + $0x138] sm:$0xff]
      %v1099 = vld [vmem:[#allocation5 + $0x140] sm:$0xff]
      %v1100 = vld [vmem:[#allocation5 + $0x148] sm:$0xff]
      %v1101 = vld [vmem:[#allocation5 + $0x150] sm:$0xff]
      %v1102 = vld [vmem:[#allocation5 + $0x158] sm:$0xff]
      %v1103 = vld [vmem:[#allocation5 + $0x160] sm:$0xff]
      %v1104 = vld [vmem:[#allocation5 + $0x168] sm:$0xff]
      %v1105 = vld [vmem:[#allocation5 + $0x170] sm:$0xff]
      %v1106 = vld [vmem:[#allocation5 + $0x178] sm:$0xff]
      %v1107 = vld [vmem:[#allocation5 + $0x180] sm:$0xff]
      %v1108 = vld [vmem:[#allocation5 + $0x188] sm:$0xff]
      %v1109 = vld [vmem:[#allocation5 + $0x190] sm:$0xff]
      %v1110 = vld [vmem:[#allocation5 + $0x198] sm:$0xff]
      %v1111 = vld [vmem:[#allocation5 + $0x1a0] sm:$0xff]
      %v1112 = vld [vmem:[#allocation5 + $0x1a8] sm:$0xff]
      %v1113 = vld [vmem:[#allocation5 + $0x1b0] sm:$0xff]
      %v1114 = vld [vmem:[#allocation5 + $0x1b8] sm:$0xff]
      %v1115 = vld [vmem:[#allocation5 + $0x1c0] sm:$0xff]
      %v1116 = vld [vmem:[#allocation5 + $0x1c8] sm:$0xff]
      %v1117 = vld [vmem:[#allocation5 + $0x1d0] sm:$0xff]
      %v1118 = vld [vmem:[#allocation5 + $0x1d8] sm:$0xff]
      %v1119 = vld [vmem:[#allocation5 + $0x1e0] sm:$0xff]
      %v1120 = vld [vmem:[#allocation5 + $0x1e8] sm:$0xff]
      %v1121 = vld [vmem:[#allocation5 + $0x1f0] sm:$0xff]
      %v1122 = vld [vmem:[#allocation5 + $0x1f8] sm:$0xff]
      %v1123 = vld [vmem:[#allocation5 + $0x200] sm:$0xff]
      %v1124 = vld [vmem:[#allocation5 + $0x208] sm:$0xff]
      %v1125 = vld [vmem:[#allocation5 + $0x210] sm:$0xff]
      %v1126 = vld [vmem:[#allocation5 + $0x218] sm:$0xff]
      %v1127 = vld [vmem:[#allocation5 + $0x220] sm:$0xff]
      %v1128 = vld [vmem:[#allocation5 + $0x228] sm:$0xff]
      %v1129 = vld [vmem:[#allocation5 + $0x230] sm:$0xff]
      %v1130 = vld [vmem:[#allocation5 + $0x238] sm:$0xff]
      %v1131 = vld [vmem:[#allocation5 + $0x240] sm:$0xff]
      %v1132 = vld [vmem:[#allocation5 + $0x248] sm:$0xff]
      %v1133 = vld [vmem:[#allocation5 + $0x250] sm:$0xff]
      %v1134 = vld [vmem:[#allocation5 + $0x258] sm:$0xff]
      %v1135 = vld [vmem:[#allocation5 + $0x260] sm:$0xff]
      %v1136 = vld [vmem:[#allocation5 + $0x268] sm:$0xff]
      %v1137 = vld [vmem:[#allocation5 + $0x270] sm:$0xff]
      %v1138 = vld [vmem:[#allocation5 + $0x278] sm:$0xff]
      %v1139 = vld [vmem:[#allocation5 + $0x280] sm:$0xff]
      %v1140 = vld [vmem:[#allocation5 + $0x288] sm:$0xff]
      %v1141 = vld [vmem:[#allocation5 + $0x290] sm:$0xff]
      %v1142 = vld [vmem:[#allocation5 + $0x298] sm:$0xff]
      %v1143 = vld [vmem:[#allocation5 + $0x2a0] sm:$0xff]
      %v1144 = vld [vmem:[#allocation5 + $0x2a8] sm:$0xff]
      %v1145 = vld [vmem:[#allocation5 + $0x2b0] sm:$0xff]
      %v1146 = vld [vmem:[#allocation5 + $0x2b8] sm:$0xff]
      %v1147 = vld [vmem:[#allocation5 + $0x2c0] sm:$0xff]
      %v1148 = vld [vmem:[#allocation5 + $0x2c8] sm:$0xff]
      %v1149 = vld [vmem:[#allocation5 + $0x2d0] sm:$0xff]
      %v1150 = vld [vmem:[#allocation5 + $0x2d8] sm:$0xff]
      %v1151 = vld [vmem:[#allocation5 + $0x2e0] sm:$0xff]
      %v1152 = vld [vmem:[#allocation5 + $0x2e8] sm:$0xff]
      %v1153 = vld [vmem:[#allocation5 + $0x2f0] sm:$0xff]
      %v1154 = vld [vmem:[#allocation5 + $0x2f8] sm:$0xff]
      %v1155 = vld [vmem:[#allocation5 + $0x300] sm:$0xff]
      %v1156 = vld [vmem:[#allocation5 + $0x308] sm:$0xff]
      %v1157 = vld [vmem:[#allocation5 + $0x310] sm:$0xff]
      %v1158 = vld [vmem:[#allocation5 + $0x318] sm:$0xff]
      %v1159 = vld [vmem:[#allocation5 + $0x320] sm:$0xff]
      %v1160 = vld [vmem:[#allocation5 + $0x328] sm:$0xff]
      %v1161 = vld [vmem:[#allocation5 + $0x330] sm:$0xff]
      %v1162 = vld [vmem:[#allocation5 + $0x338] sm:$0xff]
      %v1163 = vld [vmem:[#allocation5 + $0x340] sm:$0xff]
      %v1164 = vld [vmem:[#allocation5 + $0x348] sm:$0xff]
      %v1165 = vld [vmem:[#allocation5 + $0x350] sm:$0xff]
      %v1166 = vld [vmem:[#allocation5 + $0x358] sm:$0xff]
      %v1167 = vld [vmem:[#allocation5 + $0x360] sm:$0xff]
      %v1168 = vld [vmem:[#allocation5 + $0x368] sm:$0xff]
      %v1169 = vld [vmem:[#allocation5 + $0x370] sm:$0xff]
      %v1170 = vld [vmem:[#allocation5 + $0x378] sm:$0xff]
      %v1171 = vld [vmem:[#allocation5 + $0x380] sm:$0xff]
      %v1172 = vld [vmem:[#allocation5 + $0x388] sm:$0xff]
      %v1173 = vld [vmem:[#allocation5 + $0x390] sm:$0xff]
      %v1174 = vld [vmem:[#allocation5 + $0x398] sm:$0xff]
      %v1175 = vld [vmem:[#allocation5 + $0x3a0] sm:$0xff]
      %v1176 = vld [vmem:[#allocation5 + $0x3a8] sm:$0xff]
      %v1177 = vld [vmem:[#allocation5 + $0x3b0] sm:$0xff]
      %v1178 = vld [vmem:[#allocation5 + $0x3b8] sm:$0xff]
      %v1179 = vld [vmem:[#allocation5 + $0x3c0] sm:$0xff]
      %v1180 = vld [vmem:[#allocation5 + $0x3c8] sm:$0xff]
      %v1181 = vld [vmem:[#allocation5 + $0x3d0] sm:$0xff]
      %v1182 = vld [vmem:[#allocation5 + $0x3d8] sm:$0xff]
      %v1183 = vld [vmem:[#allocation5 + $0x3e0] sm:$0xff]
      %v1184 = vld [vmem:[#allocation5 + $0x3e8] sm:$0xff]
      %v1185 = vld [vmem:[#allocation5 + $0x3f0] sm:$0xff]
      %v1186 = vld [vmem:[#allocation5 + $0x3f8] sm:$0xff]
      %v1187 = vld [vmem:[#allocation5 + $0x400] sm:$0xff]
      %v1188 = vld [vmem:[#allocation5 + $0x408] sm:$0xff]
      %v1189 = vld [vmem:[#allocation5 + $0x410] sm:$0xff]
      %v1190 = vld [vmem:[#allocation5 + $0x418] sm:$0xff]
      %v1191 = vld [vmem:[#allocation5 + $0x420] sm:$0xff]
      %v1192 = vld [vmem:[#allocation5 + $0x428] sm:$0xff]
      %v1193 = vld [vmem:[#allocation5 + $0x430] sm:$0xff]
      %v1194 = vld [vmem:[#allocation5 + $0x438] sm:$0xff]
      %v1195 = vld [vmem:[#allocation5 + $0x440] sm:$0xff]
      %v1196 = vld [vmem:[#allocation5 + $0x448] sm:$0xff]
      %v1197 = vld [vmem:[#allocation5 + $0x450] sm:$0xff]
      %v1198 = vld [vmem:[#allocation5 + $0x458] sm:$0xff]
      %v1199 = vld [vmem:[#allocation5 + $0x460] sm:$0xff]
      %v1200 = vld [vmem:[#allocation5 + $0x468] sm:$0xff]
      %v1201 = vld [vmem:[#allocation5 + $0x470] sm:$0xff]
      %v1202 = vld [vmem:[#allocation5 + $0x478] sm:$0xff]
      %v1203 = vld [vmem:[#allocation5 + $0x480] sm:$0xff]
      %v1204 = vld [vmem:[#allocation5 + $0x488] sm:$0xff]
      %v1205 = vld [vmem:[#allocation5 + $0x490] sm:$0xff]
      %v1206 = vld [vmem:[#allocation5 + $0x498] sm:$0xff]
      %v1207 = vld [vmem:[#allocation5 + $0x4a0] sm:$0xff]
      %v1208 = vld [vmem:[#allocation5 + $0x4a8] sm:$0xff]
      %v1209 = vld [vmem:[#allocation5 + $0x4b0] sm:$0xff]
      %v1210 = vld [vmem:[#allocation5 + $0x4b8] sm:$0xff]
      %v1211 = vld [vmem:[#allocation5 + $0x4c0] sm:$0xff]
      %v1212 = vld [vmem:[#allocation5 + $0x4c8] sm:$0xff]
      %v1213 = vld [vmem:[#allocation5 + $0x4d0] sm:$0xff]
      %v1214 = vld [vmem:[#allocation5 + $0x4d8] sm:$0xff]
      %v1215 = vld [vmem:[#allocation5 + $0x4e0] sm:$0xff]
      %v1216 = vld [vmem:[#allocation5 + $0x4e8] sm:$0xff]
      %v1217 = vld [vmem:[#allocation5 + $0x4f0] sm:$0xff]
      %v1218 = vld [vmem:[#allocation5 + $0x4f8] sm:$0xff]
      %v1219 = vld [vmem:[#allocation5 + $0x500] sm:$0xff]
      %v1220 = vld [vmem:[#allocation5 + $0x508] sm:$0xff]
      %v1221 = vld [vmem:[#allocation5 + $0x510] sm:$0xff]
      %v1222 = vld [vmem:[#allocation5 + $0x518] sm:$0xff]
      %v1223 = vld [vmem:[#allocation5 + $0x520] sm:$0xff]
      %v1224 = vld [vmem:[#allocation5 + $0x528] sm:$0xff]
      %v1225 = vld [vmem:[#allocation5 + $0x530] sm:$0xff]
      %v1226 = vld [vmem:[#allocation5 + $0x538] sm:$0xff]
      %v1227 = vld [vmem:[#allocation5 + $0x540] sm:$0xff]
      %v1228 = vld [vmem:[#allocation5 + $0x548] sm:$0xff]
      %v1229 = vld [vmem:[#allocation5 + $0x550] sm:$0xff]
      %v1230 = vld [vmem:[#allocation5 + $0x558] sm:$0xff]
      %v1231 = vld [vmem:[#allocation5 + $0x560] sm:$0xff]
      %v1232 = vld [vmem:[#allocation5 + $0x568] sm:$0xff]
      %v1233 = vld [vmem:[#allocation5 + $0x570] sm:$0xff]
      %v1234 = vld [vmem:[#allocation5 + $0x578] sm:$0xff]
      %v1235 = vld [vmem:[#allocation5 + $0x580] sm:$0xff]
      %v1236 = vld [vmem:[#allocation5 + $0x588] sm:$0xff]
      %v1237 = vld [vmem:[#allocation5 + $0x590] sm:$0xff]
      %v1238 = vld [vmem:[#allocation5 + $0x598] sm:$0xff]
      %v1239 = vld [vmem:[#allocation5 + $0x5a0] sm:$0xff]
      %v1240 = vld [vmem:[#allocation5 + $0x5a8] sm:$0xff]
      %v1241 = vld [vmem:[#allocation5 + $0x5b0] sm:$0xff]
      %v1242 = vld [vmem:[#allocation5 + $0x5b8] sm:$0xff]
      %v1243 = vld [vmem:[#allocation5 + $0x5c0] sm:$0xff]
      %v1244 = vld [vmem:[#allocation5 + $0x5c8] sm:$0xff]
      %v1245 = vld [vmem:[#allocation5 + $0x5d0] sm:$0xff]
      %v1246 = vld [vmem:[#allocation5 + $0x5d8] sm:$0xff]
      %v1247 = vld [vmem:[#allocation5 + $0x5e0] sm:$0xff]
      %v1248 = vld [vmem:[#allocation5 + $0x5e8] sm:$0xff]
      %v1249 = vld [vmem:[#allocation5 + $0x5f0] sm:$0xff]
      %v1250 = vld [vmem:[#allocation5 + $0x5f8] sm:$0xff]
      %v1251 = vld [vmem:[#allocation5 + $0x600] sm:$0xff]
      %v1252 = vld [vmem:[#allocation5 + $0x608] sm:$0xff]
      %v1253 = vld [vmem:[#allocation5 + $0x610] sm:$0xff]
      %v1254 = vld [vmem:[#allocation5 + $0x618] sm:$0xff]
      %v1255 = vld [vmem:[#allocation5 + $0x620] sm:$0xff]
      %v1256 = vld [vmem:[#allocation5 + $0x628] sm:$0xff]
      %v1257 = vld [vmem:[#allocation5 + $0x630] sm:$0xff]
      %v1258 = vld [vmem:[#allocation5 + $0x638] sm:$0xff]
      %v1259 = vld [vmem:[#allocation5 + $0x640] sm:$0xff]
      %v1260 = vld [vmem:[#allocation5 + $0x648] sm:$0xff]
      %v1261 = vld [vmem:[#allocation5 + $0x650] sm:$0xff]
      %v1262 = vld [vmem:[#allocation5 + $0x658] sm:$0xff]
      %v1263 = vld [vmem:[#allocation5 + $0x660] sm:$0xff]
      %v1264 = vld [vmem:[#allocation5 + $0x668] sm:$0xff]
      %v1265 = vld [vmem:[#allocation5 + $0x670] sm:$0xff]
      %v1266 = vld [vmem:[#allocation5 + $0x678] sm:$0xff]
      %v1267 = vld [vmem:[#allocation5 + $0x680] sm:$0xff]
      %v1268 = vld [vmem:[#allocation5 + $0x688] sm:$0xff]
      %v1269 = vld [vmem:[#allocation5 + $0x690] sm:$0xff]
      %v1270 = vld [vmem:[#allocation5 + $0x698] sm:$0xff]
      %v1271 = vld [vmem:[#allocation5 + $0x6a0] sm:$0xff]
      %v1272 = vld [vmem:[#allocation5 + $0x6a8] sm:$0xff]
      %v1273 = vld [vmem:[#allocation5 + $0x6b0] sm:$0xff]
      %v1274 = vld [vmem:[#allocation5 + $0x6b8] sm:$0xff]
      %v1275 = vld [vmem:[#allocation5 + $0x6c0] sm:$0xff]
      %v1276 = vld [vmem:[#allocation5 + $0x6c8] sm:$0xff]
      %v1277 = vld [vmem:[#allocation5 + $0x6d0] sm:$0xff]
      %v1278 = vld [vmem:[#allocation5 + $0x6d8] sm:$0xff]
      %v1279 = vld [vmem:[#allocation5 + $0x6e0] sm:$0xff]
      %v1280 = vld [vmem:[#allocation5 + $0x6e8] sm:$0xff]
      %v1281 = vld [vmem:[#allocation5 + $0x6f0] sm:$0xff]
      %v1282 = vld [vmem:[#allocation5 + $0x6f8] sm:$0xff]
      %v1283 = vld [vmem:[#allocation5 + $0x700] sm:$0xff]
      %v1284 = vld [vmem:[#allocation5 + $0x708] sm:$0xff]
      %v1285 = vld [vmem:[#allocation5 + $0x710] sm:$0xff]
      %v1286 = vld [vmem:[#allocation5 + $0x718] sm:$0xff]
      %v1287 = vld [vmem:[#allocation5 + $0x720] sm:$0xff]
      %v1288 = vld [vmem:[#allocation5 + $0x728] sm:$0xff]
      %v1289 = vld [vmem:[#allocation5 + $0x730] sm:$0xff]
      %v1290 = vld [vmem:[#allocation5 + $0x738] sm:$0xff]
      %v1291 = vld [vmem:[#allocation5 + $0x740] sm:$0xff]
      %v1292 = vld [vmem:[#allocation5 + $0x748] sm:$0xff]
      %v1293 = vld [vmem:[#allocation5 + $0x750] sm:$0xff]
      %v1294 = vld [vmem:[#allocation5 + $0x758] sm:$0xff]
      %v1295 = vld [vmem:[#allocation5 + $0x760] sm:$0xff]
      %v1296 = vld [vmem:[#allocation5 + $0x768] sm:$0xff]
      %v1297 = vld [vmem:[#allocation5 + $0x770] sm:$0xff]
      %v1298 = vld [vmem:[#allocation5 + $0x778] sm:$0xff]
      %v1299 = vld [vmem:[#allocation5 + $0x780] sm:$0xff]
      %v1300 = vld [vmem:[#allocation5 + $0x788] sm:$0xff]
      %v1301 = vld [vmem:[#allocation5 + $0x790] sm:$0xff]
      %v1302 = vld [vmem:[#allocation5 + $0x798] sm:$0xff]
      %v1303 = vld [vmem:[#allocation5 + $0x7a0] sm:$0xff]
      %v1304 = vld [vmem:[#allocation5 + $0x7a8] sm:$0xff]
      %v1305 = vld [vmem:[#allocation5 + $0x7b0] sm:$0xff]
      %v1306 = vld [vmem:[#allocation5 + $0x7b8] sm:$0xff]
      %v1307 = vld [vmem:[#allocation5 + $0x7c0] sm:$0xff]
      %v1308 = vld [vmem:[#allocation5 + $0x7c8] sm:$0xff]
      %v1309 = vld [vmem:[#allocation5 + $0x7d0] sm:$0xff]
      %v1310 = vld [vmem:[#allocation5 + $0x7d8] sm:$0xff]
      %v1311 = vld [vmem:[#allocation5 + $0x7e0] sm:$0xff]
      %v1312 = vld [vmem:[#allocation5 + $0x7e8] sm:$0xff]
      %v1313 = vld [vmem:[#allocation5 + $0x7f0] sm:$0xff]
      %v1314 = vld [vmem:[#allocation5 + $0x7f8] sm:$0xff]
      %v1315 = vld [vmem:[#allocation5 + $0x800] sm:$0xff]
      %v1316 = vld [vmem:[#allocation5 + $0x808] sm:$0xff]
      %v1317 = vld [vmem:[#allocation5 + $0x810] sm:$0xff]
      %v1318 = vld [vmem:[#allocation5 + $0x818] sm:$0xff]
      %v1319 = vld [vmem:[#allocation5 + $0x820] sm:$0xff]
      %v1320 = vld [vmem:[#allocation5 + $0x828] sm:$0xff]
      %v1321 = vld [vmem:[#allocation5 + $0x830] sm:$0xff]
      %v1322 = vld [vmem:[#allocation5 + $0x838] sm:$0xff]
      %v1323 = vld [vmem:[#allocation5 + $0x840] sm:$0xff]
      %v1324 = vld [vmem:[#allocation5 + $0x848] sm:$0xff]
      %v1325 = vld [vmem:[#allocation5 + $0x850] sm:$0xff]
      %v1326 = vld [vmem:[#allocation5 + $0x858] sm:$0xff]
      %v1327 = vld [vmem:[#allocation5 + $0x860] sm:$0xff]
      %v1328 = vld [vmem:[#allocation5 + $0x868] sm:$0xff]
      %v1329 = vld [vmem:[#allocation5 + $0x870] sm:$0xff]
      %v1330 = vld [vmem:[#allocation5 + $0x878] sm:$0xff]
      %v1331 = vld [vmem:[#allocation5 + $0x880] sm:$0xff]
      %v1332 = vld [vmem:[#allocation5 + $0x888] sm:$0xff]
      %v1333 = vld [vmem:[#allocation5 + $0x890] sm:$0xff]
      %v1334 = vld [vmem:[#allocation5 + $0x898] sm:$0xff]
      %v1335 = vld [vmem:[#allocation5 + $0x8a0] sm:$0xff]
      %v1336 = vld [vmem:[#allocation5 + $0x8a8] sm:$0xff]
      %v1337 = vld [vmem:[#allocation5 + $0x8b0] sm:$0xff]
      %v1338 = vld [vmem:[#allocation5 + $0x8b8] sm:$0xff]
      %v1339 = vld [vmem:[#allocation5 + $0x8c0] sm:$0xff]
      %v1340 = vld [vmem:[#allocation5 + $0x8c8] sm:$0xff]
      %v1341 = vld [vmem:[#allocation5 + $0x8d0] sm:$0xff]
      %v1342 = vld [vmem:[#allocation5 + $0x8d8] sm:$0xff]
      %v1343 = vld [vmem:[#allocation5 + $0x8e0] sm:$0xff]
      %v1344 = vld [vmem:[#allocation5 + $0x8e8] sm:$0xff]
      %v1345 = vld [vmem:[#allocation5 + $0x8f0] sm:$0xff]
      %v1346 = vld [vmem:[#allocation5 + $0x8f8] sm:$0xff]
      %v1347 = vld [vmem:[#allocation5 + $0x900] sm:$0xff]
      %v1348 = vld [vmem:[#allocation5 + $0x908] sm:$0xff]
      %v1349 = vld [vmem:[#allocation5 + $0x910] sm:$0xff]
      %v1350 = vld [vmem:[#allocation5 + $0x918] sm:$0xff]
      %v1351 = vld [vmem:[#allocation5 + $0x920] sm:$0xff]
      %v1352 = vld [vmem:[#allocation5 + $0x928] sm:$0xff]
      %v1353 = vld [vmem:[#allocation5 + $0x930] sm:$0xff]
      %v1354 = vld [vmem:[#allocation5 + $0x938] sm:$0xff]
      %v1355 = vld [vmem:[#allocation5 + $0x940] sm:$0xff]
      %v1356 = vld [vmem:[#allocation5 + $0x948] sm:$0xff]
      %v1357 = vld [vmem:[#allocation5 + $0x950] sm:$0xff]
      %v1358 = vld [vmem:[#allocation5 + $0x958] sm:$0xff]
      %v1359 = vld [vmem:[#allocation5 + $0x960] sm:$0xff]
      %v1360 = vld [vmem:[#allocation5 + $0x968] sm:$0xff]
      %v1361 = vld [vmem:[#allocation5 + $0x970] sm:$0xff]
      %v1362 = vld [vmem:[#allocation5 + $0x978] sm:$0xff]
      %v1363 = vld [vmem:[#allocation5 + $0x980] sm:$0xff]
      %v1364 = vld [vmem:[#allocation5 + $0x988] sm:$0xff]
      %v1365 = vld [vmem:[#allocation5 + $0x990] sm:$0xff]
      %v1366 = vld [vmem:[#allocation5 + $0x998] sm:$0xff]
      %v1367 = vld [vmem:[#allocation5 + $0x9a0] sm:$0xff]
      %v1368 = vld [vmem:[#allocation5 + $0x9a8] sm:$0xff]
      %v1369 = vld [vmem:[#allocation5 + $0x9b0] sm:$0xff]
      %v1370 = vld [vmem:[#allocation5 + $0x9b8] sm:$0xff]
      %v1371 = vld [vmem:[#allocation5 + $0x9c0] sm:$0xff]
      %v1372 = vld [vmem:[#allocation5 + $0x9c8] sm:$0xff]
      %v1373 = vld [vmem:[#allocation5 + $0x9d0] sm:$0xff]
      %v1374 = vld [vmem:[#allocation5 + $0x9d8] sm:$0xff]
      %v1375 = vld [vmem:[#allocation5 + $0x9e0] sm:$0xff]
      %v1376 = vld [vmem:[#allocation5 + $0x9e8] sm:$0xff]
      %v1377 = vld [vmem:[#allocation5 + $0x9f0] sm:$0xff]
      %v1378 = vld [vmem:[#allocation5 + $0x9f8] sm:$0xff]
      %v1379 = vld [vmem:[#allocation5 + $0xa00] sm:$0xff]
      %v1380 = vld [vmem:[#allocation5 + $0xa08] sm:$0xff]
      %v1381 = vld [vmem:[#allocation5 + $0xa10] sm:$0xff]
      %v1382 = vld [vmem:[#allocation5 + $0xa18] sm:$0xff]
      %v1383 = vld [vmem:[#allocation5 + $0xa20] sm:$0xff]
      %v1384 = vld [vmem:[#allocation5 + $0xa28] sm:$0xff]
      %v1385 = vld [vmem:[#allocation5 + $0xa30] sm:$0xff]
      %v1386 = vld [vmem:[#allocation5 + $0xa38] sm:$0xff]
      %v1387 = vld [vmem:[#allocation5 + $0xa40] sm:$0xff]
      %v1388 = vld [vmem:[#allocation5 + $0xa48] sm:$0xff]
      %v1389 = vld [vmem:[#allocation5 + $0xa50] sm:$0xff]
      %v1390 = vld [vmem:[#allocation5 + $0xa58] sm:$0xff]
      %v1391 = vld [vmem:[#allocation5 + $0xa60] sm:$0xff]
      %v1392 = vld [vmem:[#allocation5 + $0xa68] sm:$0xff]
      %v1393 = vld [vmem:[#allocation5 + $0xa70] sm:$0xff]
      %v1394 = vld [vmem:[#allocation5 + $0xa78] sm:$0xff]
      %v1395 = vld [vmem:[#allocation5 + $0xa80] sm:$0xff]
      %v1396 = vld [vmem:[#allocation5 + $0xa88] sm:$0xff]
      %v1397 = vld [vmem:[#allocation5 + $0xa90] sm:$0xff]
      %v1398 = vld [vmem:[#allocation5 + $0xa98] sm:$0xff]
      %v1399 = vld [vmem:[#allocation5 + $0xaa0] sm:$0xff]
      %v1400 = vld [vmem:[#allocation5 + $0xaa8] sm:$0xff]
      %v1401 = vld [vmem:[#allocation5 + $0xab0] sm:$0xff]
      %v1402 = vld [vmem:[#allocation5 + $0xab8] sm:$0xff]
      %v1403 = vld [vmem:[#allocation5 + $0xac0] sm:$0xff]
      %v1404 = vld [vmem:[#allocation5 + $0xac8] sm:$0xff]
      %v1405 = vld [vmem:[#allocation5 + $0xad0] sm:$0xff]
      %v1406 = vld [vmem:[#allocation5 + $0xad8] sm:$0xff]
      %v1407 = vld [vmem:[#allocation5 + $0xae0] sm:$0xff]
      %v1408 = vld [vmem:[#allocation5 + $0xae8] sm:$0xff]
      %v1409 = vld [vmem:[#allocation5 + $0xaf0] sm:$0xff]
      %v1410 = vld [vmem:[#allocation5 + $0xaf8] sm:$0xff]
      %v1411 = vld [vmem:[#allocation5 + $0xb00] sm:$0xff]
      %v1412 = vld [vmem:[#allocation5 + $0xb08] sm:$0xff]
      %v1413 = vld [vmem:[#allocation5 + $0xb10] sm:$0xff]
      %v1414 = vld [vmem:[#allocation5 + $0xb18] sm:$0xff]
      %v1415 = vld [vmem:[#allocation5 + $0xb20] sm:$0xff]
      %v1416 = vld [vmem:[#allocation5 + $0xb28] sm:$0xff]
      %v1417 = vld [vmem:[#allocation5 + $0xb30] sm:$0xff]
      %v1418 = vld [vmem:[#allocation5 + $0xb38] sm:$0xff]
      %v1419 = vld [vmem:[#allocation5 + $0xb40] sm:$0xff]
      %v1420 = vld [vmem:[#allocation5 + $0xb48] sm:$0xff]
      %v1421 = vld [vmem:[#allocation5 + $0xb50] sm:$0xff]
      %v1422 = vld [vmem:[#allocation5 + $0xb58] sm:$0xff]
      %v1423 = vld [vmem:[#allocation5 + $0xb60] sm:$0xff]
      %v1424 = vld [vmem:[#allocation5 + $0xb68] sm:$0xff]
      %v1425 = vld [vmem:[#allocation5 + $0xb70] sm:$0xff]
      %v1426 = vld [vmem:[#allocation5 + $0xb78] sm:$0xff]
      %v1427 = vld [vmem:[#allocation5 + $0xb80] sm:$0xff]
      %v1428 = vld [vmem:[#allocation5 + $0xb88] sm:$0xff]
      %v1429 = vld [vmem:[#allocation5 + $0xb90] sm:$0xff]
      %v1430 = vld [vmem:[#allocation5 + $0xb98] sm:$0xff]
      %v1431 = vld [vmem:[#allocation5 + $0xba0] sm:$0xff]
      %v1432 = vld [vmem:[#allocation5 + $0xba8] sm:$0xff]
      %v1433 = vld [vmem:[#allocation5 + $0xbb0] sm:$0xff]
      %v1434 = vld [vmem:[#allocation5 + $0xbb8] sm:$0xff]
      %v1435 = vld [vmem:[#allocation5 + $0xbc0] sm:$0xff]
      %v1436 = vld [vmem:[#allocation5 + $0xbc8] sm:$0xff]
      %v1437 = vld [vmem:[#allocation5 + $0xbd0] sm:$0xff]
      %v1438 = vld [vmem:[#allocation5 + $0xbd8] sm:$0xff]
      %v1439 = vld [vmem:[#allocation5 + $0xbe0] sm:$0xff]
      %v1440 = vld [vmem:[#allocation5 + $0xbe8] sm:$0xff]
      %v1441 = vld [vmem:[#allocation5 + $0xbf0] sm:$0xff]
      %v1442 = vld [vmem:[#allocation5 + $0xbf8] sm:$0xff]
      %v1443 = vld [vmem:[#allocation7] sm:$0xf]
      %v1445 = vperm.slane %v1443, 0
      %v1446 = vperm.slane %v1443, 1
      %v1447 = vperm.slane %v1443, 2
      %v1448 = vperm.slane %v1443, 3
      %v1459 = vunpack.c.l.b16 %v1053
      %v1460 = vunpack.c.h.b16 %v1053
      %v1461 = vunpack.c.l.b16 %v1054
      %v1462 = vunpack.c.h.b16 %v1054
      %v1463 = vunpack.c.l.b16 %v1055
      %v1464 = vunpack.c.h.b16 %v1055
      %v1465 = vunpack.c.l.b16 %v1056
      %v1466 = vunpack.c.h.b16 %v1056
      %v1467 = vunpack.c.l.b16 %v1057
      %v1468 = vunpack.c.h.b16 %v1057
      %v1469 = vunpack.c.l.b16 %v1058
      %v1470 = vunpack.c.h.b16 %v1058
      %v1471 = vpack.c.b16 %v1459, %v1459
      %v1472 = vpack.c.b16 %v1460, %v1460
      %v1473 = vpack.c.b16 %v1461, %v1461
      %v1474 = vpack.c.b16 %v1462, %v1462
      %v1475 = vpack.c.b16 %v1463, %v1463
      %v1476 = vpack.c.b16 %v1464, %v1464
      %v1477 = vpack.c.b16 %v1465, %v1465
      %v1478 = vpack.c.b16 %v1466, %v1466
      %v1479 = vpack.c.b16 %v1467, %v1467
      %v1480 = vpack.c.b16 %v1468, %v1468
      %v1481 = vpack.c.b16 %v1469, %v1469
      %v1482 = vpack.c.b16 %v1470, %v1470
      %v1879 = vunpack.c.l.b16 %v1059
      %v1880 = vunpack.c.h.b16 %v1059
      %v1881 = vunpack.c.l.b16 %v1060
      %v1882 = vunpack.c.h.b16 %v1060
      %v1883 = vunpack.c.l.b16 %v1061
      %v1884 = vunpack.c.h.b16 %v1061
      %v1885 = vunpack.c.l.b16 %v1062
      %v1886 = vunpack.c.h.b16 %v1062
      %v1887 = vunpack.c.l.b16 %v1063
      %v1888 = vunpack.c.h.b16 %v1063
      %v1889 = vunpack.c.l.b16 %v1064
      %v1890 = vunpack.c.h.b16 %v1064
      %v1891 = vunpack.c.l.b16 %v1065
      %v1892 = vunpack.c.h.b16 %v1065
      %v1893 = vunpack.c.l.b16 %v1066
      %v1894 = vunpack.c.h.b16 %v1066
      %v1895 = vunpack.c.l.b16 %v1067
      %v1896 = vunpack.c.h.b16 %v1067
      %v1897 = vunpack.c.l.b16 %v1068
      %v1898 = vunpack.c.h.b16 %v1068
      %v1899 = vunpack.c.l.b16 %v1069
      %v1900 = vunpack.c.h.b16 %v1069
      %v1901 = vunpack.c.l.b16 %v1070
      %v1902 = vunpack.c.h.b16 %v1070
      %v1903 = vunpack.c.l.b16 %v1071
      %v1904 = vunpack.c.h.b16 %v1071
      %v1905 = vunpack.c.l.b16 %v1072
      %v1906 = vunpack.c.h.b16 %v1072
      %v1907 = vunpack.c.l.b16 %v1073
      %v1908 = vunpack.c.h.b16 %v1073
      %v1909 = vunpack.c.l.b16 %v1074
      %v1910 = vunpack.c.h.b16 %v1074
      %v1911 = vunpack.c.l.b16 %v1075
      %v1912 = vunpack.c.h.b16 %v1075
      %v1913 = vunpack.c.l.b16 %v1076
      %v1914 = vunpack.c.h.b16 %v1076
      %v1915 = vunpack.c.l.b16 %v1077
      %v1916 = vunpack.c.h.b16 %v1077
      %v1917 = vunpack.c.l.b16 %v1078
      %v1918 = vunpack.c.h.b16 %v1078
      %v1919 = vunpack.c.l.b16 %v1079
      %v1920 = vunpack.c.h.b16 %v1079
      %v1921 = vunpack.c.l.b16 %v1080
      %v1922 = vunpack.c.h.b16 %v1080
      %v1923 = vunpack.c.l.b16 %v1081
      %v1924 = vunpack.c.h.b16 %v1081
      %v1925 = vunpack.c.l.b16 %v1082
      %v1926 = vunpack.c.h.b16 %v1082
      %v1927 = vunpack.c.l.b16 %v1083
      %v1928 = vunpack.c.h.b16 %v1083
      %v1929 = vunpack.c.l.b16 %v1084
      %v1930 = vunpack.c.h.b16 %v1084
      %v1931 = vunpack.c.l.b16 %v1085
      %v1932 = vunpack.c.h.b16 %v1085
      %v1933 = vunpack.c.l.b16 %v1086
      %v1934 = vunpack.c.h.b16 %v1086
      %v1935 = vunpack.c.l.b16 %v1087
      %v1936 = vunpack.c.h.b16 %v1087
      %v1937 = vunpack.c.l.b16 %v1088
      %v1938 = vunpack.c.h.b16 %v1088
      %v1939 = vunpack.c.l.b16 %v1089
      %v1940 = vunpack.c.h.b16 %v1089
      %v1941 = vunpack.c.l.b16 %v1090
      %v1942 = vunpack.c.h.b16 %v1090
      %v1943 = vunpack.c.l.b16 %v1091
      %v1944 = vunpack.c.h.b16 %v1091
      %v1945 = vunpack.c.l.b16 %v1092
      %v1946 = vunpack.c.h.b16 %v1092
      %v1947 = vunpack.c.l.b16 %v1093
      %v1948 = vunpack.c.h.b16 %v1093
      %v1949 = vunpack.c.l.b16 %v1094
      %v1950 = vunpack.c.h.b16 %v1094
      %v1951 = vunpack.c.l.b16 %v1095
      %v1952 = vunpack.c.h.b16 %v1095
      %v1953 = vunpack.c.l.b16 %v1096
      %v1954 = vunpack.c.h.b16 %v1096
      %v1955 = vunpack.c.l.b16 %v1097
      %v1956 = vunpack.c.h.b16 %v1097
      %v1957 = vunpack.c.l.b16 %v1098
      %v1958 = vunpack.c.h.b16 %v1098
      %v1959 = vunpack.c.l.b16 %v1099
      %v1960 = vunpack.c.h.b16 %v1099
      %v1961 = vunpack.c.l.b16 %v1100
      %v1962 = vunpack.c.h.b16 %v1100
      %v1963 = vunpack.c.l.b16 %v1101
      %v1964 = vunpack.c.h.b16 %v1101
      %v1965 = vunpack.c.l.b16 %v1102
      %v1966 = vunpack.c.h.b16 %v1102
      %v1967 = vunpack.c.l.b16 %v1103
      %v1968 = vunpack.c.h.b16 %v1103
      %v1969 = vunpack.c.l.b16 %v1104
      %v1970 = vunpack.c.h.b16 %v1104
      %v1971 = vunpack.c.l.b16 %v1105
      %v1972 = vunpack.c.h.b16 %v1105
      %v1973 = vunpack.c.l.b16 %v1106
      %v1974 = vunpack.c.h.b16 %v1106
      %v1975 = vunpack.c.l.b16 %v1107
      %v1976 = vunpack.c.h.b16 %v1107
      %v1977 = vunpack.c.l.b16 %v1108
      %v1978 = vunpack.c.h.b16 %v1108
      %v1979 = vunpack.c.l.b16 %v1109
      %v1980 = vunpack.c.h.b16 %v1109
      %v1981 = vunpack.c.l.b16 %v1110
      %v1982 = vunpack.c.h.b16 %v1110
      %v1983 = vunpack.c.l.b16 %v1111
      %v1984 = vunpack.c.h.b16 %v1111
      %v1985 = vunpack.c.l.b16 %v1112
      %v1986 = vunpack.c.h.b16 %v1112
      %v1987 = vunpack.c.l.b16 %v1113
      %v1988 = vunpack.c.h.b16 %v1113
      %v1989 = vunpack.c.l.b16 %v1114
      %v1990 = vunpack.c.h.b16 %v1114
      %v1991 = vunpack.c.l.b16 %v1115
      %v1992 = vunpack.c.h.b16 %v1115
      %v1993 = vunpack.c.l.b16 %v1116
      %v1994 = vunpack.c.h.b16 %v1116
      %v1995 = vunpack.c.l.b16 %v1117
      %v1996 = vunpack.c.h.b16 %v1117
      %v1997 = vunpack.c.l.b16 %v1118
      %v1998 = vunpack.c.h.b16 %v1118
      %v1999 = vunpack.c.l.b16 %v1119
      %v2000 = vunpack.c.h.b16 %v1119
      %v2001 = vunpack.c.l.b16 %v1120
      %v2002 = vunpack.c.h.b16 %v1120
      %v2003 = vunpack.c.l.b16 %v1121
      %v2004 = vunpack.c.h.b16 %v1121
      %v2005 = vunpack.c.l.b16 %v1122
      %v2006 = vunpack.c.h.b16 %v1122
      %v2007 = vunpack.c.l.b16 %v1123
      %v2008 = vunpack.c.h.b16 %v1123
      %v2009 = vunpack.c.l.b16 %v1124
      %v2010 = vunpack.c.h.b16 %v1124
      %v2011 = vunpack.c.l.b16 %v1125
      %v2012 = vunpack.c.h.b16 %v1125
      %v2013 = vunpack.c.l.b16 %v1126
      %v2014 = vunpack.c.h.b16 %v1126
      %v2015 = vunpack.c.l.b16 %v1127
      %v2016 = vunpack.c.h.b16 %v1127
      %v2017 = vunpack.c.l.b16 %v1128
      %v2018 = vunpack.c.h.b16 %v1128
      %v2019 = vunpack.c.l.b16 %v1129
      %v2020 = vunpack.c.h.b16 %v1129
      %v2021 = vunpack.c.l.b16 %v1130
      %v2022 = vunpack.c.h.b16 %v1130
      %v2023 = vunpack.c.l.b16 %v1131
      %v2024 = vunpack.c.h.b16 %v1131
      %v2025 = vunpack.c.l.b16 %v1132
      %v2026 = vunpack.c.h.b16 %v1132
      %v2027 = vunpack.c.l.b16 %v1133
      %v2028 = vunpack.c.h.b16 %v1133
      %v2029 = vunpack.c.l.b16 %v1134
      %v2030 = vunpack.c.h.b16 %v1134
      %v2031 = vunpack.c.l.b16 %v1135
      %v2032 = vunpack.c.h.b16 %v1135
      %v2033 = vunpack.c.l.b16 %v1136
      %v2034 = vunpack.c.h.b16 %v1136
      %v2035 = vunpack.c.l.b16 %v1137
      %v2036 = vunpack.c.h.b16 %v1137
      %v2037 = vunpack.c.l.b16 %v1138
      %v2038 = vunpack.c.h.b16 %v1138
      %v2039 = vunpack.c.l.b16 %v1139
      %v2040 = vunpack.c.h.b16 %v1139
      %v2041 = vunpack.c.l.b16 %v1140
      %v2042 = vunpack.c.h.b16 %v1140
      %v2043 = vunpack.c.l.b16 %v1141
      %v2044 = vunpack.c.h.b16 %v1141
      %v2045 = vunpack.c.l.b16 %v1142
      %v2046 = vunpack.c.h.b16 %v1142
      %v2047 = vunpack.c.l.b16 %v1143
      %v2048 = vunpack.c.h.b16 %v1143
      %v2049 = vunpack.c.l.b16 %v1144
      %v2050 = vunpack.c.h.b16 %v1144
      %v2051 = vunpack.c.l.b16 %v1145
      %v2052 = vunpack.c.h.b16 %v1145
      %v2053 = vunpack.c.l.b16 %v1146
      %v2054 = vunpack.c.h.b16 %v1146
      %v2055 = vunpack.c.l.b16 %v1147
      %v2056 = vunpack.c.h.b16 %v1147
      %v2057 = vunpack.c.l.b16 %v1148
      %v2058 = vunpack.c.h.b16 %v1148
      %v2059 = vunpack.c.l.b16 %v1149
      %v2060 = vunpack.c.h.b16 %v1149
      %v2061 = vunpack.c.l.b16 %v1150
      %v2062 = vunpack.c.h.b16 %v1150
      %v2063 = vunpack.c.l.b16 %v1151
      %v2064 = vunpack.c.h.b16 %v1151
      %v2065 = vunpack.c.l.b16 %v1152
      %v2066 = vunpack.c.h.b16 %v1152
      %v2067 = vunpack.c.l.b16 %v1153
      %v2068 = vunpack.c.h.b16 %v1153
      %v2069 = vunpack.c.l.b16 %v1154
      %v2070 = vunpack.c.h.b16 %v1154
      %v2071 = vunpack.c.l.b16 %v1155
      %v2072 = vunpack.c.h.b16 %v1155
      %v2073 = vunpack.c.l.b16 %v1156
      %v2074 = vunpack.c.h.b16 %v1156
      %v2075 = vunpack.c.l.b16 %v1157
      %v2076 = vunpack.c.h.b16 %v1157
      %v2077 = vunpack.c.l.b16 %v1158
      %v2078 = vunpack.c.h.b16 %v1158
      %v2079 = vunpack.c.l.b16 %v1159
      %v2080 = vunpack.c.h.b16 %v1159
      %v2081 = vunpack.c.l.b16 %v1160
      %v2082 = vunpack.c.h.b16 %v1160
      %v2083 = vunpack.c.l.b16 %v1161
      %v2084 = vunpack.c.h.b16 %v1161
      %v2085 = vunpack.c.l.b16 %v1162
      %v2086 = vunpack.c.h.b16 %v1162
      %v2087 = vunpack.c.l.b16 %v1163
      %v2088 = vunpack.c.h.b16 %v1163
      %v2089 = vunpack.c.l.b16 %v1164
      %v2090 = vunpack.c.h.b16 %v1164
      %v2091 = vunpack.c.l.b16 %v1165
      %v2092 = vunpack.c.h.b16 %v1165
      %v2093 = vunpack.c.l.b16 %v1166
      %v2094 = vunpack.c.h.b16 %v1166
      %v2095 = vunpack.c.l.b16 %v1167
      %v2096 = vunpack.c.h.b16 %v1167
      %v2097 = vunpack.c.l.b16 %v1168
      %v2098 = vunpack.c.h.b16 %v1168
      %v2099 = vunpack.c.l.b16 %v1169
      %v2100 = vunpack.c.h.b16 %v1169
      %v2101 = vunpack.c.l.b16 %v1170
      %v2102 = vunpack.c.h.b16 %v1170
      %v2103 = vunpack.c.l.b16 %v1171
      %v2104 = vunpack.c.h.b16 %v1171
      %v2105 = vunpack.c.l.b16 %v1172
      %v2106 = vunpack.c.h.b16 %v1172
      %v2107 = vunpack.c.l.b16 %v1173
      %v2108 = vunpack.c.h.b16 %v1173
      %v2109 = vunpack.c.l.b16 %v1174
      %v2110 = vunpack.c.h.b16 %v1174
      %v2111 = vunpack.c.l.b16 %v1175
      %v2112 = vunpack.c.h.b16 %v1175
      %v2113 = vunpack.c.l.b16 %v1176
      %v2114 = vunpack.c.h.b16 %v1176
      %v2115 = vunpack.c.l.b16 %v1177
      %v2116 = vunpack.c.h.b16 %v1177
      %v2117 = vunpack.c.l.b16 %v1178
      %v2118 = vunpack.c.h.b16 %v1178
      %v2119 = vunpack.c.l.b16 %v1179
      %v2120 = vunpack.c.h.b16 %v1179
      %v2121 = vunpack.c.l.b16 %v1180
      %v2122 = vunpack.c.h.b16 %v1180
      %v2123 = vunpack.c.l.b16 %v1181
      %v2124 = vunpack.c.h.b16 %v1181
      %v2125 = vunpack.c.l.b16 %v1182
      %v2126 = vunpack.c.h.b16 %v1182
      %v2127 = vunpack.c.l.b16 %v1183
      %v2128 = vunpack.c.h.b16 %v1183
      %v2129 = vunpack.c.l.b16 %v1184
      %v2130 = vunpack.c.h.b16 %v1184
      %v2131 = vunpack.c.l.b16 %v1185
      %v2132 = vunpack.c.h.b16 %v1185
      %v2133 = vunpack.c.l.b16 %v1186
      %v2134 = vunpack.c.h.b16 %v1186
      %v2135 = vunpack.c.l.b16 %v1187
      %v2136 = vunpack.c.h.b16 %v1187
      %v2137 = vunpack.c.l.b16 %v1188
      %v2138 = vunpack.c.h.b16 %v1188
      %v2139 = vunpack.c.l.b16 %v1189
      %v2140 = vunpack.c.h.b16 %v1189
      %v2141 = vunpack.c.l.b16 %v1190
      %v2142 = vunpack.c.h.b16 %v1190
      %v2143 = vunpack.c.l.b16 %v1191
      %v2144 = vunpack.c.h.b16 %v1191
      %v2145 = vunpack.c.l.b16 %v1192
      %v2146 = vunpack.c.h.b16 %v1192
      %v2147 = vunpack.c.l.b16 %v1193
      %v2148 = vunpack.c.h.b16 %v1193
      %v2149 = vunpack.c.l.b16 %v1194
      %v2150 = vunpack.c.h.b16 %v1194
      %v2151 = vunpack.c.l.b16 %v1195
      %v2152 = vunpack.c.h.b16 %v1195
      %v2153 = vunpack.c.l.b16 %v1196
      %v2154 = vunpack.c.h.b16 %v1196
      %v2155 = vunpack.c.l.b16 %v1197
      %v2156 = vunpack.c.h.b16 %v1197
      %v2157 = vunpack.c.l.b16 %v1198
      %v2158 = vunpack.c.h.b16 %v1198
      %v2159 = vunpack.c.l.b16 %v1199
      %v2160 = vunpack.c.h.b16 %v1199
      %v2161 = vunpack.c.l.b16 %v1200
      %v2162 = vunpack.c.h.b16 %v1200
      %v2163 = vunpack.c.l.b16 %v1201
      %v2164 = vunpack.c.h.b16 %v1201
      %v2165 = vunpack.c.l.b16 %v1202
      %v2166 = vunpack.c.h.b16 %v1202
      %v2167 = vunpack.c.l.b16 %v1203
      %v2168 = vunpack.c.h.b16 %v1203
      %v2169 = vunpack.c.l.b16 %v1204
      %v2170 = vunpack.c.h.b16 %v1204
      %v2171 = vunpack.c.l.b16 %v1205
      %v2172 = vunpack.c.h.b16 %v1205
      %v2173 = vunpack.c.l.b16 %v1206
      %v2174 = vunpack.c.h.b16 %v1206
      %v2175 = vunpack.c.l.b16 %v1207
      %v2176 = vunpack.c.h.b16 %v1207
      %v2177 = vunpack.c.l.b16 %v1208
      %v2178 = vunpack.c.h.b16 %v1208
      %v2179 = vunpack.c.l.b16 %v1209
      %v2180 = vunpack.c.h.b16 %v1209
      %v2181 = vunpack.c.l.b16 %v1210
      %v2182 = vunpack.c.h.b16 %v1210
      %v2183 = vunpack.c.l.b16 %v1211
      %v2184 = vunpack.c.h.b16 %v1211
      %v2185 = vunpack.c.l.b16 %v1212
      %v2186 = vunpack.c.h.b16 %v1212
      %v2187 = vunpack.c.l.b16 %v1213
      %v2188 = vunpack.c.h.b16 %v1213
      %v2189 = vunpack.c.l.b16 %v1214
      %v2190 = vunpack.c.h.b16 %v1214
      %v2191 = vunpack.c.l.b16 %v1215
      %v2192 = vunpack.c.h.b16 %v1215
      %v2193 = vunpack.c.l.b16 %v1216
      %v2194 = vunpack.c.h.b16 %v1216
      %v2195 = vunpack.c.l.b16 %v1217
      %v2196 = vunpack.c.h.b16 %v1217
      %v2197 = vunpack.c.l.b16 %v1218
      %v2198 = vunpack.c.h.b16 %v1218
      %v2199 = vunpack.c.l.b16 %v1219
      %v2200 = vunpack.c.h.b16 %v1219
      %v2201 = vunpack.c.l.b16 %v1220
      %v2202 = vunpack.c.h.b16 %v1220
      %v2203 = vunpack.c.l.b16 %v1221
      %v2204 = vunpack.c.h.b16 %v1221
      %v2205 = vunpack.c.l.b16 %v1222
      %v2206 = vunpack.c.h.b16 %v1222
      %v2207 = vunpack.c.l.b16 %v1223
      %v2208 = vunpack.c.h.b16 %v1223
      %v2209 = vunpack.c.l.b16 %v1224
      %v2210 = vunpack.c.h.b16 %v1224
      %v2211 = vunpack.c.l.b16 %v1225
      %v2212 = vunpack.c.h.b16 %v1225
      %v2213 = vunpack.c.l.b16 %v1226
      %v2214 = vunpack.c.h.b16 %v1226
      %v2215 = vunpack.c.l.b16 %v1227
      %v2216 = vunpack.c.h.b16 %v1227
      %v2217 = vunpack.c.l.b16 %v1228
      %v2218 = vunpack.c.h.b16 %v1228
      %v2219 = vunpack.c.l.b16 %v1229
      %v2220 = vunpack.c.h.b16 %v1229
      %v2221 = vunpack.c.l.b16 %v1230
      %v2222 = vunpack.c.h.b16 %v1230
      %v2223 = vunpack.c.l.b16 %v1231
      %v2224 = vunpack.c.h.b16 %v1231
      %v2225 = vunpack.c.l.b16 %v1232
      %v2226 = vunpack.c.h.b16 %v1232
      %v2227 = vunpack.c.l.b16 %v1233
      %v2228 = vunpack.c.h.b16 %v1233
      %v2229 = vunpack.c.l.b16 %v1234
      %v2230 = vunpack.c.h.b16 %v1234
      %v2231 = vunpack.c.l.b16 %v1235
      %v2232 = vunpack.c.h.b16 %v1235
      %v2233 = vunpack.c.l.b16 %v1236
      %v2234 = vunpack.c.h.b16 %v1236
      %v2235 = vunpack.c.l.b16 %v1237
      %v2236 = vunpack.c.h.b16 %v1237
      %v2237 = vunpack.c.l.b16 %v1238
      %v2238 = vunpack.c.h.b16 %v1238
      %v2239 = vunpack.c.l.b16 %v1239
      %v2240 = vunpack.c.h.b16 %v1239
      %v2241 = vunpack.c.l.b16 %v1240
      %v2242 = vunpack.c.h.b16 %v1240
      %v2243 = vunpack.c.l.b16 %v1241
      %v2244 = vunpack.c.h.b16 %v1241
      %v2245 = vunpack.c.l.b16 %v1242
      %v2246 = vunpack.c.h.b16 %v1242
      %v2247 = vunpack.c.l.b16 %v1243
      %v2248 = vunpack.c.h.b16 %v1243
      %v2249 = vunpack.c.l.b16 %v1244
      %v2250 = vunpack.c.h.b16 %v1244
      %v2251 = vunpack.c.l.b16 %v1245
      %v2252 = vunpack.c.h.b16 %v1245
      %v2253 = vunpack.c.l.b16 %v1246
      %v2254 = vunpack.c.h.b16 %v1246
      %v2255 = vunpack.c.l.b16 %v1247
      %v2256 = vunpack.c.h.b16 %v1247
      %v2257 = vunpack.c.l.b16 %v1248
      %v2258 = vunpack.c.h.b16 %v1248
      %v2259 = vunpack.c.l.b16 %v1249
      %v2260 = vunpack.c.h.b16 %v1249
      %v2261 = vunpack.c.l.b16 %v1250
      %v2262 = vunpack.c.h.b16 %v1250
      %v2263 = vunpack.c.l.b16 %v1251
      %v2264 = vunpack.c.h.b16 %v1251
      %v2265 = vunpack.c.l.b16 %v1252
      %v2266 = vunpack.c.h.b16 %v1252
      %v2267 = vunpack.c.l.b16 %v1253
      %v2268 = vunpack.c.h.b16 %v1253
      %v2269 = vunpack.c.l.b16 %v1254
      %v2270 = vunpack.c.h.b16 %v1254
      %v2271 = vunpack.c.l.b16 %v1255
      %v2272 = vunpack.c.h.b16 %v1255
      %v2273 = vunpack.c.l.b16 %v1256
      %v2274 = vunpack.c.h.b16 %v1256
      %v2275 = vunpack.c.l.b16 %v1257
      %v2276 = vunpack.c.h.b16 %v1257
      %v2277 = vunpack.c.l.b16 %v1258
      %v2278 = vunpack.c.h.b16 %v1258
      %v2279 = vunpack.c.l.b16 %v1259
      %v2280 = vunpack.c.h.b16 %v1259
      %v2281 = vunpack.c.l.b16 %v1260
      %v2282 = vunpack.c.h.b16 %v1260
      %v2283 = vunpack.c.l.b16 %v1261
      %v2284 = vunpack.c.h.b16 %v1261
      %v2285 = vunpack.c.l.b16 %v1262
      %v2286 = vunpack.c.h.b16 %v1262
      %v2287 = vunpack.c.l.b16 %v1263
      %v2288 = vunpack.c.h.b16 %v1263
      %v2289 = vunpack.c.l.b16 %v1264
      %v2290 = vunpack.c.h.b16 %v1264
      %v2291 = vunpack.c.l.b16 %v1265
      %v2292 = vunpack.c.h.b16 %v1265
      %v2293 = vunpack.c.l.b16 %v1266
      %v2294 = vunpack.c.h.b16 %v1266
      %v2295 = vunpack.c.l.b16 %v1267
      %v2296 = vunpack.c.h.b16 %v1267
      %v2297 = vunpack.c.l.b16 %v1268
      %v2298 = vunpack.c.h.b16 %v1268
      %v2299 = vunpack.c.l.b16 %v1269
      %v2300 = vunpack.c.h.b16 %v1269
      %v2301 = vunpack.c.l.b16 %v1270
      %v2302 = vunpack.c.h.b16 %v1270
      %v2303 = vunpack.c.l.b16 %v1271
      %v2304 = vunpack.c.h.b16 %v1271
      %v2305 = vunpack.c.l.b16 %v1272
      %v2306 = vunpack.c.h.b16 %v1272
      %v2307 = vunpack.c.l.b16 %v1273
      %v2308 = vunpack.c.h.b16 %v1273
      %v2309 = vunpack.c.l.b16 %v1274
      %v2310 = vunpack.c.h.b16 %v1274
      %v2311 = vunpack.c.l.b16 %v1275
      %v2312 = vunpack.c.h.b16 %v1275
      %v2313 = vunpack.c.l.b16 %v1276
      %v2314 = vunpack.c.h.b16 %v1276
      %v2315 = vunpack.c.l.b16 %v1277
      %v2316 = vunpack.c.h.b16 %v1277
      %v2317 = vunpack.c.l.b16 %v1278
      %v2318 = vunpack.c.h.b16 %v1278
      %v2319 = vunpack.c.l.b16 %v1279
      %v2320 = vunpack.c.h.b16 %v1279
      %v2321 = vunpack.c.l.b16 %v1280
      %v2322 = vunpack.c.h.b16 %v1280
      %v2323 = vunpack.c.l.b16 %v1281
      %v2324 = vunpack.c.h.b16 %v1281
      %v2325 = vunpack.c.l.b16 %v1282
      %v2326 = vunpack.c.h.b16 %v1282
      %v2327 = vunpack.c.l.b16 %v1283
      %v2328 = vunpack.c.h.b16 %v1283
      %v2329 = vunpack.c.l.b16 %v1284
      %v2330 = vunpack.c.h.b16 %v1284
      %v2331 = vunpack.c.l.b16 %v1285
      %v2332 = vunpack.c.h.b16 %v1285
      %v2333 = vunpack.c.l.b16 %v1286
      %v2334 = vunpack.c.h.b16 %v1286
      %v2335 = vunpack.c.l.b16 %v1287
      %v2336 = vunpack.c.h.b16 %v1287
      %v2337 = vunpack.c.l.b16 %v1288
      %v2338 = vunpack.c.h.b16 %v1288
      %v2339 = vunpack.c.l.b16 %v1289
      %v2340 = vunpack.c.h.b16 %v1289
      %v2341 = vunpack.c.l.b16 %v1290
      %v2342 = vunpack.c.h.b16 %v1290
      %v2343 = vunpack.c.l.b16 %v1291
      %v2344 = vunpack.c.h.b16 %v1291
      %v2345 = vunpack.c.l.b16 %v1292
      %v2346 = vunpack.c.h.b16 %v1292
      %v2347 = vunpack.c.l.b16 %v1293
      %v2348 = vunpack.c.h.b16 %v1293
      %v2349 = vunpack.c.l.b16 %v1294
      %v2350 = vunpack.c.h.b16 %v1294
      %v2351 = vunpack.c.l.b16 %v1295
      %v2352 = vunpack.c.h.b16 %v1295
      %v2353 = vunpack.c.l.b16 %v1296
      %v2354 = vunpack.c.h.b16 %v1296
      %v2355 = vunpack.c.l.b16 %v1297
      %v2356 = vunpack.c.h.b16 %v1297
      %v2357 = vunpack.c.l.b16 %v1298
      %v2358 = vunpack.c.h.b16 %v1298
      %v2359 = vunpack.c.l.b16 %v1299
      %v2360 = vunpack.c.h.b16 %v1299
      %v2361 = vunpack.c.l.b16 %v1300
      %v2362 = vunpack.c.h.b16 %v1300
      %v2363 = vunpack.c.l.b16 %v1301
      %v2364 = vunpack.c.h.b16 %v1301
      %v2365 = vunpack.c.l.b16 %v1302
      %v2366 = vunpack.c.h.b16 %v1302
      %v2367 = vunpack.c.l.b16 %v1303
      %v2368 = vunpack.c.h.b16 %v1303
      %v2369 = vunpack.c.l.b16 %v1304
      %v2370 = vunpack.c.h.b16 %v1304
      %v2371 = vunpack.c.l.b16 %v1305
      %v2372 = vunpack.c.h.b16 %v1305
      %v2373 = vunpack.c.l.b16 %v1306
      %v2374 = vunpack.c.h.b16 %v1306
      %v2375 = vunpack.c.l.b16 %v1307
      %v2376 = vunpack.c.h.b16 %v1307
      %v2377 = vunpack.c.l.b16 %v1308
      %v2378 = vunpack.c.h.b16 %v1308
      %v2379 = vunpack.c.l.b16 %v1309
      %v2380 = vunpack.c.h.b16 %v1309
      %v2381 = vunpack.c.l.b16 %v1310
      %v2382 = vunpack.c.h.b16 %v1310
      %v2383 = vunpack.c.l.b16 %v1311
      %v2384 = vunpack.c.h.b16 %v1311
      %v2385 = vunpack.c.l.b16 %v1312
      %v2386 = vunpack.c.h.b16 %v1312
      %v2387 = vunpack.c.l.b16 %v1313
      %v2388 = vunpack.c.h.b16 %v1313
      %v2389 = vunpack.c.l.b16 %v1314
      %v2390 = vunpack.c.h.b16 %v1314
      %v2391 = vunpack.c.l.b16 %v1315
      %v2392 = vunpack.c.h.b16 %v1315
      %v2393 = vunpack.c.l.b16 %v1316
      %v2394 = vunpack.c.h.b16 %v1316
      %v2395 = vunpack.c.l.b16 %v1317
      %v2396 = vunpack.c.h.b16 %v1317
      %v2397 = vunpack.c.l.b16 %v1318
      %v2398 = vunpack.c.h.b16 %v1318
      %v2399 = vunpack.c.l.b16 %v1319
      %v2400 = vunpack.c.h.b16 %v1319
      %v2401 = vunpack.c.l.b16 %v1320
      %v2402 = vunpack.c.h.b16 %v1320
      %v2403 = vunpack.c.l.b16 %v1321
      %v2404 = vunpack.c.h.b16 %v1321
      %v2405 = vunpack.c.l.b16 %v1322
      %v2406 = vunpack.c.h.b16 %v1322
      %v2407 = vunpack.c.l.b16 %v1323
      %v2408 = vunpack.c.h.b16 %v1323
      %v2409 = vunpack.c.l.b16 %v1324
      %v2410 = vunpack.c.h.b16 %v1324
      %v2411 = vunpack.c.l.b16 %v1325
      %v2412 = vunpack.c.h.b16 %v1325
      %v2413 = vunpack.c.l.b16 %v1326
      %v2414 = vunpack.c.h.b16 %v1326
      %v2415 = vunpack.c.l.b16 %v1327
      %v2416 = vunpack.c.h.b16 %v1327
      %v2417 = vunpack.c.l.b16 %v1328
      %v2418 = vunpack.c.h.b16 %v1328
      %v2419 = vunpack.c.l.b16 %v1329
      %v2420 = vunpack.c.h.b16 %v1329
      %v2421 = vunpack.c.l.b16 %v1330
      %v2422 = vunpack.c.h.b16 %v1330
      %v2423 = vunpack.c.l.b16 %v1331
      %v2424 = vunpack.c.h.b16 %v1331
      %v2425 = vunpack.c.l.b16 %v1332
      %v2426 = vunpack.c.h.b16 %v1332
      %v2427 = vunpack.c.l.b16 %v1333
      %v2428 = vunpack.c.h.b16 %v1333
      %v2429 = vunpack.c.l.b16 %v1334
      %v2430 = vunpack.c.h.b16 %v1334
      %v2431 = vunpack.c.l.b16 %v1335
      %v2432 = vunpack.c.h.b16 %v1335
      %v2433 = vunpack.c.l.b16 %v1336
      %v2434 = vunpack.c.h.b16 %v1336
      %v2435 = vunpack.c.l.b16 %v1337
      %v2436 = vunpack.c.h.b16 %v1337
      %v2437 = vunpack.c.l.b16 %v1338
      %v2438 = vunpack.c.h.b16 %v1338
      %v2439 = vunpack.c.l.b16 %v1339
      %v2440 = vunpack.c.h.b16 %v1339
      %v2441 = vunpack.c.l.b16 %v1340
      %v2442 = vunpack.c.h.b16 %v1340
      %v2443 = vunpack.c.l.b16 %v1341
      %v2444 = vunpack.c.h.b16 %v1341
      %v2445 = vunpack.c.l.b16 %v1342
      %v2446 = vunpack.c.h.b16 %v1342
      %v2447 = vunpack.c.l.b16 %v1343
      %v2448 = vunpack.c.h.b16 %v1343
      %v2449 = vunpack.c.l.b16 %v1344
      %v2450 = vunpack.c.h.b16 %v1344
      %v2451 = vunpack.c.l.b16 %v1345
      %v2452 = vunpack.c.h.b16 %v1345
      %v2453 = vunpack.c.l.b16 %v1346
      %v2454 = vunpack.c.h.b16 %v1346
      %v2455 = vunpack.c.l.b16 %v1347
      %v2456 = vunpack.c.h.b16 %v1347
      %v2457 = vunpack.c.l.b16 %v1348
      %v2458 = vunpack.c.h.b16 %v1348
      %v2459 = vunpack.c.l.b16 %v1349
      %v2460 = vunpack.c.h.b16 %v1349
      %v2461 = vunpack.c.l.b16 %v1350
      %v2462 = vunpack.c.h.b16 %v1350
      %v2463 = vunpack.c.l.b16 %v1351
      %v2464 = vunpack.c.h.b16 %v1351
      %v2465 = vunpack.c.l.b16 %v1352
      %v2466 = vunpack.c.h.b16 %v1352
      %v2467 = vunpack.c.l.b16 %v1353
      %v2468 = vunpack.c.h.b16 %v1353
      %v2469 = vunpack.c.l.b16 %v1354
      %v2470 = vunpack.c.h.b16 %v1354
      %v2471 = vunpack.c.l.b16 %v1355
      %v2472 = vunpack.c.h.b16 %v1355
      %v2473 = vunpack.c.l.b16 %v1356
      %v2474 = vunpack.c.h.b16 %v1356
      %v2475 = vunpack.c.l.b16 %v1357
      %v2476 = vunpack.c.h.b16 %v1357
      %v2477 = vunpack.c.l.b16 %v1358
      %v2478 = vunpack.c.h.b16 %v1358
      %v2479 = vunpack.c.l.b16 %v1359
      %v2480 = vunpack.c.h.b16 %v1359
      %v2481 = vunpack.c.l.b16 %v1360
      %v2482 = vunpack.c.h.b16 %v1360
      %v2483 = vunpack.c.l.b16 %v1361
      %v2484 = vunpack.c.h.b16 %v1361
      %v2485 = vunpack.c.l.b16 %v1362
      %v2486 = vunpack.c.h.b16 %v1362
      %v2487 = vunpack.c.l.b16 %v1363
      %v2488 = vunpack.c.h.b16 %v1363
      %v2489 = vunpack.c.l.b16 %v1364
      %v2490 = vunpack.c.h.b16 %v1364
      %v2491 = vunpack.c.l.b16 %v1365
      %v2492 = vunpack.c.h.b16 %v1365
      %v2493 = vunpack.c.l.b16 %v1366
      %v2494 = vunpack.c.h.b16 %v1366
      %v2495 = vunpack.c.l.b16 %v1367
      %v2496 = vunpack.c.h.b16 %v1367
      %v2497 = vunpack.c.l.b16 %v1368
      %v2498 = vunpack.c.h.b16 %v1368
      %v2499 = vunpack.c.l.b16 %v1369
      %v2500 = vunpack.c.h.b16 %v1369
      %v2501 = vunpack.c.l.b16 %v1370
      %v2502 = vunpack.c.h.b16 %v1370
      %v2503 = vunpack.c.l.b16 %v1371
      %v2504 = vunpack.c.h.b16 %v1371
      %v2505 = vunpack.c.l.b16 %v1372
      %v2506 = vunpack.c.h.b16 %v1372
      %v2507 = vunpack.c.l.b16 %v1373
      %v2508 = vunpack.c.h.b16 %v1373
      %v2509 = vunpack.c.l.b16 %v1374
      %v2510 = vunpack.c.h.b16 %v1374
      %v2511 = vunpack.c.l.b16 %v1375
      %v2512 = vunpack.c.h.b16 %v1375
      %v2513 = vunpack.c.l.b16 %v1376
      %v2514 = vunpack.c.h.b16 %v1376
      %v2515 = vunpack.c.l.b16 %v1377
      %v2516 = vunpack.c.h.b16 %v1377
      %v2517 = vunpack.c.l.b16 %v1378
      %v2518 = vunpack.c.h.b16 %v1378
      %v2519 = vunpack.c.l.b16 %v1379
      %v2520 = vunpack.c.h.b16 %v1379
      %v2521 = vunpack.c.l.b16 %v1380
      %v2522 = vunpack.c.h.b16 %v1380
      %v2523 = vunpack.c.l.b16 %v1381
      %v2524 = vunpack.c.h.b16 %v1381
      %v2525 = vunpack.c.l.b16 %v1382
      %v2526 = vunpack.c.h.b16 %v1382
      %v2527 = vunpack.c.l.b16 %v1383
      %v2528 = vunpack.c.h.b16 %v1383
      %v2529 = vunpack.c.l.b16 %v1384
      %v2530 = vunpack.c.h.b16 %v1384
      %v2531 = vunpack.c.l.b16 %v1385
      %v2532 = vunpack.c.h.b16 %v1385
      %v2533 = vunpack.c.l.b16 %v1386
      %v2534 = vunpack.c.h.b16 %v1386
      %v2535 = vunpack.c.l.b16 %v1387
      %v2536 = vunpack.c.h.b16 %v1387
      %v2537 = vunpack.c.l.b16 %v1388
      %v2538 = vunpack.c.h.b16 %v1388
      %v2539 = vunpack.c.l.b16 %v1389
      %v2540 = vunpack.c.h.b16 %v1389
      %v2541 = vunpack.c.l.b16 %v1390
      %v2542 = vunpack.c.h.b16 %v1390
      %v2543 = vunpack.c.l.b16 %v1391
      %v2544 = vunpack.c.h.b16 %v1391
      %v2545 = vunpack.c.l.b16 %v1392
      %v2546 = vunpack.c.h.b16 %v1392
      %v2547 = vunpack.c.l.b16 %v1393
      %v2548 = vunpack.c.h.b16 %v1393
      %v2549 = vunpack.c.l.b16 %v1394
      %v2550 = vunpack.c.h.b16 %v1394
      %v2551 = vunpack.c.l.b16 %v1395
      %v2552 = vunpack.c.h.b16 %v1395
      %v2553 = vunpack.c.l.b16 %v1396
      %v2554 = vunpack.c.h.b16 %v1396
      %v2555 = vunpack.c.l.b16 %v1397
      %v2556 = vunpack.c.h.b16 %v1397
      %v2557 = vunpack.c.l.b16 %v1398
      %v2558 = vunpack.c.h.b16 %v1398
      %v2559 = vunpack.c.l.b16 %v1399
      %v2560 = vunpack.c.h.b16 %v1399
      %v2561 = vunpack.c.l.b16 %v1400
      %v2562 = vunpack.c.h.b16 %v1400
      %v2563 = vunpack.c.l.b16 %v1401
      %v2564 = vunpack.c.h.b16 %v1401
      %v2565 = vunpack.c.l.b16 %v1402
      %v2566 = vunpack.c.h.b16 %v1402
      %v2567 = vunpack.c.l.b16 %v1403
      %v2568 = vunpack.c.h.b16 %v1403
      %v2569 = vunpack.c.l.b16 %v1404
      %v2570 = vunpack.c.h.b16 %v1404
      %v2571 = vunpack.c.l.b16 %v1405
      %v2572 = vunpack.c.h.b16 %v1405
      %v2573 = vunpack.c.l.b16 %v1406
      %v2574 = vunpack.c.h.b16 %v1406
      %v2575 = vunpack.c.l.b16 %v1407
      %v2576 = vunpack.c.h.b16 %v1407
      %v2577 = vunpack.c.l.b16 %v1408
      %v2578 = vunpack.c.h.b16 %v1408
      %v2579 = vunpack.c.l.b16 %v1409
      %v2580 = vunpack.c.h.b16 %v1409
      %v2581 = vunpack.c.l.b16 %v1410
      %v2582 = vunpack.c.h.b16 %v1410
      %v2583 = vunpack.c.l.b16 %v1411
      %v2584 = vunpack.c.h.b16 %v1411
      %v2585 = vunpack.c.l.b16 %v1412
      %v2586 = vunpack.c.h.b16 %v1412
      %v2587 = vunpack.c.l.b16 %v1413
      %v2588 = vunpack.c.h.b16 %v1413
      %v2589 = vunpack.c.l.b16 %v1414
      %v2590 = vunpack.c.h.b16 %v1414
      %v2591 = vunpack.c.l.b16 %v1415
      %v2592 = vunpack.c.h.b16 %v1415
      %v2593 = vunpack.c.l.b16 %v1416
      %v2594 = vunpack.c.h.b16 %v1416
      %v2595 = vunpack.c.l.b16 %v1417
      %v2596 = vunpack.c.h.b16 %v1417
      %v2597 = vunpack.c.l.b16 %v1418
      %v2598 = vunpack.c.h.b16 %v1418
      %v2599 = vunpack.c.l.b16 %v1419
      %v2600 = vunpack.c.h.b16 %v1419
      %v2601 = vunpack.c.l.b16 %v1420
      %v2602 = vunpack.c.h.b16 %v1420
      %v2603 = vunpack.c.l.b16 %v1421
      %v2604 = vunpack.c.h.b16 %v1421
      %v2605 = vunpack.c.l.b16 %v1422
      %v2606 = vunpack.c.h.b16 %v1422
      %v2607 = vunpack.c.l.b16 %v1423
      %v2608 = vunpack.c.h.b16 %v1423
      %v2609 = vunpack.c.l.b16 %v1424
      %v2610 = vunpack.c.h.b16 %v1424
      %v2611 = vunpack.c.l.b16 %v1425
      %v2612 = vunpack.c.h.b16 %v1425
      %v2613 = vunpack.c.l.b16 %v1426
      %v2614 = vunpack.c.h.b16 %v1426
      %v2615 = vunpack.c.l.b16 %v1427
      %v2616 = vunpack.c.h.b16 %v1427
      %v2617 = vunpack.c.l.b16 %v1428
      %v2618 = vunpack.c.h.b16 %v1428
      %v2619 = vunpack.c.l.b16 %v1429
      %v2620 = vunpack.c.h.b16 %v1429
      %v2621 = vunpack.c.l.b16 %v1430
      %v2622 = vunpack.c.h.b16 %v1430
      %v2623 = vunpack.c.l.b16 %v1431
      %v2624 = vunpack.c.h.b16 %v1431
      %v2625 = vunpack.c.l.b16 %v1432
      %v2626 = vunpack.c.h.b16 %v1432
      %v2627 = vunpack.c.l.b16 %v1433
      %v2628 = vunpack.c.h.b16 %v1433
      %v2629 = vunpack.c.l.b16 %v1434
      %v2630 = vunpack.c.h.b16 %v1434
      %v2631 = vunpack.c.l.b16 %v1435
      %v2632 = vunpack.c.h.b16 %v1435
      %v2633 = vunpack.c.l.b16 %v1436
      %v2634 = vunpack.c.h.b16 %v1436
      %v2635 = vunpack.c.l.b16 %v1437
      %v2636 = vunpack.c.h.b16 %v1437
      %v2637 = vunpack.c.l.b16 %v1438
      %v2638 = vunpack.c.h.b16 %v1438
      %v2639 = vunpack.c.l.b16 %v1439
      %v2640 = vunpack.c.h.b16 %v1439
      %v2641 = vunpack.c.l.b16 %v1440
      %v2642 = vunpack.c.h.b16 %v1440
      %v2643 = vunpack.c.l.b16 %v1441
      %v2644 = vunpack.c.h.b16 %v1441
      %v2645 = vunpack.c.l.b16 %v1442
      %v2646 = vunpack.c.h.b16 %v1442
      %v2647 = vpack.c.b16 %v1883, %v1879
      %v2648 = vpack.c.b16 %v1884, %v1880
      %v2649 = vpack.c.b16 %v1885, %v1881
      %v2650 = vpack.c.b16 %v1886, %v1882
      %v2651 = vpack.c.b16 %v1891, %v1887
      %v2652 = vpack.c.b16 %v1892, %v1888
      %v2653 = vpack.c.b16 %v1893, %v1889
      %v2654 = vpack.c.b16 %v1894, %v1890
      %v2655 = vpack.c.b16 %v1899, %v1895
      %v2656 = vpack.c.b16 %v1900, %v1896
      %v2657 = vpack.c.b16 %v1901, %v1897
      %v2658 = vpack.c.b16 %v1902, %v1898
      %v2659 = vpack.c.b16 %v1907, %v1903
      %v2660 = vpack.c.b16 %v1908, %v1904
      %v2661 = vpack.c.b16 %v1909, %v1905
      %v2662 = vpack.c.b16 %v1910, %v1906
      %v2663 = vpack.c.b16 %v1915, %v1911
      %v2664 = vpack.c.b16 %v1916, %v1912
      %v2665 = vpack.c.b16 %v1917, %v1913
      %v2666 = vpack.c.b16 %v1918, %v1914
      %v2667 = vpack.c.b16 %v1923, %v1919
      %v2668 = vpack.c.b16 %v1924, %v1920
      %v2669 = vpack.c.b16 %v1925, %v1921
      %v2670 = vpack.c.b16 %v1926, %v1922
      %v2671 = vpack.c.b16 %v1931, %v1927
      %v2672 = vpack.c.b16 %v1932, %v1928
      %v2673 = vpack.c.b16 %v1933, %v1929
      %v2674 = vpack.c.b16 %v1934, %v1930
      %v2675 = vpack.c.b16 %v1939, %v1935
      %v2676 = vpack.c.b16 %v1940, %v1936
      %v2677 = vpack.c.b16 %v1941, %v1937
      %v2678 = vpack.c.b16 %v1942, %v1938
      %v2679 = vpack.c.b16 %v1947, %v1943
      %v2680 = vpack.c.b16 %v1948, %v1944
      %v2681 = vpack.c.b16 %v1949, %v1945
      %v2682 = vpack.c.b16 %v1950, %v1946
      %v2683 = vpack.c.b16 %v1955, %v1951
      %v2684 = vpack.c.b16 %v1956, %v1952
      %v2685 = vpack.c.b16 %v1957, %v1953
      %v2686 = vpack.c.b16 %v1958, %v1954
      %v2687 = vpack.c.b16 %v1963, %v1959
      %v2688 = vpack.c.b16 %v1964, %v1960
      %v2689 = vpack.c.b16 %v1965, %v1961
      %v2690 = vpack.c.b16 %v1966, %v1962
      %v2691 = vpack.c.b16 %v1971, %v1967
      %v2692 = vpack.c.b16 %v1972, %v1968
      %v2693 = vpack.c.b16 %v1973, %v1969
      %v2694 = vpack.c.b16 %v1974, %v1970
      %v2695 = vpack.c.b16 %v1979, %v1975
      %v2696 = vpack.c.b16 %v1980, %v1976
      %v2697 = vpack.c.b16 %v1981, %v1977
      %v2698 = vpack.c.b16 %v1982, %v1978
      %v2699 = vpack.c.b16 %v1987, %v1983
      %v2700 = vpack.c.b16 %v1988, %v1984
      %v2701 = vpack.c.b16 %v1989, %v1985
      %v2702 = vpack.c.b16 %v1990, %v1986
      %v2703 = vpack.c.b16 %v1995, %v1991
      %v2704 = vpack.c.b16 %v1996, %v1992
      %v2705 = vpack.c.b16 %v1997, %v1993
      %v2706 = vpack.c.b16 %v1998, %v1994
      %v2707 = vpack.c.b16 %v2003, %v1999
      %v2708 = vpack.c.b16 %v2004, %v2000
      %v2709 = vpack.c.b16 %v2005, %v2001
      %v2710 = vpack.c.b16 %v2006, %v2002
      %v2711 = vpack.c.b16 %v2011, %v2007
      %v2712 = vpack.c.b16 %v2012, %v2008
      %v2713 = vpack.c.b16 %v2013, %v2009
      %v2714 = vpack.c.b16 %v2014, %v2010
      %v2715 = vpack.c.b16 %v2019, %v2015
      %v2716 = vpack.c.b16 %v2020, %v2016
      %v2717 = vpack.c.b16 %v2021, %v2017
      %v2718 = vpack.c.b16 %v2022, %v2018
      %v2719 = vpack.c.b16 %v2027, %v2023
      %v2720 = vpack.c.b16 %v2028, %v2024
      %v2721 = vpack.c.b16 %v2029, %v2025
      %v2722 = vpack.c.b16 %v2030, %v2026
      %v2723 = vpack.c.b16 %v2035, %v2031
      %v2724 = vpack.c.b16 %v2036, %v2032
      %v2725 = vpack.c.b16 %v2037, %v2033
      %v2726 = vpack.c.b16 %v2038, %v2034
      %v2727 = vpack.c.b16 %v2043, %v2039
      %v2728 = vpack.c.b16 %v2044, %v2040
      %v2729 = vpack.c.b16 %v2045, %v2041
      %v2730 = vpack.c.b16 %v2046, %v2042
      %v2731 = vpack.c.b16 %v2051, %v2047
      %v2732 = vpack.c.b16 %v2052, %v2048
      %v2733 = vpack.c.b16 %v2053, %v2049
      %v2734 = vpack.c.b16 %v2054, %v2050
      %v2735 = vpack.c.b16 %v2059, %v2055
      %v2736 = vpack.c.b16 %v2060, %v2056
      %v2737 = vpack.c.b16 %v2061, %v2057
      %v2738 = vpack.c.b16 %v2062, %v2058
      %v2739 = vpack.c.b16 %v2067, %v2063
      %v2740 = vpack.c.b16 %v2068, %v2064
      %v2741 = vpack.c.b16 %v2069, %v2065
      %v2742 = vpack.c.b16 %v2070, %v2066
      %v2743 = vpack.c.b16 %v2075, %v2071
      %v2744 = vpack.c.b16 %v2076, %v2072
      %v2745 = vpack.c.b16 %v2077, %v2073
      %v2746 = vpack.c.b16 %v2078, %v2074
      %v2747 = vpack.c.b16 %v2083, %v2079
      %v2748 = vpack.c.b16 %v2084, %v2080
      %v2749 = vpack.c.b16 %v2085, %v2081
      %v2750 = vpack.c.b16 %v2086, %v2082
      %v2751 = vpack.c.b16 %v2091, %v2087
      %v2752 = vpack.c.b16 %v2092, %v2088
      %v2753 = vpack.c.b16 %v2093, %v2089
      %v2754 = vpack.c.b16 %v2094, %v2090
      %v2755 = vpack.c.b16 %v2099, %v2095
      %v2756 = vpack.c.b16 %v2100, %v2096
      %v2757 = vpack.c.b16 %v2101, %v2097
      %v2758 = vpack.c.b16 %v2102, %v2098
      %v2759 = vpack.c.b16 %v2107, %v2103
      %v2760 = vpack.c.b16 %v2108, %v2104
      %v2761 = vpack.c.b16 %v2109, %v2105
      %v2762 = vpack.c.b16 %v2110, %v2106
      %v2763 = vpack.c.b16 %v2115, %v2111
      %v2764 = vpack.c.b16 %v2116, %v2112
      %v2765 = vpack.c.b16 %v2117, %v2113
      %v2766 = vpack.c.b16 %v2118, %v2114
      %v2767 = vpack.c.b16 %v2123, %v2119
      %v2768 = vpack.c.b16 %v2124, %v2120
      %v2769 = vpack.c.b16 %v2125, %v2121
      %v2770 = vpack.c.b16 %v2126, %v2122
      %v2771 = vpack.c.b16 %v2131, %v2127
      %v2772 = vpack.c.b16 %v2132, %v2128
      %v2773 = vpack.c.b16 %v2133, %v2129
      %v2774 = vpack.c.b16 %v2134, %v2130
      %v2775 = vpack.c.b16 %v2139, %v2135
      %v2776 = vpack.c.b16 %v2140, %v2136
      %v2777 = vpack.c.b16 %v2141, %v2137
      %v2778 = vpack.c.b16 %v2142, %v2138
      %v2779 = vpack.c.b16 %v2147, %v2143
      %v2780 = vpack.c.b16 %v2148, %v2144
      %v2781 = vpack.c.b16 %v2149, %v2145
      %v2782 = vpack.c.b16 %v2150, %v2146
      %v2783 = vpack.c.b16 %v2155, %v2151
      %v2784 = vpack.c.b16 %v2156, %v2152
      %v2785 = vpack.c.b16 %v2157, %v2153
      %v2786 = vpack.c.b16 %v2158, %v2154
      %v2787 = vpack.c.b16 %v2163, %v2159
      %v2788 = vpack.c.b16 %v2164, %v2160
      %v2789 = vpack.c.b16 %v2165, %v2161
      %v2790 = vpack.c.b16 %v2166, %v2162
      %v2791 = vpack.c.b16 %v2171, %v2167
      %v2792 = vpack.c.b16 %v2172, %v2168
      %v2793 = vpack.c.b16 %v2173, %v2169
      %v2794 = vpack.c.b16 %v2174, %v2170
      %v2795 = vpack.c.b16 %v2179, %v2175
      %v2796 = vpack.c.b16 %v2180, %v2176
      %v2797 = vpack.c.b16 %v2181, %v2177
      %v2798 = vpack.c.b16 %v2182, %v2178
      %v2799 = vpack.c.b16 %v2187, %v2183
      %v2800 = vpack.c.b16 %v2188, %v2184
      %v2801 = vpack.c.b16 %v2189, %v2185
      %v2802 = vpack.c.b16 %v2190, %v2186
      %v2803 = vpack.c.b16 %v2195, %v2191
      %v2804 = vpack.c.b16 %v2196, %v2192
      %v2805 = vpack.c.b16 %v2197, %v2193
      %v2806 = vpack.c.b16 %v2198, %v2194
      %v2807 = vpack.c.b16 %v2203, %v2199
      %v2808 = vpack.c.b16 %v2204, %v2200
      %v2809 = vpack.c.b16 %v2205, %v2201
      %v2810 = vpack.c.b16 %v2206, %v2202
      %v2811 = vpack.c.b16 %v2211, %v2207
      %v2812 = vpack.c.b16 %v2212, %v2208
      %v2813 = vpack.c.b16 %v2213, %v2209
      %v2814 = vpack.c.b16 %v2214, %v2210
      %v2815 = vpack.c.b16 %v2219, %v2215
      %v2816 = vpack.c.b16 %v2220, %v2216
      %v2817 = vpack.c.b16 %v2221, %v2217
      %v2818 = vpack.c.b16 %v2222, %v2218
      %v2819 = vpack.c.b16 %v2227, %v2223
      %v2820 = vpack.c.b16 %v2228, %v2224
      %v2821 = vpack.c.b16 %v2229, %v2225
      %v2822 = vpack.c.b16 %v2230, %v2226
      %v2823 = vpack.c.b16 %v2235, %v2231
      %v2824 = vpack.c.b16 %v2236, %v2232
      %v2825 = vpack.c.b16 %v2237, %v2233
      %v2826 = vpack.c.b16 %v2238, %v2234
      %v2827 = vpack.c.b16 %v2243, %v2239
      %v2828 = vpack.c.b16 %v2244, %v2240
      %v2829 = vpack.c.b16 %v2245, %v2241
      %v2830 = vpack.c.b16 %v2246, %v2242
      %v2831 = vpack.c.b16 %v2251, %v2247
      %v2832 = vpack.c.b16 %v2252, %v2248
      %v2833 = vpack.c.b16 %v2253, %v2249
      %v2834 = vpack.c.b16 %v2254, %v2250
      %v2835 = vpack.c.b16 %v2259, %v2255
      %v2836 = vpack.c.b16 %v2260, %v2256
      %v2837 = vpack.c.b16 %v2261, %v2257
      %v2838 = vpack.c.b16 %v2262, %v2258
      %v2839 = vpack.c.b16 %v2267, %v2263
      %v2840 = vpack.c.b16 %v2268, %v2264
      %v2841 = vpack.c.b16 %v2269, %v2265
      %v2842 = vpack.c.b16 %v2270, %v2266
      %v2843 = vpack.c.b16 %v2275, %v2271
      %v2844 = vpack.c.b16 %v2276, %v2272
      %v2845 = vpack.c.b16 %v2277, %v2273
      %v2846 = vpack.c.b16 %v2278, %v2274
      %v2847 = vpack.c.b16 %v2283, %v2279
      %v2848 = vpack.c.b16 %v2284, %v2280
      %v2849 = vpack.c.b16 %v2285, %v2281
      %v2850 = vpack.c.b16 %v2286, %v2282
      %v2851 = vpack.c.b16 %v2291, %v2287
      %v2852 = vpack.c.b16 %v2292, %v2288
      %v2853 = vpack.c.b16 %v2293, %v2289
      %v2854 = vpack.c.b16 %v2294, %v2290
      %v2855 = vpack.c.b16 %v2299, %v2295
      %v2856 = vpack.c.b16 %v2300, %v2296
      %v2857 = vpack.c.b16 %v2301, %v2297
      %v2858 = vpack.c.b16 %v2302, %v2298
      %v2859 = vpack.c.b16 %v2307, %v2303
      %v2860 = vpack.c.b16 %v2308, %v2304
      %v2861 = vpack.c.b16 %v2309, %v2305
      %v2862 = vpack.c.b16 %v2310, %v2306
      %v2863 = vpack.c.b16 %v2315, %v2311
      %v2864 = vpack.c.b16 %v2316, %v2312
      %v2865 = vpack.c.b16 %v2317, %v2313
      %v2866 = vpack.c.b16 %v2318, %v2314
      %v2867 = vpack.c.b16 %v2323, %v2319
      %v2868 = vpack.c.b16 %v2324, %v2320
      %v2869 = vpack.c.b16 %v2325, %v2321
      %v2870 = vpack.c.b16 %v2326, %v2322
      %v2871 = vpack.c.b16 %v2331, %v2327
      %v2872 = vpack.c.b16 %v2332, %v2328
      %v2873 = vpack.c.b16 %v2333, %v2329
      %v2874 = vpack.c.b16 %v2334, %v2330
      %v2875 = vpack.c.b16 %v2339, %v2335
      %v2876 = vpack.c.b16 %v2340, %v2336
      %v2877 = vpack.c.b16 %v2341, %v2337
      %v2878 = vpack.c.b16 %v2342, %v2338
      %v2879 = vpack.c.b16 %v2347, %v2343
      %v2880 = vpack.c.b16 %v2348, %v2344
      %v2881 = vpack.c.b16 %v2349, %v2345
      %v2882 = vpack.c.b16 %v2350, %v2346
      %v2883 = vpack.c.b16 %v2355, %v2351
      %v2884 = vpack.c.b16 %v2356, %v2352
      %v2885 = vpack.c.b16 %v2357, %v2353
      %v2886 = vpack.c.b16 %v2358, %v2354
      %v2887 = vpack.c.b16 %v2363, %v2359
      %v2888 = vpack.c.b16 %v2364, %v2360
      %v2889 = vpack.c.b16 %v2365, %v2361
      %v2890 = vpack.c.b16 %v2366, %v2362
      %v2891 = vpack.c.b16 %v2371, %v2367
      %v2892 = vpack.c.b16 %v2372, %v2368
      %v2893 = vpack.c.b16 %v2373, %v2369
      %v2894 = vpack.c.b16 %v2374, %v2370
      %v2895 = vpack.c.b16 %v2379, %v2375
      %v2896 = vpack.c.b16 %v2380, %v2376
      %v2897 = vpack.c.b16 %v2381, %v2377
      %v2898 = vpack.c.b16 %v2382, %v2378
      %v2899 = vpack.c.b16 %v2387, %v2383
      %v2900 = vpack.c.b16 %v2388, %v2384
      %v2901 = vpack.c.b16 %v2389, %v2385
      %v2902 = vpack.c.b16 %v2390, %v2386
      %v2903 = vpack.c.b16 %v2395, %v2391
      %v2904 = vpack.c.b16 %v2396, %v2392
      %v2905 = vpack.c.b16 %v2397, %v2393
      %v2906 = vpack.c.b16 %v2398, %v2394
      %v2907 = vpack.c.b16 %v2403, %v2399
      %v2908 = vpack.c.b16 %v2404, %v2400
      %v2909 = vpack.c.b16 %v2405, %v2401
      %v2910 = vpack.c.b16 %v2406, %v2402
      %v2911 = vpack.c.b16 %v2411, %v2407
      %v2912 = vpack.c.b16 %v2412, %v2408
      %v2913 = vpack.c.b16 %v2413, %v2409
      %v2914 = vpack.c.b16 %v2414, %v2410
      %v2915 = vpack.c.b16 %v2419, %v2415
      %v2916 = vpack.c.b16 %v2420, %v2416
      %v2917 = vpack.c.b16 %v2421, %v2417
      %v2918 = vpack.c.b16 %v2422, %v2418
      %v2919 = vpack.c.b16 %v2427, %v2423
      %v2920 = vpack.c.b16 %v2428, %v2424
      %v2921 = vpack.c.b16 %v2429, %v2425
      %v2922 = vpack.c.b16 %v2430, %v2426
      %v2923 = vpack.c.b16 %v2435, %v2431
      %v2924 = vpack.c.b16 %v2436, %v2432
      %v2925 = vpack.c.b16 %v2437, %v2433
      %v2926 = vpack.c.b16 %v2438, %v2434
      %v2927 = vpack.c.b16 %v2443, %v2439
      %v2928 = vpack.c.b16 %v2444, %v2440
      %v2929 = vpack.c.b16 %v2445, %v2441
      %v2930 = vpack.c.b16 %v2446, %v2442
      %v2931 = vpack.c.b16 %v2451, %v2447
      %v2932 = vpack.c.b16 %v2452, %v2448
      %v2933 = vpack.c.b16 %v2453, %v2449
      %v2934 = vpack.c.b16 %v2454, %v2450
      %v2935 = vpack.c.b16 %v2459, %v2455
      %v2936 = vpack.c.b16 %v2460, %v2456
      %v2937 = vpack.c.b16 %v2461, %v2457
      %v2938 = vpack.c.b16 %v2462, %v2458
      %v2939 = vpack.c.b16 %v2467, %v2463
      %v2940 = vpack.c.b16 %v2468, %v2464
      %v2941 = vpack.c.b16 %v2469, %v2465
      %v2942 = vpack.c.b16 %v2470, %v2466
      %v2943 = vpack.c.b16 %v2475, %v2471
      %v2944 = vpack.c.b16 %v2476, %v2472
      %v2945 = vpack.c.b16 %v2477, %v2473
      %v2946 = vpack.c.b16 %v2478, %v2474
      %v2947 = vpack.c.b16 %v2483, %v2479
      %v2948 = vpack.c.b16 %v2484, %v2480
      %v2949 = vpack.c.b16 %v2485, %v2481
      %v2950 = vpack.c.b16 %v2486, %v2482
      %v2951 = vpack.c.b16 %v2491, %v2487
      %v2952 = vpack.c.b16 %v2492, %v2488
      %v2953 = vpack.c.b16 %v2493, %v2489
      %v2954 = vpack.c.b16 %v2494, %v2490
      %v2955 = vpack.c.b16 %v2499, %v2495
      %v2956 = vpack.c.b16 %v2500, %v2496
      %v2957 = vpack.c.b16 %v2501, %v2497
      %v2958 = vpack.c.b16 %v2502, %v2498
      %v2959 = vpack.c.b16 %v2507, %v2503
      %v2960 = vpack.c.b16 %v2508, %v2504
      %v2961 = vpack.c.b16 %v2509, %v2505
      %v2962 = vpack.c.b16 %v2510, %v2506
      %v2963 = vpack.c.b16 %v2515, %v2511
      %v2964 = vpack.c.b16 %v2516, %v2512
      %v2965 = vpack.c.b16 %v2517, %v2513
      %v2966 = vpack.c.b16 %v2518, %v2514
      %v2967 = vpack.c.b16 %v2523, %v2519
      %v2968 = vpack.c.b16 %v2524, %v2520
      %v2969 = vpack.c.b16 %v2525, %v2521
      %v2970 = vpack.c.b16 %v2526, %v2522
      %v2971 = vpack.c.b16 %v2531, %v2527
      %v2972 = vpack.c.b16 %v2532, %v2528
      %v2973 = vpack.c.b16 %v2533, %v2529
      %v2974 = vpack.c.b16 %v2534, %v2530
      %v2975 = vpack.c.b16 %v2539, %v2535
      %v2976 = vpack.c.b16 %v2540, %v2536
      %v2977 = vpack.c.b16 %v2541, %v2537
      %v2978 = vpack.c.b16 %v2542, %v2538
      %v2979 = vpack.c.b16 %v2547, %v2543
      %v2980 = vpack.c.b16 %v2548, %v2544
      %v2981 = vpack.c.b16 %v2549, %v2545
      %v2982 = vpack.c.b16 %v2550, %v2546
      %v2983 = vpack.c.b16 %v2555, %v2551
      %v2984 = vpack.c.b16 %v2556, %v2552
      %v2985 = vpack.c.b16 %v2557, %v2553
      %v2986 = vpack.c.b16 %v2558, %v2554
      %v2987 = vpack.c.b16 %v2563, %v2559
      %v2988 = vpack.c.b16 %v2564, %v2560
      %v2989 = vpack.c.b16 %v2565, %v2561
      %v2990 = vpack.c.b16 %v2566, %v2562
      %v2991 = vpack.c.b16 %v2571, %v2567
      %v2992 = vpack.c.b16 %v2572, %v2568
      %v2993 = vpack.c.b16 %v2573, %v2569
      %v2994 = vpack.c.b16 %v2574, %v2570
      %v2995 = vpack.c.b16 %v2579, %v2575
      %v2996 = vpack.c.b16 %v2580, %v2576
      %v2997 = vpack.c.b16 %v2581, %v2577
      %v2998 = vpack.c.b16 %v2582, %v2578
      %v2999 = vpack.c.b16 %v2587, %v2583
      %v3000 = vpack.c.b16 %v2588, %v2584
      %v3001 = vpack.c.b16 %v2589, %v2585
      %v3002 = vpack.c.b16 %v2590, %v2586
      %v3003 = vpack.c.b16 %v2595, %v2591
      %v3004 = vpack.c.b16 %v2596, %v2592
      %v3005 = vpack.c.b16 %v2597, %v2593
      %v3006 = vpack.c.b16 %v2598, %v2594
      %v3007 = vpack.c.b16 %v2603, %v2599
      %v3008 = vpack.c.b16 %v2604, %v2600
      %v3009 = vpack.c.b16 %v2605, %v2601
      %v3010 = vpack.c.b16 %v2606, %v2602
      %v3011 = vpack.c.b16 %v2611, %v2607
      %v3012 = vpack.c.b16 %v2612, %v2608
      %v3013 = vpack.c.b16 %v2613, %v2609
      %v3014 = vpack.c.b16 %v2614, %v2610
      %v3015 = vpack.c.b16 %v2619, %v2615
      %v3016 = vpack.c.b16 %v2620, %v2616
      %v3017 = vpack.c.b16 %v2621, %v2617
      %v3018 = vpack.c.b16 %v2622, %v2618
      %v3019 = vpack.c.b16 %v2627, %v2623
      %v3020 = vpack.c.b16 %v2628, %v2624
      %v3021 = vpack.c.b16 %v2629, %v2625
      %v3022 = vpack.c.b16 %v2630, %v2626
      %v3023 = vpack.c.b16 %v2635, %v2631
      %v3024 = vpack.c.b16 %v2636, %v2632
      %v3025 = vpack.c.b16 %v2637, %v2633
      %v3026 = vpack.c.b16 %v2638, %v2634
      %v3027 = vpack.c.b16 %v2643, %v2639
      %v3028 = vpack.c.b16 %v2644, %v2640
      %v3029 = vpack.c.b16 %v2645, %v2641
      %v3030 = vpack.c.b16 %v2646, %v2642
      %3415 = vmatpush.bf16.msra.mxu0 %v2675
      %3416 = vmatpush.bf16.msra.mxu0 %v2671
      %3417 = vmatpush.bf16.msra.mxu0 %v2667
      %3418 = vmatpush.bf16.msra.mxu0 %v2663
      %3419 = vmatpush.bf16.msra.mxu0 %v2659
      %3420 = vmatpush.bf16.msra.mxu0 %v2655
      %3421 = vmatpush.bf16.msra.mxu0 %v2651
      %3422 = vmatpush.bf16.msra.mxu0 %v2647
      %3423 = vmatmul.bf16.gmra.mxu0 %v1471
      %v3424 = vpop.f32.mrf.mxu0
      %v3425 = vadd.f32 %v1445, %v3424
      %v3426 = vpop.f32.mrf.mxu0
      %3427 = vdwg.mxu0
      %3428 = vmatpush.bf16.msra.mxu0 %v2707
      %3429 = vmatpush.bf16.msra.mxu0 %v2703
      %3430 = vmatpush.bf16.msra.mxu0 %v2699
      %3431 = vmatpush.bf16.msra.mxu0 %v2695
      %3432 = vmatpush.bf16.msra.mxu0 %v2691
      %3433 = vmatpush.bf16.msra.mxu0 %v2687
      %3434 = vmatpush.bf16.msra.mxu0 %v2683
      %3435 = vmatpush.bf16.msra.mxu0 %v2679
      %3436 = vmatmul.bf16.gmra.mxu0 %v1472
      %v3437 = vpop.f32.mrf.mxu0
      %v3438 = vadd.f32 %v3425, %v3437
      %v3439 = vpop.f32.mrf.mxu0
      %3440 = vdwg.mxu0
      %3441 = vmatpush.bf16.msra.mxu0 %v2739
      %3442 = vmatpush.bf16.msra.mxu0 %v2735
      %3443 = vmatpush.bf16.msra.mxu0 %v2731
      %3444 = vmatpush.bf16.msra.mxu0 %v2727
      %3445 = vmatpush.bf16.msra.mxu0 %v2723
      %3446 = vmatpush.bf16.msra.mxu0 %v2719
      %3447 = vmatpush.bf16.msra.mxu0 %v2715
      %3448 = vmatpush.bf16.msra.mxu0 %v2711
      %3449 = vmatmul.bf16.gmra.mxu0 %v1473
      %v3450 = vpop.f32.mrf.mxu0
      %v3451 = vadd.f32 %v3438, %v3450
      %v3452 = vpop.f32.mrf.mxu0
      %3453 = vdwg.mxu0
      %3454 = vmatpush.bf16.msra.mxu0 %v2771
      %3455 = vmatpush.bf16.msra.mxu0 %v2767
      %3456 = vmatpush.bf16.msra.mxu0 %v2763
      %3457 = vmatpush.bf16.msra.mxu0 %v2759
      %3458 = vmatpush.bf16.msra.mxu0 %v2755
      %3459 = vmatpush.bf16.msra.mxu0 %v2751
      %3460 = vmatpush.bf16.msra.mxu0 %v2747
      %3461 = vmatpush.bf16.msra.mxu0 %v2743
      %3462 = vmatmul.bf16.gmra.mxu0 %v1474
      %v3463 = vpop.f32.mrf.mxu0
      %v3464 = vadd.f32 %v3451, %v3463
      %v3465 = vpop.f32.mrf.mxu0
      %3466 = vdwg.mxu0
      %3467 = vmatpush.bf16.msra.mxu0 %v2803
      %3468 = vmatpush.bf16.msra.mxu0 %v2799
      %3469 = vmatpush.bf16.msra.mxu0 %v2795
      %3470 = vmatpush.bf16.msra.mxu0 %v2791
      %3471 = vmatpush.bf16.msra.mxu0 %v2787
      %3472 = vmatpush.bf16.msra.mxu0 %v2783
      %3473 = vmatpush.bf16.msra.mxu0 %v2779
      %3474 = vmatpush.bf16.msra.mxu0 %v2775
      %3475 = vmatmul.bf16.gmra.mxu0 %v1475
      %v3476 = vpop.f32.mrf.mxu0
      %v3477 = vadd.f32 %v3464, %v3476
      %v3478 = vpop.f32.mrf.mxu0
      %3479 = vdwg.mxu0
      %3480 = vmatpush.bf16.msra.mxu0 %v2835
      %3481 = vmatpush.bf16.msra.mxu0 %v2831
      %3482 = vmatpush.bf16.msra.mxu0 %v2827
      %3483 = vmatpush.bf16.msra.mxu0 %v2823
      %3484 = vmatpush.bf16.msra.mxu0 %v2819
      %3485 = vmatpush.bf16.msra.mxu0 %v2815
      %3486 = vmatpush.bf16.msra.mxu0 %v2811
      %3487 = vmatpush.bf16.msra.mxu0 %v2807
      %3488 = vmatmul.bf16.gmra.mxu0 %v1476
      %v3489 = vpop.f32.mrf.mxu0
      %v3490 = vadd.f32 %v3477, %v3489
      %v3491 = vpop.f32.mrf.mxu0
      %3492 = vdwg.mxu0
      %3493 = vmatpush.bf16.msra.mxu0 %v2867
      %3494 = vmatpush.bf16.msra.mxu0 %v2863
      %3495 = vmatpush.bf16.msra.mxu0 %v2859
      %3496 = vmatpush.bf16.msra.mxu0 %v2855
      %3497 = vmatpush.bf16.msra.mxu0 %v2851
      %3498 = vmatpush.bf16.msra.mxu0 %v2847
      %3499 = vmatpush.bf16.msra.mxu0 %v2843
      %3500 = vmatpush.bf16.msra.mxu0 %v2839
      %3501 = vmatmul.bf16.gmra.mxu0 %v1477
      %v3502 = vpop.f32.mrf.mxu0
      %v3503 = vadd.f32 %v3490, %v3502
      %v3504 = vpop.f32.mrf.mxu0
      %3505 = vdwg.mxu0
      %3506 = vmatpush.bf16.msra.mxu0 %v2899
      %3507 = vmatpush.bf16.msra.mxu0 %v2895
      %3508 = vmatpush.bf16.msra.mxu0 %v2891
      %3509 = vmatpush.bf16.msra.mxu0 %v2887
      %3510 = vmatpush.bf16.msra.mxu0 %v2883
      %3511 = vmatpush.bf16.msra.mxu0 %v2879
      %3512 = vmatpush.bf16.msra.mxu0 %v2875
      %3513 = vmatpush.bf16.msra.mxu0 %v2871
      %3514 = vmatmul.bf16.gmra.mxu0 %v1478
      %v3515 = vpop.f32.mrf.mxu0
      %v3516 = vadd.f32 %v3503, %v3515
      %v3517 = vpop.f32.mrf.mxu0
      %3518 = vdwg.mxu0
      %3519 = vmatpush.bf16.msra.mxu0 %v2931
      %3520 = vmatpush.bf16.msra.mxu0 %v2927
      %3521 = vmatpush.bf16.msra.mxu0 %v2923
      %3522 = vmatpush.bf16.msra.mxu0 %v2919
      %3523 = vmatpush.bf16.msra.mxu0 %v2915
      %3524 = vmatpush.bf16.msra.mxu0 %v2911
      %3525 = vmatpush.bf16.msra.mxu0 %v2907
      %3526 = vmatpush.bf16.msra.mxu0 %v2903
      %3527 = vmatmul.bf16.gmra.mxu0 %v1479
      %v3528 = vpop.f32.mrf.mxu0
      %v3529 = vadd.f32 %v3516, %v3528
      %v3530 = vpop.f32.mrf.mxu0
      %3531 = vdwg.mxu0
      %3532 = vmatpush.bf16.msra.mxu0 %v2963
      %3533 = vmatpush.bf16.msra.mxu0 %v2959
      %3534 = vmatpush.bf16.msra.mxu0 %v2955
      %3535 = vmatpush.bf16.msra.mxu0 %v2951
      %3536 = vmatpush.bf16.msra.mxu0 %v2947
      %3537 = vmatpush.bf16.msra.mxu0 %v2943
      %3538 = vmatpush.bf16.msra.mxu0 %v2939
      %3539 = vmatpush.bf16.msra.mxu0 %v2935
      %3540 = vmatmul.bf16.gmra.mxu0 %v1480
      %v3541 = vpop.f32.mrf.mxu0
      %v3542 = vadd.f32 %v3529, %v3541
      %v3543 = vpop.f32.mrf.mxu0
      %3544 = vdwg.mxu0
      %3545 = vmatpush.bf16.msra.mxu0 %v2995
      %3546 = vmatpush.bf16.msra.mxu0 %v2991
      %3547 = vmatpush.bf16.msra.mxu0 %v2987
      %3548 = vmatpush.bf16.msra.mxu0 %v2983
      %3549 = vmatpush.bf16.msra.mxu0 %v2979
      %3550 = vmatpush.bf16.msra.mxu0 %v2975
      %3551 = vmatpush.bf16.msra.mxu0 %v2971
      %3552 = vmatpush.bf16.msra.mxu0 %v2967
      %3553 = vmatmul.bf16.gmra.mxu0 %v1481
      %v3554 = vpop.f32.mrf.mxu0
      %v3555 = vadd.f32 %v3542, %v3554
      %v3556 = vpop.f32.mrf.mxu0
      %3557 = vdwg.mxu0
      %3558 = vmatpush.bf16.msra.mxu0 %v3027
      %3559 = vmatpush.bf16.msra.mxu0 %v3023
      %3560 = vmatpush.bf16.msra.mxu0 %v3019
      %3561 = vmatpush.bf16.msra.mxu0 %v3015
      %3562 = vmatpush.bf16.msra.mxu0 %v3011
      %3563 = vmatpush.bf16.msra.mxu0 %v3007
      %3564 = vmatpush.bf16.msra.mxu0 %v3003
      %3565 = vmatpush.bf16.msra.mxu0 %v2999
      %3566 = vmatmul.bf16.gmra.mxu0 %v1482
      %v3567 = vpop.f32.mrf.mxu0
      %v3568 = vadd.f32 %v3555, %v3567
      %v3569 = vpop.f32.mrf.mxu0
      %3570 = vdwg.mxu0
      %3571 = vmatpush.bf16.msra.mxu0 %v2676
      %3572 = vmatpush.bf16.msra.mxu0 %v2672
      %3573 = vmatpush.bf16.msra.mxu0 %v2668
      %3574 = vmatpush.bf16.msra.mxu0 %v2664
      %3575 = vmatpush.bf16.msra.mxu0 %v2660
      %3576 = vmatpush.bf16.msra.mxu0 %v2656
      %3577 = vmatpush.bf16.msra.mxu0 %v2652
      %3578 = vmatpush.bf16.msra.mxu0 %v2648
      %3579 = vmatmul.bf16.gmra.mxu0 %v1471
      %v3580 = vpop.f32.mrf.mxu0
      %v3581 = vadd.f32 %v1446, %v3580
      %v3582 = vpop.f32.mrf.mxu0
      %3583 = vdwg.mxu0
      %3584 = vmatpush.bf16.msra.mxu0 %v2708
      %3585 = vmatpush.bf16.msra.mxu0 %v2704
      %3586 = vmatpush.bf16.msra.mxu0 %v2700
      %3587 = vmatpush.bf16.msra.mxu0 %v2696
      %3588 = vmatpush.bf16.msra.mxu0 %v2692
      %3589 = vmatpush.bf16.msra.mxu0 %v2688
      %3590 = vmatpush.bf16.msra.mxu0 %v2684
      %3591 = vmatpush.bf16.msra.mxu0 %v2680
      %3592 = vmatmul.bf16.gmra.mxu0 %v1472
      %v3593 = vpop.f32.mrf.mxu0
      %v3594 = vadd.f32 %v3581, %v3593
      %v3595 = vpop.f32.mrf.mxu0
      %3596 = vdwg.mxu0
      %3597 = vmatpush.bf16.msra.mxu0 %v2740
      %3598 = vmatpush.bf16.msra.mxu0 %v2736
      %3599 = vmatpush.bf16.msra.mxu0 %v2732
      %3600 = vmatpush.bf16.msra.mxu0 %v2728
      %3601 = vmatpush.bf16.msra.mxu0 %v2724
      %3602 = vmatpush.bf16.msra.mxu0 %v2720
      %3603 = vmatpush.bf16.msra.mxu0 %v2716
      %3604 = vmatpush.bf16.msra.mxu0 %v2712
      %3605 = vmatmul.bf16.gmra.mxu0 %v1473
      %v3606 = vpop.f32.mrf.mxu0
      %v3607 = vadd.f32 %v3594, %v3606
      %v3608 = vpop.f32.mrf.mxu0
      %3609 = vdwg.mxu0
      %3610 = vmatpush.bf16.msra.mxu0 %v2772
      %3611 = vmatpush.bf16.msra.mxu0 %v2768
      %3612 = vmatpush.bf16.msra.mxu0 %v2764
      %3613 = vmatpush.bf16.msra.mxu0 %v2760
      %3614 = vmatpush.bf16.msra.mxu0 %v2756
      %3615 = vmatpush.bf16.msra.mxu0 %v2752
      %3616 = vmatpush.bf16.msra.mxu0 %v2748
      %3617 = vmatpush.bf16.msra.mxu0 %v2744
      %3618 = vmatmul.bf16.gmra.mxu0 %v1474
      %v3619 = vpop.f32.mrf.mxu0
      %v3620 = vadd.f32 %v3607, %v3619
      %v3621 = vpop.f32.mrf.mxu0
      %3622 = vdwg.mxu0
      %3623 = vmatpush.bf16.msra.mxu0 %v2804
      %3624 = vmatpush.bf16.msra.mxu0 %v2800
      %3625 = vmatpush.bf16.msra.mxu0 %v2796
      %3626 = vmatpush.bf16.msra.mxu0 %v2792
      %3627 = vmatpush.bf16.msra.mxu0 %v2788
      %3628 = vmatpush.bf16.msra.mxu0 %v2784
      %3629 = vmatpush.bf16.msra.mxu0 %v2780
      %3630 = vmatpush.bf16.msra.mxu0 %v2776
      %3631 = vmatmul.bf16.gmra.mxu0 %v1475
      %v3632 = vpop.f32.mrf.mxu0
      %v3633 = vadd.f32 %v3620, %v3632
      %v3634 = vpop.f32.mrf.mxu0
      %3635 = vdwg.mxu0
      %3636 = vmatpush.bf16.msra.mxu0 %v2836
      %3637 = vmatpush.bf16.msra.mxu0 %v2832
      %3638 = vmatpush.bf16.msra.mxu0 %v2828
      %3639 = vmatpush.bf16.msra.mxu0 %v2824
      %3640 = vmatpush.bf16.msra.mxu0 %v2820
      %3641 = vmatpush.bf16.msra.mxu0 %v2816
      %3642 = vmatpush.bf16.msra.mxu0 %v2812
      %3643 = vmatpush.bf16.msra.mxu0 %v2808
      %3644 = vmatmul.bf16.gmra.mxu0 %v1476
      %v3645 = vpop.f32.mrf.mxu0
      %v3646 = vadd.f32 %v3633, %v3645
      %v3647 = vpop.f32.mrf.mxu0
      %3648 = vdwg.mxu0
      %3649 = vmatpush.bf16.msra.mxu0 %v2868
      %3650 = vmatpush.bf16.msra.mxu0 %v2864
      %3651 = vmatpush.bf16.msra.mxu0 %v2860
      %3652 = vmatpush.bf16.msra.mxu0 %v2856
      %3653 = vmatpush.bf16.msra.mxu0 %v2852
      %3654 = vmatpush.bf16.msra.mxu0 %v2848
      %3655 = vmatpush.bf16.msra.mxu0 %v2844
      %3656 = vmatpush.bf16.msra.mxu0 %v2840
      %3657 = vmatmul.bf16.gmra.mxu0 %v1477
      %v3658 = vpop.f32.mrf.mxu0
      %v3659 = vadd.f32 %v3646, %v3658
      %v3660 = vpop.f32.mrf.mxu0
      %3661 = vdwg.mxu0
      %3662 = vmatpush.bf16.msra.mxu0 %v2900
      %3663 = vmatpush.bf16.msra.mxu0 %v2896
      %3664 = vmatpush.bf16.msra.mxu0 %v2892
      %3665 = vmatpush.bf16.msra.mxu0 %v2888
      %3666 = vmatpush.bf16.msra.mxu0 %v2884
      %3667 = vmatpush.bf16.msra.mxu0 %v2880
      %3668 = vmatpush.bf16.msra.mxu0 %v2876
      %3669 = vmatpush.bf16.msra.mxu0 %v2872
      %3670 = vmatmul.bf16.gmra.mxu0 %v1478
      %v3671 = vpop.f32.mrf.mxu0
      %v3672 = vadd.f32 %v3659, %v3671
      %v3673 = vpop.f32.mrf.mxu0
      %3674 = vdwg.mxu0
      %3675 = vmatpush.bf16.msra.mxu0 %v2932
      %3676 = vmatpush.bf16.msra.mxu0 %v2928
      %3677 = vmatpush.bf16.msra.mxu0 %v2924
      %3678 = vmatpush.bf16.msra.mxu0 %v2920
      %3679 = vmatpush.bf16.msra.mxu0 %v2916
      %3680 = vmatpush.bf16.msra.mxu0 %v2912
      %3681 = vmatpush.bf16.msra.mxu0 %v2908
      %3682 = vmatpush.bf16.msra.mxu0 %v2904
      %3683 = vmatmul.bf16.gmra.mxu0 %v1479
      %v3684 = vpop.f32.mrf.mxu0
      %v3685 = vadd.f32 %v3672, %v3684
      %v3686 = vpop.f32.mrf.mxu0
      %3687 = vdwg.mxu0
      %3688 = vmatpush.bf16.msra.mxu0 %v2964
      %3689 = vmatpush.bf16.msra.mxu0 %v2960
      %3690 = vmatpush.bf16.msra.mxu0 %v2956
      %3691 = vmatpush.bf16.msra.mxu0 %v2952
      %3692 = vmatpush.bf16.msra.mxu0 %v2948
      %3693 = vmatpush.bf16.msra.mxu0 %v2944
      %3694 = vmatpush.bf16.msra.mxu0 %v2940
      %3695 = vmatpush.bf16.msra.mxu0 %v2936
      %3696 = vmatmul.bf16.gmra.mxu0 %v1480
      %v3697 = vpop.f32.mrf.mxu0
      %v3698 = vadd.f32 %v3685, %v3697
      %v3699 = vpop.f32.mrf.mxu0
      %3700 = vdwg.mxu0
      %3701 = vmatpush.bf16.msra.mxu0 %v2996
      %3702 = vmatpush.bf16.msra.mxu0 %v2992
      %3703 = vmatpush.bf16.msra.mxu0 %v2988
      %3704 = vmatpush.bf16.msra.mxu0 %v2984
      %3705 = vmatpush.bf16.msra.mxu0 %v2980
      %3706 = vmatpush.bf16.msra.mxu0 %v2976
      %3707 = vmatpush.bf16.msra.mxu0 %v2972
      %3708 = vmatpush.bf16.msra.mxu0 %v2968
      %3709 = vmatmul.bf16.gmra.mxu0 %v1481
      %v3710 = vpop.f32.mrf.mxu0
      %v3711 = vadd.f32 %v3698, %v3710
      %v3712 = vpop.f32.mrf.mxu0
      %3713 = vdwg.mxu0
      %3714 = vmatpush.bf16.msra.mxu0 %v3028
      %3715 = vmatpush.bf16.msra.mxu0 %v3024
      %3716 = vmatpush.bf16.msra.mxu0 %v3020
      %3717 = vmatpush.bf16.msra.mxu0 %v3016
      %3718 = vmatpush.bf16.msra.mxu0 %v3012
      %3719 = vmatpush.bf16.msra.mxu0 %v3008
      %3720 = vmatpush.bf16.msra.mxu0 %v3004
      %3721 = vmatpush.bf16.msra.mxu0 %v3000
      %3722 = vmatmul.bf16.gmra.mxu0 %v1482
      %v3723 = vpop.f32.mrf.mxu0
      %v3724 = vadd.f32 %v3711, %v3723
      %v3725 = vpop.f32.mrf.mxu0
      %3726 = vdwg.mxu0
      %3727 = vmatpush.bf16.msra.mxu0 %v2677
      %3728 = vmatpush.bf16.msra.mxu0 %v2673
      %3729 = vmatpush.bf16.msra.mxu0 %v2669
      %3730 = vmatpush.bf16.msra.mxu0 %v2665
      %3731 = vmatpush.bf16.msra.mxu0 %v2661
      %3732 = vmatpush.bf16.msra.mxu0 %v2657
      %3733 = vmatpush.bf16.msra.mxu0 %v2653
      %3734 = vmatpush.bf16.msra.mxu0 %v2649
      %3735 = vmatmul.bf16.gmra.mxu0 %v1471
      %v3736 = vpop.f32.mrf.mxu0
      %v3737 = vadd.f32 %v1447, %v3736
      %v3738 = vpop.f32.mrf.mxu0
      %3739 = vdwg.mxu0
      %3740 = vmatpush.bf16.msra.mxu0 %v2709
      %3741 = vmatpush.bf16.msra.mxu0 %v2705
      %3742 = vmatpush.bf16.msra.mxu0 %v2701
      %3743 = vmatpush.bf16.msra.mxu0 %v2697
      %3744 = vmatpush.bf16.msra.mxu0 %v2693
      %3745 = vmatpush.bf16.msra.mxu0 %v2689
      %3746 = vmatpush.bf16.msra.mxu0 %v2685
      %3747 = vmatpush.bf16.msra.mxu0 %v2681
      %3748 = vmatmul.bf16.gmra.mxu0 %v1472
      %v3749 = vpop.f32.mrf.mxu0
      %v3750 = vadd.f32 %v3737, %v3749
      %v3751 = vpop.f32.mrf.mxu0
      %3752 = vdwg.mxu0
      %3753 = vmatpush.bf16.msra.mxu0 %v2741
      %3754 = vmatpush.bf16.msra.mxu0 %v2737
      %3755 = vmatpush.bf16.msra.mxu0 %v2733
      %3756 = vmatpush.bf16.msra.mxu0 %v2729
      %3757 = vmatpush.bf16.msra.mxu0 %v2725
      %3758 = vmatpush.bf16.msra.mxu0 %v2721
      %3759 = vmatpush.bf16.msra.mxu0 %v2717
      %3760 = vmatpush.bf16.msra.mxu0 %v2713
      %3761 = vmatmul.bf16.gmra.mxu0 %v1473
      %v3762 = vpop.f32.mrf.mxu0
      %v3763 = vadd.f32 %v3750, %v3762
      %v3764 = vpop.f32.mrf.mxu0
      %3765 = vdwg.mxu0
      %3766 = vmatpush.bf16.msra.mxu0 %v2773
      %3767 = vmatpush.bf16.msra.mxu0 %v2769
      %3768 = vmatpush.bf16.msra.mxu0 %v2765
      %3769 = vmatpush.bf16.msra.mxu0 %v2761
      %3770 = vmatpush.bf16.msra.mxu0 %v2757
      %3771 = vmatpush.bf16.msra.mxu0 %v2753
      %3772 = vmatpush.bf16.msra.mxu0 %v2749
      %3773 = vmatpush.bf16.msra.mxu0 %v2745
      %3774 = vmatmul.bf16.gmra.mxu0 %v1474
      %v3775 = vpop.f32.mrf.mxu0
      %v3776 = vadd.f32 %v3763, %v3775
      %v3777 = vpop.f32.mrf.mxu0
      %3778 = vdwg.mxu0
      %3779 = vmatpush.bf16.msra.mxu0 %v2805
      %3780 = vmatpush.bf16.msra.mxu0 %v2801
      %3781 = vmatpush.bf16.msra.mxu0 %v2797
      %3782 = vmatpush.bf16.msra.mxu0 %v2793
      %3783 = vmatpush.bf16.msra.mxu0 %v2789
      %3784 = vmatpush.bf16.msra.mxu0 %v2785
      %3785 = vmatpush.bf16.msra.mxu0 %v2781
      %3786 = vmatpush.bf16.msra.mxu0 %v2777
      %3787 = vmatmul.bf16.gmra.mxu0 %v1475
      %v3788 = vpop.f32.mrf.mxu0
      %v3789 = vadd.f32 %v3776, %v3788
      %v3790 = vpop.f32.mrf.mxu0
      %3791 = vdwg.mxu0
      %3792 = vmatpush.bf16.msra.mxu0 %v2837
      %3793 = vmatpush.bf16.msra.mxu0 %v2833
      %3794 = vmatpush.bf16.msra.mxu0 %v2829
      %3795 = vmatpush.bf16.msra.mxu0 %v2825
      %3796 = vmatpush.bf16.msra.mxu0 %v2821
      %3797 = vmatpush.bf16.msra.mxu0 %v2817
      %3798 = vmatpush.bf16.msra.mxu0 %v2813
      %3799 = vmatpush.bf16.msra.mxu0 %v2809
      %3800 = vmatmul.bf16.gmra.mxu0 %v1476
      %v3801 = vpop.f32.mrf.mxu0
      %v3802 = vadd.f32 %v3789, %v3801
      %v3803 = vpop.f32.mrf.mxu0
      %3804 = vdwg.mxu0
      %3805 = vmatpush.bf16.msra.mxu0 %v2869
      %3806 = vmatpush.bf16.msra.mxu0 %v2865
      %3807 = vmatpush.bf16.msra.mxu0 %v2861
      %3808 = vmatpush.bf16.msra.mxu0 %v2857
      %3809 = vmatpush.bf16.msra.mxu0 %v2853
      %3810 = vmatpush.bf16.msra.mxu0 %v2849
      %3811 = vmatpush.bf16.msra.mxu0 %v2845
      %3812 = vmatpush.bf16.msra.mxu0 %v2841
      %3813 = vmatmul.bf16.gmra.mxu0 %v1477
      %v3814 = vpop.f32.mrf.mxu0
      %v3815 = vadd.f32 %v3802, %v3814
      %v3816 = vpop.f32.mrf.mxu0
      %3817 = vdwg.mxu0
      %3818 = vmatpush.bf16.msra.mxu0 %v2901
      %3819 = vmatpush.bf16.msra.mxu0 %v2897
      %3820 = vmatpush.bf16.msra.mxu0 %v2893
      %3821 = vmatpush.bf16.msra.mxu0 %v2889
      %3822 = vmatpush.bf16.msra.mxu0 %v2885
      %3823 = vmatpush.bf16.msra.mxu0 %v2881
      %3824 = vmatpush.bf16.msra.mxu0 %v2877
      %3825 = vmatpush.bf16.msra.mxu0 %v2873
      %3826 = vmatmul.bf16.gmra.mxu0 %v1478
      %v3827 = vpop.f32.mrf.mxu0
      %v3828 = vadd.f32 %v3815, %v3827
      %v3829 = vpop.f32.mrf.mxu0
      %3830 = vdwg.mxu0
      %3831 = vmatpush.bf16.msra.mxu0 %v2933
      %3832 = vmatpush.bf16.msra.mxu0 %v2929
      %3833 = vmatpush.bf16.msra.mxu0 %v2925
      %3834 = vmatpush.bf16.msra.mxu0 %v2921
      %3835 = vmatpush.bf16.msra.mxu0 %v2917
      %3836 = vmatpush.bf16.msra.mxu0 %v2913
      %3837 = vmatpush.bf16.msra.mxu0 %v2909
      %3838 = vmatpush.bf16.msra.mxu0 %v2905
      %3839 = vmatmul.bf16.gmra.mxu0 %v1479
      %v3840 = vpop.f32.mrf.mxu0
      %v3841 = vadd.f32 %v3828, %v3840
      %v3842 = vpop.f32.mrf.mxu0
      %3843 = vdwg.mxu0
      %3844 = vmatpush.bf16.msra.mxu0 %v2965
      %3845 = vmatpush.bf16.msra.mxu0 %v2961
      %3846 = vmatpush.bf16.msra.mxu0 %v2957
      %3847 = vmatpush.bf16.msra.mxu0 %v2953
      %3848 = vmatpush.bf16.msra.mxu0 %v2949
      %3849 = vmatpush.bf16.msra.mxu0 %v2945
      %3850 = vmatpush.bf16.msra.mxu0 %v2941
      %3851 = vmatpush.bf16.msra.mxu0 %v2937
      %3852 = vmatmul.bf16.gmra.mxu0 %v1480
      %v3853 = vpop.f32.mrf.mxu0
      %v3854 = vadd.f32 %v3841, %v3853
      %v3855 = vpop.f32.mrf.mxu0
      %3856 = vdwg.mxu0
      %3857 = vmatpush.bf16.msra.mxu0 %v2997
      %3858 = vmatpush.bf16.msra.mxu0 %v2993
      %3859 = vmatpush.bf16.msra.mxu0 %v2989
      %3860 = vmatpush.bf16.msra.mxu0 %v2985
      %3861 = vmatpush.bf16.msra.mxu0 %v2981
      %3862 = vmatpush.bf16.msra.mxu0 %v2977
      %3863 = vmatpush.bf16.msra.mxu0 %v2973
      %3864 = vmatpush.bf16.msra.mxu0 %v2969
      %3865 = vmatmul.bf16.gmra.mxu0 %v1481
      %v3866 = vpop.f32.mrf.mxu0
      %v3867 = vadd.f32 %v3854, %v3866
      %v3868 = vpop.f32.mrf.mxu0
      %3869 = vdwg.mxu0
      %3870 = vmatpush.bf16.msra.mxu0 %v3029
      %3871 = vmatpush.bf16.msra.mxu0 %v3025
      %3872 = vmatpush.bf16.msra.mxu0 %v3021
      %3873 = vmatpush.bf16.msra.mxu0 %v3017
      %3874 = vmatpush.bf16.msra.mxu0 %v3013
      %3875 = vmatpush.bf16.msra.mxu0 %v3009
      %3876 = vmatpush.bf16.msra.mxu0 %v3005
      %3877 = vmatpush.bf16.msra.mxu0 %v3001
      %3878 = vmatmul.bf16.gmra.mxu0 %v1482
      %v3879 = vpop.f32.mrf.mxu0
      %v3880 = vadd.f32 %v3867, %v3879
      %v3881 = vpop.f32.mrf.mxu0
      %3882 = vdwg.mxu0
      %3883 = vmatpush.bf16.msra.mxu0 %v2678
      %3884 = vmatpush.bf16.msra.mxu0 %v2674
      %3885 = vmatpush.bf16.msra.mxu0 %v2670
      %3886 = vmatpush.bf16.msra.mxu0 %v2666
      %3887 = vmatpush.bf16.msra.mxu0 %v2662
      %3888 = vmatpush.bf16.msra.mxu0 %v2658
      %3889 = vmatpush.bf16.msra.mxu0 %v2654
      %3890 = vmatpush.bf16.msra.mxu0 %v2650
      %3891 = vmatmul.bf16.gmra.mxu0 %v1471
      %v3892 = vpop.f32.mrf.mxu0
      %v3893 = vadd.f32 %v1448, %v3892
      %v3894 = vpop.f32.mrf.mxu0
      %3895 = vdwg.mxu0
      %3896 = vmatpush.bf16.msra.mxu0 %v2710
      %3897 = vmatpush.bf16.msra.mxu0 %v2706
      %3898 = vmatpush.bf16.msra.mxu0 %v2702
      %3899 = vmatpush.bf16.msra.mxu0 %v2698
      %3900 = vmatpush.bf16.msra.mxu0 %v2694
      %3901 = vmatpush.bf16.msra.mxu0 %v2690
      %3902 = vmatpush.bf16.msra.mxu0 %v2686
      %3903 = vmatpush.bf16.msra.mxu0 %v2682
      %3904 = vmatmul.bf16.gmra.mxu0 %v1472
      %v3905 = vpop.f32.mrf.mxu0
      %v3906 = vadd.f32 %v3893, %v3905
      %v3907 = vpop.f32.mrf.mxu0
      %3908 = vdwg.mxu0
      %3909 = vmatpush.bf16.msra.mxu0 %v2742
      %3910 = vmatpush.bf16.msra.mxu0 %v2738
      %3911 = vmatpush.bf16.msra.mxu0 %v2734
      %3912 = vmatpush.bf16.msra.mxu0 %v2730
      %3913 = vmatpush.bf16.msra.mxu0 %v2726
      %3914 = vmatpush.bf16.msra.mxu0 %v2722
      %3915 = vmatpush.bf16.msra.mxu0 %v2718
      %3916 = vmatpush.bf16.msra.mxu0 %v2714
      %3917 = vmatmul.bf16.gmra.mxu0 %v1473
      %v3918 = vpop.f32.mrf.mxu0
      %v3919 = vadd.f32 %v3906, %v3918
      %v3920 = vpop.f32.mrf.mxu0
      %3921 = vdwg.mxu0
      %3922 = vmatpush.bf16.msra.mxu0 %v2774
      %3923 = vmatpush.bf16.msra.mxu0 %v2770
      %3924 = vmatpush.bf16.msra.mxu0 %v2766
      %3925 = vmatpush.bf16.msra.mxu0 %v2762
      %3926 = vmatpush.bf16.msra.mxu0 %v2758
      %3927 = vmatpush.bf16.msra.mxu0 %v2754
      %3928 = vmatpush.bf16.msra.mxu0 %v2750
      %3929 = vmatpush.bf16.msra.mxu0 %v2746
      %3930 = vmatmul.bf16.gmra.mxu0 %v1474
      %v3931 = vpop.f32.mrf.mxu0
      %v3932 = vadd.f32 %v3919, %v3931
      %v3933 = vpop.f32.mrf.mxu0
      %3934 = vdwg.mxu0
      %3935 = vmatpush.bf16.msra.mxu0 %v2806
      %3936 = vmatpush.bf16.msra.mxu0 %v2802
      %3937 = vmatpush.bf16.msra.mxu0 %v2798
      %3938 = vmatpush.bf16.msra.mxu0 %v2794
      %3939 = vmatpush.bf16.msra.mxu0 %v2790
      %3940 = vmatpush.bf16.msra.mxu0 %v2786
      %3941 = vmatpush.bf16.msra.mxu0 %v2782
      %3942 = vmatpush.bf16.msra.mxu0 %v2778
      %3943 = vmatmul.bf16.gmra.mxu0 %v1475
      %v3944 = vpop.f32.mrf.mxu0
      %v3945 = vadd.f32 %v3932, %v3944
      %v3946 = vpop.f32.mrf.mxu0
      %3947 = vdwg.mxu0
      %3948 = vmatpush.bf16.msra.mxu0 %v2838
      %3949 = vmatpush.bf16.msra.mxu0 %v2834
      %3950 = vmatpush.bf16.msra.mxu0 %v2830
      %3951 = vmatpush.bf16.msra.mxu0 %v2826
      %3952 = vmatpush.bf16.msra.mxu0 %v2822
      %3953 = vmatpush.bf16.msra.mxu0 %v2818
      %3954 = vmatpush.bf16.msra.mxu0 %v2814
      %3955 = vmatpush.bf16.msra.mxu0 %v2810
      %3956 = vmatmul.bf16.gmra.mxu0 %v1476
      %v3957 = vpop.f32.mrf.mxu0
      %v3958 = vadd.f32 %v3945, %v3957
      %v3959 = vpop.f32.mrf.mxu0
      %3960 = vdwg.mxu0
      %3961 = vmatpush.bf16.msra.mxu0 %v2870
      %3962 = vmatpush.bf16.msra.mxu0 %v2866
      %3963 = vmatpush.bf16.msra.mxu0 %v2862
      %3964 = vmatpush.bf16.msra.mxu0 %v2858
      %3965 = vmatpush.bf16.msra.mxu0 %v2854
      %3966 = vmatpush.bf16.msra.mxu0 %v2850
      %3967 = vmatpush.bf16.msra.mxu0 %v2846
      %3968 = vmatpush.bf16.msra.mxu0 %v2842
      %3969 = vmatmul.bf16.gmra.mxu0 %v1477
      %v3970 = vpop.f32.mrf.mxu0
      %v3971 = vadd.f32 %v3958, %v3970
      %v3972 = vpop.f32.mrf.mxu0
      %3973 = vdwg.mxu0
      %3974 = vmatpush.bf16.msra.mxu0 %v2902
      %3975 = vmatpush.bf16.msra.mxu0 %v2898
      %3976 = vmatpush.bf16.msra.mxu0 %v2894
      %3977 = vmatpush.bf16.msra.mxu0 %v2890
      %3978 = vmatpush.bf16.msra.mxu0 %v2886
      %3979 = vmatpush.bf16.msra.mxu0 %v2882
      %3980 = vmatpush.bf16.msra.mxu0 %v2878
      %3981 = vmatpush.bf16.msra.mxu0 %v2874
      %3982 = vmatmul.bf16.gmra.mxu0 %v1478
      %v3983 = vpop.f32.mrf.mxu0
      %v3984 = vadd.f32 %v3971, %v3983
      %v3985 = vpop.f32.mrf.mxu0
      %3986 = vdwg.mxu0
      %3987 = vmatpush.bf16.msra.mxu0 %v2934
      %3988 = vmatpush.bf16.msra.mxu0 %v2930
      %3989 = vmatpush.bf16.msra.mxu0 %v2926
      %3990 = vmatpush.bf16.msra.mxu0 %v2922
      %3991 = vmatpush.bf16.msra.mxu0 %v2918
      %3992 = vmatpush.bf16.msra.mxu0 %v2914
      %3993 = vmatpush.bf16.msra.mxu0 %v2910
      %3994 = vmatpush.bf16.msra.mxu0 %v2906
      %3995 = vmatmul.bf16.gmra.mxu0 %v1479
      %v3996 = vpop.f32.mrf.mxu0
      %v3997 = vadd.f32 %v3984, %v3996
      %v3998 = vpop.f32.mrf.mxu0
      %3999 = vdwg.mxu0
      %4000 = vmatpush.bf16.msra.mxu0 %v2966
      %4001 = vmatpush.bf16.msra.mxu0 %v2962
      %4002 = vmatpush.bf16.msra.mxu0 %v2958
      %4003 = vmatpush.bf16.msra.mxu0 %v2954
      %4004 = vmatpush.bf16.msra.mxu0 %v2950
      %4005 = vmatpush.bf16.msra.mxu0 %v2946
      %4006 = vmatpush.bf16.msra.mxu0 %v2942
      %4007 = vmatpush.bf16.msra.mxu0 %v2938
      %4008 = vmatmul.bf16.gmra.mxu0 %v1480
      %v4009 = vpop.f32.mrf.mxu0
      %v4010 = vadd.f32 %v3997, %v4009
      %v4011 = vpop.f32.mrf.mxu0
      %4012 = vdwg.mxu0
      %4013 = vmatpush.bf16.msra.mxu0 %v2998
      %4014 = vmatpush.bf16.msra.mxu0 %v2994
      %4015 = vmatpush.bf16.msra.mxu0 %v2990
      %4016 = vmatpush.bf16.msra.mxu0 %v2986
      %4017 = vmatpush.bf16.msra.mxu0 %v2982
      %4018 = vmatpush.bf16.msra.mxu0 %v2978
      %4019 = vmatpush.bf16.msra.mxu0 %v2974
      %4020 = vmatpush.bf16.msra.mxu0 %v2970
      %4021 = vmatmul.bf16.gmra.mxu0 %v1481
      %v4022 = vpop.f32.mrf.mxu0
      %v4023 = vadd.f32 %v4010, %v4022
      %v4024 = vpop.f32.mrf.mxu0
      %4025 = vdwg.mxu0
      %4026 = vmatpush.bf16.msra.mxu0 %v3030
      %4027 = vmatpush.bf16.msra.mxu0 %v3026
      %4028 = vmatpush.bf16.msra.mxu0 %v3022
      %4029 = vmatpush.bf16.msra.mxu0 %v3018
      %4030 = vmatpush.bf16.msra.mxu0 %v3014
      %4031 = vmatpush.bf16.msra.mxu0 %v3010
      %4032 = vmatpush.bf16.msra.mxu0 %v3006
      %4033 = vmatpush.bf16.msra.mxu0 %v3002
      %4034 = vmatmul.bf16.gmra.mxu0 %v1482
      %v4035 = vpop.f32.mrf.mxu0
      %v4036 = vadd.f32 %v4023, %v4035
      %v4037 = vpop.f32.mrf.mxu0
      %4038 = vdwg.mxu0
      %v4039 = vtanh.pop %v3568
      %v4040 = vtanh.pop %v3724
      %v4041 = vtanh.pop %v3880
      %v4042 = vtanh.pop %v4036
      %v4043 = vpack.c.bf16 %v4039, %v4039
      %v4044 = vpack.c.bf16 %v4040, %v4040
      %v4045 = vpack.c.bf16 %v4041, %v4041
      %v4046 = vpack.c.bf16 %v4042, %v4042
      %v4047 = vld [vmem:[#allocation9] sm:$0xff]
      %v4048 = vld [vmem:[#allocation9 + $0x8] sm:$0xff]
      %v4049 = vld [vmem:[#allocation9 + $0x10] sm:$0xff]
      %v4050 = vld [vmem:[#allocation9 + $0x18] sm:$0xff]
      %v4051 = vld [vmem:[#allocation9 + $0x20] sm:$0xff]
      %v4052 = vld [vmem:[#allocation9 + $0x28] sm:$0xff]
      %v4053 = vld [vmem:[#allocation9 + $0x30] sm:$0xff]
      %v4054 = vld [vmem:[#allocation9 + $0x38] sm:$0xff]
      %v4055 = vld [vmem:[#allocation9 + $0x40] sm:$0xff]
      %v4056 = vld [vmem:[#allocation9 + $0x48] sm:$0xff]
      %v4057 = vld [vmem:[#allocation9 + $0x50] sm:$0xff]
      %v4058 = vld [vmem:[#allocation9 + $0x58] sm:$0xff]
      %v4059 = vld [vmem:[#allocation9 + $0x60] sm:$0xff]
      %v4060 = vld [vmem:[#allocation9 + $0x68] sm:$0xff]
      %v4061 = vld [vmem:[#allocation9 + $0x70] sm:$0xff]
      %v4062 = vld [vmem:[#allocation9 + $0x78] sm:$0xff]
      %v4063 = vld [vmem:[#allocation9 + $0x80] sm:$0xff]
      %v4064 = vld [vmem:[#allocation9 + $0x88] sm:$0xff]
      %v4065 = vld [vmem:[#allocation9 + $0x90] sm:$0xff]
      %v4066 = vld [vmem:[#allocation9 + $0x98] sm:$0xff]
      %v4067 = vld [vmem:[#allocation9 + $0xa0] sm:$0xff]
      %v4068 = vld [vmem:[#allocation9 + $0xa8] sm:$0xff]
      %v4069 = vld [vmem:[#allocation9 + $0xb0] sm:$0xff]
      %v4070 = vld [vmem:[#allocation9 + $0xb8] sm:$0xff]
      %v4071 = vld [vmem:[#allocation9 + $0xc0] sm:$0xff]
      %v4072 = vld [vmem:[#allocation9 + $0xc8] sm:$0xff]
      %v4073 = vld [vmem:[#allocation9 + $0xd0] sm:$0xff]
      %v4074 = vld [vmem:[#allocation9 + $0xd8] sm:$0xff]
      %v4075 = vld [vmem:[#allocation9 + $0xe0] sm:$0xff]
      %v4076 = vld [vmem:[#allocation9 + $0xe8] sm:$0xff]
      %v4077 = vld [vmem:[#allocation9 + $0xf0] sm:$0xff]
      %v4078 = vld [vmem:[#allocation9 + $0xf8] sm:$0xff]
      %v4079 = vld [vmem:[#allocation9 + $0x100] sm:$0xff]
      %v4080 = vld [vmem:[#allocation9 + $0x108] sm:$0xff]
      %v4081 = vld [vmem:[#allocation9 + $0x110] sm:$0xff]
      %v4082 = vld [vmem:[#allocation9 + $0x118] sm:$0xff]
      %v4083 = vld [vmem:[#allocation9 + $0x120] sm:$0xff]
      %v4084 = vld [vmem:[#allocation9 + $0x128] sm:$0xff]
      %v4085 = vld [vmem:[#allocation9 + $0x130] sm:$0xff]
      %v4086 = vld [vmem:[#allocation9 + $0x138] sm:$0xff]
      %v4087 = vld [vmem:[#allocation9 + $0x140] sm:$0xff]
      %v4088 = vld [vmem:[#allocation9 + $0x148] sm:$0xff]
      %v4089 = vld [vmem:[#allocation9 + $0x150] sm:$0xff]
      %v4090 = vld [vmem:[#allocation9 + $0x158] sm:$0xff]
      %v4091 = vld [vmem:[#allocation9 + $0x160] sm:$0xff]
      %v4092 = vld [vmem:[#allocation9 + $0x168] sm:$0xff]
      %v4093 = vld [vmem:[#allocation9 + $0x170] sm:$0xff]
      %v4094 = vld [vmem:[#allocation9 + $0x178] sm:$0xff]
      %v4095 = vld [vmem:[#allocation9 + $0x180] sm:$0xff]
      %v4096 = vld [vmem:[#allocation9 + $0x188] sm:$0xff]
      %v4097 = vld [vmem:[#allocation9 + $0x190] sm:$0xff]
      %v4098 = vld [vmem:[#allocation9 + $0x198] sm:$0xff]
      %v4099 = vld [vmem:[#allocation9 + $0x1a0] sm:$0xff]
      %v4100 = vld [vmem:[#allocation9 + $0x1a8] sm:$0xff]
      %v4101 = vld [vmem:[#allocation9 + $0x1b0] sm:$0xff]
      %v4102 = vld [vmem:[#allocation9 + $0x1b8] sm:$0xff]
      %v4103 = vld [vmem:[#allocation9 + $0x1c0] sm:$0xff]
      %v4104 = vld [vmem:[#allocation9 + $0x1c8] sm:$0xff]
      %v4105 = vld [vmem:[#allocation9 + $0x1d0] sm:$0xff]
      %v4106 = vld [vmem:[#allocation9 + $0x1d8] sm:$0xff]
      %v4107 = vld [vmem:[#allocation9 + $0x1e0] sm:$0xff]
      %v4108 = vld [vmem:[#allocation9 + $0x1e8] sm:$0xff]
      %v4109 = vld [vmem:[#allocation9 + $0x1f0] sm:$0xff]
      %v4110 = vld [vmem:[#allocation9 + $0x1f8] sm:$0xff]
      %v4111 = vld [vmem:[#allocation9 + $0x200] sm:$0xff]
      %v4112 = vld [vmem:[#allocation9 + $0x208] sm:$0xff]
      %v4113 = vld [vmem:[#allocation9 + $0x210] sm:$0xff]
      %v4114 = vld [vmem:[#allocation9 + $0x218] sm:$0xff]
      %v4115 = vld [vmem:[#allocation9 + $0x220] sm:$0xff]
      %v4116 = vld [vmem:[#allocation9 + $0x228] sm:$0xff]
      %v4117 = vld [vmem:[#allocation9 + $0x230] sm:$0xff]
      %v4118 = vld [vmem:[#allocation9 + $0x238] sm:$0xff]
      %v4119 = vld [vmem:[#allocation9 + $0x240] sm:$0xff]
      %v4120 = vld [vmem:[#allocation9 + $0x248] sm:$0xff]
      %v4121 = vld [vmem:[#allocation9 + $0x250] sm:$0xff]
      %v4122 = vld [vmem:[#allocation9 + $0x258] sm:$0xff]
      %v4123 = vld [vmem:[#allocation9 + $0x260] sm:$0xff]
      %v4124 = vld [vmem:[#allocation9 + $0x268] sm:$0xff]
      %v4125 = vld [vmem:[#allocation9 + $0x270] sm:$0xff]
      %v4126 = vld [vmem:[#allocation9 + $0x278] sm:$0xff]
      %v4127 = vld [vmem:[#allocation9 + $0x280] sm:$0xff]
      %v4128 = vld [vmem:[#allocation9 + $0x288] sm:$0xff]
      %v4129 = vld [vmem:[#allocation9 + $0x290] sm:$0xff]
      %v4130 = vld [vmem:[#allocation9 + $0x298] sm:$0xff]
      %v4131 = vld [vmem:[#allocation9 + $0x2a0] sm:$0xff]
      %v4132 = vld [vmem:[#allocation9 + $0x2a8] sm:$0xff]
      %v4133 = vld [vmem:[#allocation9 + $0x2b0] sm:$0xff]
      %v4134 = vld [vmem:[#allocation9 + $0x2b8] sm:$0xff]
      %v4135 = vld [vmem:[#allocation9 + $0x2c0] sm:$0xff]
      %v4136 = vld [vmem:[#allocation9 + $0x2c8] sm:$0xff]
      %v4137 = vld [vmem:[#allocation9 + $0x2d0] sm:$0xff]
      %v4138 = vld [vmem:[#allocation9 + $0x2d8] sm:$0xff]
      %v4139 = vld [vmem:[#allocation9 + $0x2e0] sm:$0xff]
      %v4140 = vld [vmem:[#allocation9 + $0x2e8] sm:$0xff]
      %v4141 = vld [vmem:[#allocation9 + $0x2f0] sm:$0xff]
      %v4142 = vld [vmem:[#allocation9 + $0x2f8] sm:$0xff]
      %v4143 = vld [vmem:[#allocation9 + $0x300] sm:$0xff]
      %v4144 = vld [vmem:[#allocation9 + $0x308] sm:$0xff]
      %v4145 = vld [vmem:[#allocation9 + $0x310] sm:$0xff]
      %v4146 = vld [vmem:[#allocation9 + $0x318] sm:$0xff]
      %v4147 = vld [vmem:[#allocation9 + $0x320] sm:$0xff]
      %v4148 = vld [vmem:[#allocation9 + $0x328] sm:$0xff]
      %v4149 = vld [vmem:[#allocation9 + $0x330] sm:$0xff]
      %v4150 = vld [vmem:[#allocation9 + $0x338] sm:$0xff]
      %v4151 = vld [vmem:[#allocation9 + $0x340] sm:$0xff]
      %v4152 = vld [vmem:[#allocation9 + $0x348] sm:$0xff]
      %v4153 = vld [vmem:[#allocation9 + $0x350] sm:$0xff]
      %v4154 = vld [vmem:[#allocation9 + $0x358] sm:$0xff]
      %v4155 = vld [vmem:[#allocation9 + $0x360] sm:$0xff]
      %v4156 = vld [vmem:[#allocation9 + $0x368] sm:$0xff]
      %v4157 = vld [vmem:[#allocation9 + $0x370] sm:$0xff]
      %v4158 = vld [vmem:[#allocation9 + $0x378] sm:$0xff]
      %v4159 = vld [vmem:[#allocation9 + $0x380] sm:$0xff]
      %v4160 = vld [vmem:[#allocation9 + $0x388] sm:$0xff]
      %v4161 = vld [vmem:[#allocation9 + $0x390] sm:$0xff]
      %v4162 = vld [vmem:[#allocation9 + $0x398] sm:$0xff]
      %v4163 = vld [vmem:[#allocation9 + $0x3a0] sm:$0xff]
      %v4164 = vld [vmem:[#allocation9 + $0x3a8] sm:$0xff]
      %v4165 = vld [vmem:[#allocation9 + $0x3b0] sm:$0xff]
      %v4166 = vld [vmem:[#allocation9 + $0x3b8] sm:$0xff]
      %v4167 = vld [vmem:[#allocation9 + $0x3c0] sm:$0xff]
      %v4168 = vld [vmem:[#allocation9 + $0x3c8] sm:$0xff]
      %v4169 = vld [vmem:[#allocation9 + $0x3d0] sm:$0xff]
      %v4170 = vld [vmem:[#allocation9 + $0x3d8] sm:$0xff]
      %v4171 = vld [vmem:[#allocation9 + $0x3e0] sm:$0xff]
      %v4172 = vld [vmem:[#allocation9 + $0x3e8] sm:$0xff]
      %v4173 = vld [vmem:[#allocation9 + $0x3f0] sm:$0xff]
      %v4174 = vld [vmem:[#allocation9 + $0x3f8] sm:$0xff]
      %v4175 = vld [vmem:[#allocation10] sm:$0xf]
      %v4177 = vperm.slane %v4175, 0
      %v4178 = vperm.slane %v4175, 1
      %v4179 = vperm.slane %v4175, 2
      %v4180 = vperm.slane %v4175, 3
      %v4313 = vunpack.c.l.b16 %v4047
      %v4314 = vunpack.c.h.b16 %v4047
      %v4315 = vunpack.c.l.b16 %v4048
      %v4316 = vunpack.c.h.b16 %v4048
      %v4317 = vunpack.c.l.b16 %v4049
      %v4318 = vunpack.c.h.b16 %v4049
      %v4319 = vunpack.c.l.b16 %v4050
      %v4320 = vunpack.c.h.b16 %v4050
      %v4321 = vunpack.c.l.b16 %v4051
      %v4322 = vunpack.c.h.b16 %v4051
      %v4323 = vunpack.c.l.b16 %v4052
      %v4324 = vunpack.c.h.b16 %v4052
      %v4325 = vunpack.c.l.b16 %v4053
      %v4326 = vunpack.c.h.b16 %v4053
      %v4327 = vunpack.c.l.b16 %v4054
      %v4328 = vunpack.c.h.b16 %v4054
      %v4329 = vunpack.c.l.b16 %v4055
      %v4330 = vunpack.c.h.b16 %v4055
      %v4331 = vunpack.c.l.b16 %v4056
      %v4332 = vunpack.c.h.b16 %v4056
      %v4333 = vunpack.c.l.b16 %v4057
      %v4334 = vunpack.c.h.b16 %v4057
      %v4335 = vunpack.c.l.b16 %v4058
      %v4336 = vunpack.c.h.b16 %v4058
      %v4337 = vunpack.c.l.b16 %v4059
      %v4338 = vunpack.c.h.b16 %v4059
      %v4339 = vunpack.c.l.b16 %v4060
      %v4340 = vunpack.c.h.b16 %v4060
      %v4341 = vunpack.c.l.b16 %v4061
      %v4342 = vunpack.c.h.b16 %v4061
      %v4343 = vunpack.c.l.b16 %v4062
      %v4344 = vunpack.c.h.b16 %v4062
      %v4345 = vunpack.c.l.b16 %v4063
      %v4346 = vunpack.c.h.b16 %v4063
      %v4347 = vunpack.c.l.b16 %v4064
      %v4348 = vunpack.c.h.b16 %v4064
      %v4349 = vunpack.c.l.b16 %v4065
      %v4350 = vunpack.c.h.b16 %v4065
      %v4351 = vunpack.c.l.b16 %v4066
      %v4352 = vunpack.c.h.b16 %v4066
      %v4353 = vunpack.c.l.b16 %v4067
      %v4354 = vunpack.c.h.b16 %v4067
      %v4355 = vunpack.c.l.b16 %v4068
      %v4356 = vunpack.c.h.b16 %v4068
      %v4357 = vunpack.c.l.b16 %v4069
      %v4358 = vunpack.c.h.b16 %v4069
      %v4359 = vunpack.c.l.b16 %v4070
      %v4360 = vunpack.c.h.b16 %v4070
      %v4361 = vunpack.c.l.b16 %v4071
      %v4362 = vunpack.c.h.b16 %v4071
      %v4363 = vunpack.c.l.b16 %v4072
      %v4364 = vunpack.c.h.b16 %v4072
      %v4365 = vunpack.c.l.b16 %v4073
      %v4366 = vunpack.c.h.b16 %v4073
      %v4367 = vunpack.c.l.b16 %v4074
      %v4368 = vunpack.c.h.b16 %v4074
      %v4369 = vunpack.c.l.b16 %v4075
      %v4370 = vunpack.c.h.b16 %v4075
      %v4371 = vunpack.c.l.b16 %v4076
      %v4372 = vunpack.c.h.b16 %v4076
      %v4373 = vunpack.c.l.b16 %v4077
      %v4374 = vunpack.c.h.b16 %v4077
      %v4375 = vunpack.c.l.b16 %v4078
      %v4376 = vunpack.c.h.b16 %v4078
      %v4377 = vunpack.c.l.b16 %v4079
      %v4378 = vunpack.c.h.b16 %v4079
      %v4379 = vunpack.c.l.b16 %v4080
      %v4380 = vunpack.c.h.b16 %v4080
      %v4381 = vunpack.c.l.b16 %v4081
      %v4382 = vunpack.c.h.b16 %v4081
      %v4383 = vunpack.c.l.b16 %v4082
      %v4384 = vunpack.c.h.b16 %v4082
      %v4385 = vunpack.c.l.b16 %v4083
      %v4386 = vunpack.c.h.b16 %v4083
      %v4387 = vunpack.c.l.b16 %v4084
      %v4388 = vunpack.c.h.b16 %v4084
      %v4389 = vunpack.c.l.b16 %v4085
      %v4390 = vunpack.c.h.b16 %v4085
      %v4391 = vunpack.c.l.b16 %v4086
      %v4392 = vunpack.c.h.b16 %v4086
      %v4393 = vunpack.c.l.b16 %v4087
      %v4394 = vunpack.c.h.b16 %v4087
      %v4395 = vunpack.c.l.b16 %v4088
      %v4396 = vunpack.c.h.b16 %v4088
      %v4397 = vunpack.c.l.b16 %v4089
      %v4398 = vunpack.c.h.b16 %v4089
      %v4399 = vunpack.c.l.b16 %v4090
      %v4400 = vunpack.c.h.b16 %v4090
      %v4401 = vunpack.c.l.b16 %v4091
      %v4402 = vunpack.c.h.b16 %v4091
      %v4403 = vunpack.c.l.b16 %v4092
      %v4404 = vunpack.c.h.b16 %v4092
      %v4405 = vunpack.c.l.b16 %v4093
      %v4406 = vunpack.c.h.b16 %v4093
      %v4407 = vunpack.c.l.b16 %v4094
      %v4408 = vunpack.c.h.b16 %v4094
      %v4409 = vunpack.c.l.b16 %v4095
      %v4410 = vunpack.c.h.b16 %v4095
      %v4411 = vunpack.c.l.b16 %v4096
      %v4412 = vunpack.c.h.b16 %v4096
      %v4413 = vunpack.c.l.b16 %v4097
      %v4414 = vunpack.c.h.b16 %v4097
      %v4415 = vunpack.c.l.b16 %v4098
      %v4416 = vunpack.c.h.b16 %v4098
      %v4417 = vunpack.c.l.b16 %v4099
      %v4418 = vunpack.c.h.b16 %v4099
      %v4419 = vunpack.c.l.b16 %v4100
      %v4420 = vunpack.c.h.b16 %v4100
      %v4421 = vunpack.c.l.b16 %v4101
      %v4422 = vunpack.c.h.b16 %v4101
      %v4423 = vunpack.c.l.b16 %v4102
      %v4424 = vunpack.c.h.b16 %v4102
      %v4425 = vunpack.c.l.b16 %v4103
      %v4426 = vunpack.c.h.b16 %v4103
      %v4427 = vunpack.c.l.b16 %v4104
      %v4428 = vunpack.c.h.b16 %v4104
      %v4429 = vunpack.c.l.b16 %v4105
      %v4430 = vunpack.c.h.b16 %v4105
      %v4431 = vunpack.c.l.b16 %v4106
      %v4432 = vunpack.c.h.b16 %v4106
      %v4433 = vunpack.c.l.b16 %v4107
      %v4434 = vunpack.c.h.b16 %v4107
      %v4435 = vunpack.c.l.b16 %v4108
      %v4436 = vunpack.c.h.b16 %v4108
      %v4437 = vunpack.c.l.b16 %v4109
      %v4438 = vunpack.c.h.b16 %v4109
      %v4439 = vunpack.c.l.b16 %v4110
      %v4440 = vunpack.c.h.b16 %v4110
      %v4441 = vunpack.c.l.b16 %v4111
      %v4442 = vunpack.c.h.b16 %v4111
      %v4443 = vunpack.c.l.b16 %v4112
      %v4444 = vunpack.c.h.b16 %v4112
      %v4445 = vunpack.c.l.b16 %v4113
      %v4446 = vunpack.c.h.b16 %v4113
      %v4447 = vunpack.c.l.b16 %v4114
      %v4448 = vunpack.c.h.b16 %v4114
      %v4449 = vunpack.c.l.b16 %v4115
      %v4450 = vunpack.c.h.b16 %v4115
      %v4451 = vunpack.c.l.b16 %v4116
      %v4452 = vunpack.c.h.b16 %v4116
      %v4453 = vunpack.c.l.b16 %v4117
      %v4454 = vunpack.c.h.b16 %v4117
      %v4455 = vunpack.c.l.b16 %v4118
      %v4456 = vunpack.c.h.b16 %v4118
      %v4457 = vunpack.c.l.b16 %v4119
      %v4458 = vunpack.c.h.b16 %v4119
      %v4459 = vunpack.c.l.b16 %v4120
      %v4460 = vunpack.c.h.b16 %v4120
      %v4461 = vunpack.c.l.b16 %v4121
      %v4462 = vunpack.c.h.b16 %v4121
      %v4463 = vunpack.c.l.b16 %v4122
      %v4464 = vunpack.c.h.b16 %v4122
      %v4465 = vunpack.c.l.b16 %v4123
      %v4466 = vunpack.c.h.b16 %v4123
      %v4467 = vunpack.c.l.b16 %v4124
      %v4468 = vunpack.c.h.b16 %v4124
      %v4469 = vunpack.c.l.b16 %v4125
      %v4470 = vunpack.c.h.b16 %v4125
      %v4471 = vunpack.c.l.b16 %v4126
      %v4472 = vunpack.c.h.b16 %v4126
      %v4473 = vunpack.c.l.b16 %v4127
      %v4474 = vunpack.c.h.b16 %v4127
      %v4475 = vunpack.c.l.b16 %v4128
      %v4476 = vunpack.c.h.b16 %v4128
      %v4477 = vunpack.c.l.b16 %v4129
      %v4478 = vunpack.c.h.b16 %v4129
      %v4479 = vunpack.c.l.b16 %v4130
      %v4480 = vunpack.c.h.b16 %v4130
      %v4481 = vunpack.c.l.b16 %v4131
      %v4482 = vunpack.c.h.b16 %v4131
      %v4483 = vunpack.c.l.b16 %v4132
      %v4484 = vunpack.c.h.b16 %v4132
      %v4485 = vunpack.c.l.b16 %v4133
      %v4486 = vunpack.c.h.b16 %v4133
      %v4487 = vunpack.c.l.b16 %v4134
      %v4488 = vunpack.c.h.b16 %v4134
      %v4489 = vunpack.c.l.b16 %v4135
      %v4490 = vunpack.c.h.b16 %v4135
      %v4491 = vunpack.c.l.b16 %v4136
      %v4492 = vunpack.c.h.b16 %v4136
      %v4493 = vunpack.c.l.b16 %v4137
      %v4494 = vunpack.c.h.b16 %v4137
      %v4495 = vunpack.c.l.b16 %v4138
      %v4496 = vunpack.c.h.b16 %v4138
      %v4497 = vunpack.c.l.b16 %v4139
      %v4498 = vunpack.c.h.b16 %v4139
      %v4499 = vunpack.c.l.b16 %v4140
      %v4500 = vunpack.c.h.b16 %v4140
      %v4501 = vunpack.c.l.b16 %v4141
      %v4502 = vunpack.c.h.b16 %v4141
      %v4503 = vunpack.c.l.b16 %v4142
      %v4504 = vunpack.c.h.b16 %v4142
      %v4505 = vunpack.c.l.b16 %v4143
      %v4506 = vunpack.c.h.b16 %v4143
      %v4507 = vunpack.c.l.b16 %v4144
      %v4508 = vunpack.c.h.b16 %v4144
      %v4509 = vunpack.c.l.b16 %v4145
      %v4510 = vunpack.c.h.b16 %v4145
      %v4511 = vunpack.c.l.b16 %v4146
      %v4512 = vunpack.c.h.b16 %v4146
      %v4513 = vunpack.c.l.b16 %v4147
      %v4514 = vunpack.c.h.b16 %v4147
      %v4515 = vunpack.c.l.b16 %v4148
      %v4516 = vunpack.c.h.b16 %v4148
      %v4517 = vunpack.c.l.b16 %v4149
      %v4518 = vunpack.c.h.b16 %v4149
      %v4519 = vunpack.c.l.b16 %v4150
      %v4520 = vunpack.c.h.b16 %v4150
      %v4521 = vunpack.c.l.b16 %v4151
      %v4522 = vunpack.c.h.b16 %v4151
      %v4523 = vunpack.c.l.b16 %v4152
      %v4524 = vunpack.c.h.b16 %v4152
      %v4525 = vunpack.c.l.b16 %v4153
      %v4526 = vunpack.c.h.b16 %v4153
      %v4527 = vunpack.c.l.b16 %v4154
      %v4528 = vunpack.c.h.b16 %v4154
      %v4529 = vunpack.c.l.b16 %v4155
      %v4530 = vunpack.c.h.b16 %v4155
      %v4531 = vunpack.c.l.b16 %v4156
      %v4532 = vunpack.c.h.b16 %v4156
      %v4533 = vunpack.c.l.b16 %v4157
      %v4534 = vunpack.c.h.b16 %v4157
      %v4535 = vunpack.c.l.b16 %v4158
      %v4536 = vunpack.c.h.b16 %v4158
      %v4537 = vunpack.c.l.b16 %v4159
      %v4538 = vunpack.c.h.b16 %v4159
      %v4539 = vunpack.c.l.b16 %v4160
      %v4540 = vunpack.c.h.b16 %v4160
      %v4541 = vunpack.c.l.b16 %v4161
      %v4542 = vunpack.c.h.b16 %v4161
      %v4543 = vunpack.c.l.b16 %v4162
      %v4544 = vunpack.c.h.b16 %v4162
      %v4545 = vunpack.c.l.b16 %v4163
      %v4546 = vunpack.c.h.b16 %v4163
      %v4547 = vunpack.c.l.b16 %v4164
      %v4548 = vunpack.c.h.b16 %v4164
      %v4549 = vunpack.c.l.b16 %v4165
      %v4550 = vunpack.c.h.b16 %v4165
      %v4551 = vunpack.c.l.b16 %v4166
      %v4552 = vunpack.c.h.b16 %v4166
      %v4553 = vunpack.c.l.b16 %v4167
      %v4554 = vunpack.c.h.b16 %v4167
      %v4555 = vunpack.c.l.b16 %v4168
      %v4556 = vunpack.c.h.b16 %v4168
      %v4557 = vunpack.c.l.b16 %v4169
      %v4558 = vunpack.c.h.b16 %v4169
      %v4559 = vunpack.c.l.b16 %v4170
      %v4560 = vunpack.c.h.b16 %v4170
      %v4561 = vunpack.c.l.b16 %v4171
      %v4562 = vunpack.c.h.b16 %v4171
      %v4563 = vunpack.c.l.b16 %v4172
      %v4564 = vunpack.c.h.b16 %v4172
      %v4565 = vunpack.c.l.b16 %v4173
      %v4566 = vunpack.c.h.b16 %v4173
      %v4567 = vunpack.c.l.b16 %v4174
      %v4568 = vunpack.c.h.b16 %v4174
      %v4569 = vpack.c.b16 %v4317, %v4313
      %v4570 = vpack.c.b16 %v4318, %v4314
      %v4571 = vpack.c.b16 %v4319, %v4315
      %v4572 = vpack.c.b16 %v4320, %v4316
      %v4573 = vpack.c.b16 %v4325, %v4321
      %v4574 = vpack.c.b16 %v4326, %v4322
      %v4575 = vpack.c.b16 %v4327, %v4323
      %v4576 = vpack.c.b16 %v4328, %v4324
      %v4577 = vpack.c.b16 %v4333, %v4329
      %v4578 = vpack.c.b16 %v4334, %v4330
      %v4579 = vpack.c.b16 %v4335, %v4331
      %v4580 = vpack.c.b16 %v4336, %v4332
      %v4581 = vpack.c.b16 %v4341, %v4337
      %v4582 = vpack.c.b16 %v4342, %v4338
      %v4583 = vpack.c.b16 %v4343, %v4339
      %v4584 = vpack.c.b16 %v4344, %v4340
      %v4585 = vpack.c.b16 %v4349, %v4345
      %v4586 = vpack.c.b16 %v4350, %v4346
      %v4587 = vpack.c.b16 %v4351, %v4347
      %v4588 = vpack.c.b16 %v4352, %v4348
      %v4589 = vpack.c.b16 %v4357, %v4353
      %v4590 = vpack.c.b16 %v4358, %v4354
      %v4591 = vpack.c.b16 %v4359, %v4355
      %v4592 = vpack.c.b16 %v4360, %v4356
      %v4593 = vpack.c.b16 %v4365, %v4361
      %v4594 = vpack.c.b16 %v4366, %v4362
      %v4595 = vpack.c.b16 %v4367, %v4363
      %v4596 = vpack.c.b16 %v4368, %v4364
      %v4597 = vpack.c.b16 %v4373, %v4369
      %v4598 = vpack.c.b16 %v4374, %v4370
      %v4599 = vpack.c.b16 %v4375, %v4371
      %v4600 = vpack.c.b16 %v4376, %v4372
      %v4601 = vpack.c.b16 %v4381, %v4377
      %v4602 = vpack.c.b16 %v4382, %v4378
      %v4603 = vpack.c.b16 %v4383, %v4379
      %v4604 = vpack.c.b16 %v4384, %v4380
      %v4605 = vpack.c.b16 %v4389, %v4385
      %v4606 = vpack.c.b16 %v4390, %v4386
      %v4607 = vpack.c.b16 %v4391, %v4387
      %v4608 = vpack.c.b16 %v4392, %v4388
      %v4609 = vpack.c.b16 %v4397, %v4393
      %v4610 = vpack.c.b16 %v4398, %v4394
      %v4611 = vpack.c.b16 %v4399, %v4395
      %v4612 = vpack.c.b16 %v4400, %v4396
      %v4613 = vpack.c.b16 %v4405, %v4401
      %v4614 = vpack.c.b16 %v4406, %v4402
      %v4615 = vpack.c.b16 %v4407, %v4403
      %v4616 = vpack.c.b16 %v4408, %v4404
      %v4617 = vpack.c.b16 %v4413, %v4409
      %v4618 = vpack.c.b16 %v4414, %v4410
      %v4619 = vpack.c.b16 %v4415, %v4411
      %v4620 = vpack.c.b16 %v4416, %v4412
      %v4621 = vpack.c.b16 %v4421, %v4417
      %v4622 = vpack.c.b16 %v4422, %v4418
      %v4623 = vpack.c.b16 %v4423, %v4419
      %v4624 = vpack.c.b16 %v4424, %v4420
      %v4625 = vpack.c.b16 %v4429, %v4425
      %v4626 = vpack.c.b16 %v4430, %v4426
      %v4627 = vpack.c.b16 %v4431, %v4427
      %v4628 = vpack.c.b16 %v4432, %v4428
      %v4629 = vpack.c.b16 %v4437, %v4433
      %v4630 = vpack.c.b16 %v4438, %v4434
      %v4631 = vpack.c.b16 %v4439, %v4435
      %v4632 = vpack.c.b16 %v4440, %v4436
      %v4633 = vpack.c.b16 %v4445, %v4441
      %v4634 = vpack.c.b16 %v4446, %v4442
      %v4635 = vpack.c.b16 %v4447, %v4443
      %v4636 = vpack.c.b16 %v4448, %v4444
      %v4637 = vpack.c.b16 %v4453, %v4449
      %v4638 = vpack.c.b16 %v4454, %v4450
      %v4639 = vpack.c.b16 %v4455, %v4451
      %v4640 = vpack.c.b16 %v4456, %v4452
      %v4641 = vpack.c.b16 %v4461, %v4457
      %v4642 = vpack.c.b16 %v4462, %v4458
      %v4643 = vpack.c.b16 %v4463, %v4459
      %v4644 = vpack.c.b16 %v4464, %v4460
      %v4645 = vpack.c.b16 %v4469, %v4465
      %v4646 = vpack.c.b16 %v4470, %v4466
      %v4647 = vpack.c.b16 %v4471, %v4467
      %v4648 = vpack.c.b16 %v4472, %v4468
      %v4649 = vpack.c.b16 %v4477, %v4473
      %v4650 = vpack.c.b16 %v4478, %v4474
      %v4651 = vpack.c.b16 %v4479, %v4475
      %v4652 = vpack.c.b16 %v4480, %v4476
      %v4653 = vpack.c.b16 %v4485, %v4481
      %v4654 = vpack.c.b16 %v4486, %v4482
      %v4655 = vpack.c.b16 %v4487, %v4483
      %v4656 = vpack.c.b16 %v4488, %v4484
      %v4657 = vpack.c.b16 %v4493, %v4489
      %v4658 = vpack.c.b16 %v4494, %v4490
      %v4659 = vpack.c.b16 %v4495, %v4491
      %v4660 = vpack.c.b16 %v4496, %v4492
      %v4661 = vpack.c.b16 %v4501, %v4497
      %v4662 = vpack.c.b16 %v4502, %v4498
      %v4663 = vpack.c.b16 %v4503, %v4499
      %v4664 = vpack.c.b16 %v4504, %v4500
      %v4665 = vpack.c.b16 %v4509, %v4505
      %v4666 = vpack.c.b16 %v4510, %v4506
      %v4667 = vpack.c.b16 %v4511, %v4507
      %v4668 = vpack.c.b16 %v4512, %v4508
      %v4669 = vpack.c.b16 %v4517, %v4513
      %v4670 = vpack.c.b16 %v4518, %v4514
      %v4671 = vpack.c.b16 %v4519, %v4515
      %v4672 = vpack.c.b16 %v4520, %v4516
      %v4673 = vpack.c.b16 %v4525, %v4521
      %v4674 = vpack.c.b16 %v4526, %v4522
      %v4675 = vpack.c.b16 %v4527, %v4523
      %v4676 = vpack.c.b16 %v4528, %v4524
      %v4677 = vpack.c.b16 %v4533, %v4529
      %v4678 = vpack.c.b16 %v4534, %v4530
      %v4679 = vpack.c.b16 %v4535, %v4531
      %v4680 = vpack.c.b16 %v4536, %v4532
      %v4681 = vpack.c.b16 %v4541, %v4537
      %v4682 = vpack.c.b16 %v4542, %v4538
      %v4683 = vpack.c.b16 %v4543, %v4539
      %v4684 = vpack.c.b16 %v4544, %v4540
      %v4685 = vpack.c.b16 %v4549, %v4545
      %v4686 = vpack.c.b16 %v4550, %v4546
      %v4687 = vpack.c.b16 %v4551, %v4547
      %v4688 = vpack.c.b16 %v4552, %v4548
      %v4689 = vpack.c.b16 %v4557, %v4553
      %v4690 = vpack.c.b16 %v4558, %v4554
      %v4691 = vpack.c.b16 %v4559, %v4555
      %v4692 = vpack.c.b16 %v4560, %v4556
      %v4693 = vpack.c.b16 %v4565, %v4561
      %v4694 = vpack.c.b16 %v4566, %v4562
      %v4695 = vpack.c.b16 %v4567, %v4563
      %v4696 = vpack.c.b16 %v4568, %v4564
      %4825 = vmatpush.bf16.msra.mxu0 %v4597
      %4826 = vmatpush.bf16.msra.mxu0 %v4593
      %4827 = vmatpush.bf16.msra.mxu0 %v4589
      %4828 = vmatpush.bf16.msra.mxu0 %v4585
      %4829 = vmatpush.bf16.msra.mxu0 %v4581
      %4830 = vmatpush.bf16.msra.mxu0 %v4577
      %4831 = vmatpush.bf16.msra.mxu0 %v4573
      %4832 = vmatpush.bf16.msra.mxu0 %v4569
      %4833 = vmatmul.bf16.gmra.mxu0 %v4043
      %v4834 = vpop.f32.mrf.mxu0
      %v4835 = vadd.f32 %v4177, %v4834
      %v4836 = vpop.f32.mrf.mxu0
      %4837 = vdwg.mxu0
      %4838 = vmatpush.bf16.msra.mxu0 %v4629
      %4839 = vmatpush.bf16.msra.mxu0 %v4625
      %4840 = vmatpush.bf16.msra.mxu0 %v4621
      %4841 = vmatpush.bf16.msra.mxu0 %v4617
      %4842 = vmatpush.bf16.msra.mxu0 %v4613
      %4843 = vmatpush.bf16.msra.mxu0 %v4609
      %4844 = vmatpush.bf16.msra.mxu0 %v4605
      %4845 = vmatpush.bf16.msra.mxu0 %v4601
      %4846 = vmatmul.bf16.gmra.mxu0 %v4044
      %v4847 = vpop.f32.mrf.mxu0
      %v4848 = vadd.f32 %v4835, %v4847
      %v4849 = vpop.f32.mrf.mxu0
      %4850 = vdwg.mxu0
      %4851 = vmatpush.bf16.msra.mxu0 %v4661
      %4852 = vmatpush.bf16.msra.mxu0 %v4657
      %4853 = vmatpush.bf16.msra.mxu0 %v4653
      %4854 = vmatpush.bf16.msra.mxu0 %v4649
      %4855 = vmatpush.bf16.msra.mxu0 %v4645
      %4856 = vmatpush.bf16.msra.mxu0 %v4641
      %4857 = vmatpush.bf16.msra.mxu0 %v4637
      %4858 = vmatpush.bf16.msra.mxu0 %v4633
      %4859 = vmatmul.bf16.gmra.mxu0 %v4045
      %v4860 = vpop.f32.mrf.mxu0
      %v4861 = vadd.f32 %v4848, %v4860
      %v4862 = vpop.f32.mrf.mxu0
      %4863 = vdwg.mxu0
      %4864 = vmatpush.bf16.msra.mxu0 %v4693
      %4865 = vmatpush.bf16.msra.mxu0 %v4689
      %4866 = vmatpush.bf16.msra.mxu0 %v4685
      %4867 = vmatpush.bf16.msra.mxu0 %v4681
      %4868 = vmatpush.bf16.msra.mxu0 %v4677
      %4869 = vmatpush.bf16.msra.mxu0 %v4673
      %4870 = vmatpush.bf16.msra.mxu0 %v4669
      %4871 = vmatpush.bf16.msra.mxu0 %v4665
      %4872 = vmatmul.bf16.gmra.mxu0 %v4046
      %v4873 = vpop.f32.mrf.mxu0
      %v4874 = vadd.f32 %v4861, %v4873
      %v4875 = vpop.f32.mrf.mxu0
      %4876 = vdwg.mxu0
      %4877 = vmatpush.bf16.msra.mxu0 %v4598
      %4878 = vmatpush.bf16.msra.mxu0 %v4594
      %4879 = vmatpush.bf16.msra.mxu0 %v4590
      %4880 = vmatpush.bf16.msra.mxu0 %v4586
      %4881 = vmatpush.bf16.msra.mxu0 %v4582
      %4882 = vmatpush.bf16.msra.mxu0 %v4578
      %4883 = vmatpush.bf16.msra.mxu0 %v4574
      %4884 = vmatpush.bf16.msra.mxu0 %v4570
      %4885 = vmatmul.bf16.gmra.mxu0 %v4043
      %v4886 = vpop.f32.mrf.mxu0
      %v4887 = vadd.f32 %v4178, %v4886
      %v4888 = vpop.f32.mrf.mxu0
      %4889 = vdwg.mxu0
      %4890 = vmatpush.bf16.msra.mxu0 %v4630
      %4891 = vmatpush.bf16.msra.mxu0 %v4626
      %4892 = vmatpush.bf16.msra.mxu0 %v4622
      %4893 = vmatpush.bf16.msra.mxu0 %v4618
      %4894 = vmatpush.bf16.msra.mxu0 %v4614
      %4895 = vmatpush.bf16.msra.mxu0 %v4610
      %4896 = vmatpush.bf16.msra.mxu0 %v4606
      %4897 = vmatpush.bf16.msra.mxu0 %v4602
      %4898 = vmatmul.bf16.gmra.mxu0 %v4044
      %v4899 = vpop.f32.mrf.mxu0
      %v4900 = vadd.f32 %v4887, %v4899
      %v4901 = vpop.f32.mrf.mxu0
      %4902 = vdwg.mxu0
      %4903 = vmatpush.bf16.msra.mxu0 %v4662
      %4904 = vmatpush.bf16.msra.mxu0 %v4658
      %4905 = vmatpush.bf16.msra.mxu0 %v4654
      %4906 = vmatpush.bf16.msra.mxu0 %v4650
      %4907 = vmatpush.bf16.msra.mxu0 %v4646
      %4908 = vmatpush.bf16.msra.mxu0 %v4642
      %4909 = vmatpush.bf16.msra.mxu0 %v4638
      %4910 = vmatpush.bf16.msra.mxu0 %v4634
      %4911 = vmatmul.bf16.gmra.mxu0 %v4045
      %v4912 = vpop.f32.mrf.mxu0
      %v4913 = vadd.f32 %v4900, %v4912
      %v4914 = vpop.f32.mrf.mxu0
      %4915 = vdwg.mxu0
      %4916 = vmatpush.bf16.msra.mxu0 %v4694
      %4917 = vmatpush.bf16.msra.mxu0 %v4690
      %4918 = vmatpush.bf16.msra.mxu0 %v4686
      %4919 = vmatpush.bf16.msra.mxu0 %v4682
      %4920 = vmatpush.bf16.msra.mxu0 %v4678
      %4921 = vmatpush.bf16.msra.mxu0 %v4674
      %4922 = vmatpush.bf16.msra.mxu0 %v4670
      %4923 = vmatpush.bf16.msra.mxu0 %v4666
      %4924 = vmatmul.bf16.gmra.mxu0 %v4046
      %v4925 = vpop.f32.mrf.mxu0
      %v4926 = vadd.f32 %v4913, %v4925
      %v4927 = vpop.f32.mrf.mxu0
      %4928 = vdwg.mxu0
      %4929 = vmatpush.bf16.msra.mxu0 %v4599
      %4930 = vmatpush.bf16.msra.mxu0 %v4595
      %4931 = vmatpush.bf16.msra.mxu0 %v4591
      %4932 = vmatpush.bf16.msra.mxu0 %v4587
      %4933 = vmatpush.bf16.msra.mxu0 %v4583
      %4934 = vmatpush.bf16.msra.mxu0 %v4579
      %4935 = vmatpush.bf16.msra.mxu0 %v4575
      %4936 = vmatpush.bf16.msra.mxu0 %v4571
      %4937 = vmatmul.bf16.gmra.mxu0 %v4043
      %v4938 = vpop.f32.mrf.mxu0
      %v4939 = vadd.f32 %v4179, %v4938
      %v4940 = vpop.f32.mrf.mxu0
      %4941 = vdwg.mxu0
      %4942 = vmatpush.bf16.msra.mxu0 %v4631
      %4943 = vmatpush.bf16.msra.mxu0 %v4627
      %4944 = vmatpush.bf16.msra.mxu0 %v4623
      %4945 = vmatpush.bf16.msra.mxu0 %v4619
      %4946 = vmatpush.bf16.msra.mxu0 %v4615
      %4947 = vmatpush.bf16.msra.mxu0 %v4611
      %4948 = vmatpush.bf16.msra.mxu0 %v4607
      %4949 = vmatpush.bf16.msra.mxu0 %v4603
      %4950 = vmatmul.bf16.gmra.mxu0 %v4044
      %v4951 = vpop.f32.mrf.mxu0
      %v4952 = vadd.f32 %v4939, %v4951
      %v4953 = vpop.f32.mrf.mxu0
      %4954 = vdwg.mxu0
      %4955 = vmatpush.bf16.msra.mxu0 %v4663
      %4956 = vmatpush.bf16.msra.mxu0 %v4659
      %4957 = vmatpush.bf16.msra.mxu0 %v4655
      %4958 = vmatpush.bf16.msra.mxu0 %v4651
      %4959 = vmatpush.bf16.msra.mxu0 %v4647
      %4960 = vmatpush.bf16.msra.mxu0 %v4643
      %4961 = vmatpush.bf16.msra.mxu0 %v4639
      %4962 = vmatpush.bf16.msra.mxu0 %v4635
      %4963 = vmatmul.bf16.gmra.mxu0 %v4045
      %v4964 = vpop.f32.mrf.mxu0
      %v4965 = vadd.f32 %v4952, %v4964
      %v4966 = vpop.f32.mrf.mxu0
      %4967 = vdwg.mxu0
      %4968 = vmatpush.bf16.msra.mxu0 %v4695
      %4969 = vmatpush.bf16.msra.mxu0 %v4691
      %4970 = vmatpush.bf16.msra.mxu0 %v4687
      %4971 = vmatpush.bf16.msra.mxu0 %v4683
      %4972 = vmatpush.bf16.msra.mxu0 %v4679
      %4973 = vmatpush.bf16.msra.mxu0 %v4675
      %4974 = vmatpush.bf16.msra.mxu0 %v4671
      %4975 = vmatpush.bf16.msra.mxu0 %v4667
      %4976 = vmatmul.bf16.gmra.mxu0 %v4046
      %v4977 = vpop.f32.mrf.mxu0
      %v4978 = vadd.f32 %v4965, %v4977
      %v4979 = vpop.f32.mrf.mxu0
      %4980 = vdwg.mxu0
      %4981 = vmatpush.bf16.msra.mxu0 %v4600
      %4982 = vmatpush.bf16.msra.mxu0 %v4596
      %4983 = vmatpush.bf16.msra.mxu0 %v4592
      %4984 = vmatpush.bf16.msra.mxu0 %v4588
      %4985 = vmatpush.bf16.msra.mxu0 %v4584
      %4986 = vmatpush.bf16.msra.mxu0 %v4580
      %4987 = vmatpush.bf16.msra.mxu0 %v4576
      %4988 = vmatpush.bf16.msra.mxu0 %v4572
      %4989 = vmatmul.bf16.gmra.mxu0 %v4043
      %v4990 = vpop.f32.mrf.mxu0
      %v4991 = vadd.f32 %v4180, %v4990
      %v4992 = vpop.f32.mrf.mxu0
      %4993 = vdwg.mxu0
      %4994 = vmatpush.bf16.msra.mxu0 %v4632
      %4995 = vmatpush.bf16.msra.mxu0 %v4628
      %4996 = vmatpush.bf16.msra.mxu0 %v4624
      %4997 = vmatpush.bf16.msra.mxu0 %v4620
      %4998 = vmatpush.bf16.msra.mxu0 %v4616
      %4999 = vmatpush.bf16.msra.mxu0 %v4612
      %5000 = vmatpush.bf16.msra.mxu0 %v4608
      %5001 = vmatpush.bf16.msra.mxu0 %v4604
      %5002 = vmatmul.bf16.gmra.mxu0 %v4044
      %v5003 = vpop.f32.mrf.mxu0
      %v5004 = vadd.f32 %v4991, %v5003
      %v5005 = vpop.f32.mrf.mxu0
      %5006 = vdwg.mxu0
      %5007 = vmatpush.bf16.msra.mxu0 %v4664
      %5008 = vmatpush.bf16.msra.mxu0 %v4660
      %5009 = vmatpush.bf16.msra.mxu0 %v4656
      %5010 = vmatpush.bf16.msra.mxu0 %v4652
      %5011 = vmatpush.bf16.msra.mxu0 %v4648
      %5012 = vmatpush.bf16.msra.mxu0 %v4644
      %5013 = vmatpush.bf16.msra.mxu0 %v4640
      %5014 = vmatpush.bf16.msra.mxu0 %v4636
      %5015 = vmatmul.bf16.gmra.mxu0 %v4045
      %v5016 = vpop.f32.mrf.mxu0
      %v5017 = vadd.f32 %v5004, %v5016
      %v5018 = vpop.f32.mrf.mxu0
      %5019 = vdwg.mxu0
      %5020 = vmatpush.bf16.msra.mxu0 %v4696
      %5021 = vmatpush.bf16.msra.mxu0 %v4692
      %5022 = vmatpush.bf16.msra.mxu0 %v4688
      %5023 = vmatpush.bf16.msra.mxu0 %v4684
      %5024 = vmatpush.bf16.msra.mxu0 %v4680
      %5025 = vmatpush.bf16.msra.mxu0 %v4676
      %5026 = vmatpush.bf16.msra.mxu0 %v4672
      %5027 = vmatpush.bf16.msra.mxu0 %v4668
      %5028 = vmatmul.bf16.gmra.mxu0 %v4046
      %v5029 = vpop.f32.mrf.mxu0
      %v5030 = vadd.f32 %v5017, %v5029
      %v5031 = vpop.f32.mrf.mxu0
      %5032 = vdwg.mxu0
      %v5033 = vtanh.pop %v4874
      %v5034 = vtanh.pop %v4926
      %v5035 = vtanh.pop %v4978
      %v5036 = vtanh.pop %v5030
      %v5037 = vpack.c.bf16 %v5033, %v5033
      %v5038 = vpack.c.bf16 %v5034, %v5034
      %v5039 = vpack.c.bf16 %v5035, %v5035
      %v5040 = vpack.c.bf16 %v5036, %v5036
      %v5041 = vld [vmem:[#allocation12] sm:$0xf]
      %v5042 = vld [vmem:[#allocation12 + $0x4] sm:$0xf]
      %v5043 = vld [vmem:[#allocation12 + $0x8] sm:$0xf]
      %v5044 = vld [vmem:[#allocation12 + $0xc] sm:$0xf]
      %v5045 = vld [vmem:[#allocation12 + $0x10] sm:$0xf]
      %v5046 = vld [vmem:[#allocation12 + $0x14] sm:$0xf]
      %v5047 = vld [vmem:[#allocation12 + $0x18] sm:$0xf]
      %v5048 = vld [vmem:[#allocation12 + $0x1c] sm:$0xf]
      %v5049 = vld [vmem:[#allocation12 + $0x20] sm:$0xf]
      %v5050 = vld [vmem:[#allocation12 + $0x24] sm:$0xf]
      %v5051 = vld [vmem:[#allocation12 + $0x28] sm:$0xf]
      %v5052 = vld [vmem:[#allocation12 + $0x2c] sm:$0xf]
      %v5053 = vld [vmem:[#allocation12 + $0x30] sm:$0xf]
      %v5054 = vld [vmem:[#allocation12 + $0x34] sm:$0xf]
      %v5055 = vld [vmem:[#allocation12 + $0x38] sm:$0xf]
      %v5056 = vld [vmem:[#allocation12 + $0x3c] sm:$0xf]
      %v5057 = vld [vmem:[#allocation12 + $0x40] sm:$0xf]
      %v5058 = vld [vmem:[#allocation12 + $0x44] sm:$0xf]
      %v5059 = vld [vmem:[#allocation12 + $0x48] sm:$0xf]
      %v5060 = vld [vmem:[#allocation12 + $0x4c] sm:$0xf]
      %v5061 = vld [vmem:[#allocation12 + $0x50] sm:$0xf]
      %v5062 = vld [vmem:[#allocation12 + $0x54] sm:$0xf]
      %v5063 = vld [vmem:[#allocation12 + $0x58] sm:$0xf]
      %v5064 = vld [vmem:[#allocation12 + $0x5c] sm:$0xf]
      %v5065 = vld [vmem:[#allocation12 + $0x60] sm:$0xf]
      %v5066 = vld [vmem:[#allocation12 + $0x64] sm:$0xf]
      %v5067 = vld [vmem:[#allocation12 + $0x68] sm:$0xf]
      %v5068 = vld [vmem:[#allocation12 + $0x6c] sm:$0xf]
      %v5069 = vld [vmem:[#allocation12 + $0x70] sm:$0xf]
      %v5070 = vld [vmem:[#allocation12 + $0x74] sm:$0xf]
      %v5071 = vld [vmem:[#allocation12 + $0x78] sm:$0xf]
      %v5072 = vld [vmem:[#allocation12 + $0x7c] sm:$0xf]
      %v5073 = vld [vmem:[#allocation12 + $0x80] sm:$0xf]
      %v5074 = vld [vmem:[#allocation12 + $0x84] sm:$0xf]
      %v5075 = vld [vmem:[#allocation12 + $0x88] sm:$0xf]
      %v5076 = vld [vmem:[#allocation12 + $0x8c] sm:$0xf]
      %v5077 = vld [vmem:[#allocation12 + $0x90] sm:$0xf]
      %v5078 = vld [vmem:[#allocation12 + $0x94] sm:$0xf]
      %v5079 = vld [vmem:[#allocation12 + $0x98] sm:$0xf]
      %v5080 = vld [vmem:[#allocation12 + $0x9c] sm:$0xf]
      %v5081 = vld [vmem:[#allocation12 + $0xa0] sm:$0xf]
      %v5082 = vld [vmem:[#allocation12 + $0xa4] sm:$0xf]
      %v5083 = vld [vmem:[#allocation12 + $0xa8] sm:$0xf]
      %v5084 = vld [vmem:[#allocation12 + $0xac] sm:$0xf]
      %v5085 = vld [vmem:[#allocation12 + $0xb0] sm:$0xf]
      %v5086 = vld [vmem:[#allocation12 + $0xb4] sm:$0xf]
      %v5087 = vld [vmem:[#allocation12 + $0xb8] sm:$0xf]
      %v5088 = vld [vmem:[#allocation12 + $0xbc] sm:$0xf]
      %v5089 = vld [vmem:[#allocation12 + $0xc0] sm:$0xf]
      %v5090 = vld [vmem:[#allocation12 + $0xc4] sm:$0xf]
      %v5091 = vld [vmem:[#allocation12 + $0xc8] sm:$0xf]
      %v5092 = vld [vmem:[#allocation12 + $0xcc] sm:$0xf]
      %v5093 = vld [vmem:[#allocation12 + $0xd0] sm:$0xf]
      %v5094 = vld [vmem:[#allocation12 + $0xd4] sm:$0xf]
      %v5095 = vld [vmem:[#allocation12 + $0xd8] sm:$0xf]
      %v5096 = vld [vmem:[#allocation12 + $0xdc] sm:$0xf]
      %v5097 = vld [vmem:[#allocation12 + $0xe0] sm:$0xf]
      %v5098 = vld [vmem:[#allocation12 + $0xe4] sm:$0xf]
      %v5099 = vld [vmem:[#allocation12 + $0xe8] sm:$0xf]
      %v5100 = vld [vmem:[#allocation12 + $0xec] sm:$0xf]
      %v5101 = vld [vmem:[#allocation12 + $0xf0] sm:$0xf]
      %v5102 = vld [vmem:[#allocation12 + $0xf4] sm:$0xf]
      %v5103 = vld [vmem:[#allocation12 + $0xf8] sm:$0xf]
      %v5104 = vld [vmem:[#allocation12 + $0xfc] sm:$0xf]
      %v5105 = vld [vmem:[#allocation13] sm:$0x1]
      %v5107 = vperm.slane %v5105, 0
      %v5173 = vunpack.c.l.b16 %v5041
      %v5174 = vunpack.c.l.b16 %v5042
      %v5175 = vunpack.c.l.b16 %v5043
      %v5176 = vunpack.c.l.b16 %v5044
      %v5177 = vunpack.c.l.b16 %v5045
      %v5178 = vunpack.c.l.b16 %v5046
      %v5179 = vunpack.c.l.b16 %v5047
      %v5180 = vunpack.c.l.b16 %v5048
      %v5181 = vunpack.c.l.b16 %v5049
      %v5182 = vunpack.c.l.b16 %v5050
      %v5183 = vunpack.c.l.b16 %v5051
      %v5184 = vunpack.c.l.b16 %v5052
      %v5185 = vunpack.c.l.b16 %v5053
      %v5186 = vunpack.c.l.b16 %v5054
      %v5187 = vunpack.c.l.b16 %v5055
      %v5188 = vunpack.c.l.b16 %v5056
      %v5189 = vunpack.c.l.b16 %v5057
      %v5190 = vunpack.c.l.b16 %v5058
      %v5191 = vunpack.c.l.b16 %v5059
      %v5192 = vunpack.c.l.b16 %v5060
      %v5193 = vunpack.c.l.b16 %v5061
      %v5194 = vunpack.c.l.b16 %v5062
      %v5195 = vunpack.c.l.b16 %v5063
      %v5196 = vunpack.c.l.b16 %v5064
      %v5197 = vunpack.c.l.b16 %v5065
      %v5198 = vunpack.c.l.b16 %v5066
      %v5199 = vunpack.c.l.b16 %v5067
      %v5200 = vunpack.c.l.b16 %v5068
      %v5201 = vunpack.c.l.b16 %v5069
      %v5202 = vunpack.c.l.b16 %v5070
      %v5203 = vunpack.c.l.b16 %v5071
      %v5204 = vunpack.c.l.b16 %v5072
      %v5205 = vunpack.c.l.b16 %v5073
      %v5206 = vunpack.c.l.b16 %v5074
      %v5207 = vunpack.c.l.b16 %v5075
      %v5208 = vunpack.c.l.b16 %v5076
      %v5209 = vunpack.c.l.b16 %v5077
      %v5210 = vunpack.c.l.b16 %v5078
      %v5211 = vunpack.c.l.b16 %v5079
      %v5212 = vunpack.c.l.b16 %v5080
      %v5213 = vunpack.c.l.b16 %v5081
      %v5214 = vunpack.c.l.b16 %v5082
      %v5215 = vunpack.c.l.b16 %v5083
      %v5216 = vunpack.c.l.b16 %v5084
      %v5217 = vunpack.c.l.b16 %v5085
      %v5218 = vunpack.c.l.b16 %v5086
      %v5219 = vunpack.c.l.b16 %v5087
      %v5220 = vunpack.c.l.b16 %v5088
      %v5221 = vunpack.c.l.b16 %v5089
      %v5222 = vunpack.c.l.b16 %v5090
      %v5223 = vunpack.c.l.b16 %v5091
      %v5224 = vunpack.c.l.b16 %v5092
      %v5225 = vunpack.c.l.b16 %v5093
      %v5226 = vunpack.c.l.b16 %v5094
      %v5227 = vunpack.c.l.b16 %v5095
      %v5228 = vunpack.c.l.b16 %v5096
      %v5229 = vunpack.c.l.b16 %v5097
      %v5230 = vunpack.c.l.b16 %v5098
      %v5231 = vunpack.c.l.b16 %v5099
      %v5232 = vunpack.c.l.b16 %v5100
      %v5233 = vunpack.c.l.b16 %v5101
      %v5234 = vunpack.c.l.b16 %v5102
      %v5235 = vunpack.c.l.b16 %v5103
      %v5236 = vunpack.c.l.b16 %v5104
      %v5237 = vpack.c.b16 %v5174, %v5173
      %v5238 = vpack.c.b16 %v5176, %v5175
      %v5239 = vpack.c.b16 %v5178, %v5177
      %v5240 = vpack.c.b16 %v5180, %v5179
      %v5241 = vpack.c.b16 %v5182, %v5181
      %v5242 = vpack.c.b16 %v5184, %v5183
      %v5243 = vpack.c.b16 %v5186, %v5185
      %v5244 = vpack.c.b16 %v5188, %v5187
      %v5245 = vpack.c.b16 %v5190, %v5189
      %v5246 = vpack.c.b16 %v5192, %v5191
      %v5247 = vpack.c.b16 %v5194, %v5193
      %v5248 = vpack.c.b16 %v5196, %v5195
      %v5249 = vpack.c.b16 %v5198, %v5197
      %v5250 = vpack.c.b16 %v5200, %v5199
      %v5251 = vpack.c.b16 %v5202, %v5201
      %v5252 = vpack.c.b16 %v5204, %v5203
      %v5253 = vpack.c.b16 %v5206, %v5205
      %v5254 = vpack.c.b16 %v5208, %v5207
      %v5255 = vpack.c.b16 %v5210, %v5209
      %v5256 = vpack.c.b16 %v5212, %v5211
      %v5257 = vpack.c.b16 %v5214, %v5213
      %v5258 = vpack.c.b16 %v5216, %v5215
      %v5259 = vpack.c.b16 %v5218, %v5217
      %v5260 = vpack.c.b16 %v5220, %v5219
      %v5261 = vpack.c.b16 %v5222, %v5221
      %v5262 = vpack.c.b16 %v5224, %v5223
      %v5263 = vpack.c.b16 %v5226, %v5225
      %v5264 = vpack.c.b16 %v5228, %v5227
      %v5265 = vpack.c.b16 %v5230, %v5229
      %v5266 = vpack.c.b16 %v5232, %v5231
      %v5267 = vpack.c.b16 %v5234, %v5233
      %v5268 = vpack.c.b16 %v5236, %v5235
      %5301 = vmatpush.bf16.msra.mxu0 %v5244
      %5302 = vmatpush.bf16.msra.mxu0 %v5243
      %5303 = vmatpush.bf16.msra.mxu0 %v5242
      %5304 = vmatpush.bf16.msra.mxu0 %v5241
      %5305 = vmatpush.bf16.msra.mxu0 %v5240
      %5306 = vmatpush.bf16.msra.mxu0 %v5239
      %5307 = vmatpush.bf16.msra.mxu0 %v5238
      %5308 = vmatpush.bf16.msra.mxu0 %v5237
      %5309 = vmatmul.bf16.gmra.mxu0 %v5037
      %v5310 = vpop.f32.mrf.mxu0
      %v5311 = vadd.f32 %v5107, %v5310
      %v5312 = vpop.f32.mrf.mxu0
      %5313 = vdwg.mxu0
      %5314 = vmatpush.bf16.msra.mxu0 %v5252
      %5315 = vmatpush.bf16.msra.mxu0 %v5251
      %5316 = vmatpush.bf16.msra.mxu0 %v5250
      %5317 = vmatpush.bf16.msra.mxu0 %v5249
      %5318 = vmatpush.bf16.msra.mxu0 %v5248
      %5319 = vmatpush.bf16.msra.mxu0 %v5247
      %5320 = vmatpush.bf16.msra.mxu0 %v5246
      %5321 = vmatpush.bf16.msra.mxu0 %v5245
      %5322 = vmatmul.bf16.gmra.mxu0 %v5038
      %v5323 = vpop.f32.mrf.mxu0
      %v5324 = vadd.f32 %v5311, %v5323
      %v5325 = vpop.f32.mrf.mxu0
      %5326 = vdwg.mxu0
      %5327 = vmatpush.bf16.msra.mxu0 %v5260
      %5328 = vmatpush.bf16.msra.mxu0 %v5259
      %5329 = vmatpush.bf16.msra.mxu0 %v5258
      %5330 = vmatpush.bf16.msra.mxu0 %v5257
      %5331 = vmatpush.bf16.msra.mxu0 %v5256
      %5332 = vmatpush.bf16.msra.mxu0 %v5255
      %5333 = vmatpush.bf16.msra.mxu0 %v5254
      %5334 = vmatpush.bf16.msra.mxu0 %v5253
      %5335 = vmatmul.bf16.gmra.mxu0 %v5039
      %v5336 = vpop.f32.mrf.mxu0
      %v5337 = vadd.f32 %v5324, %v5336
      %v5338 = vpop.f32.mrf.mxu0
      %5339 = vdwg.mxu0
      %5340 = vmatpush.bf16.msra.mxu0 %v5268
      %5341 = vmatpush.bf16.msra.mxu0 %v5267
      %5342 = vmatpush.bf16.msra.mxu0 %v5266
      %5343 = vmatpush.bf16.msra.mxu0 %v5265
      %5344 = vmatpush.bf16.msra.mxu0 %v5264
      %5345 = vmatpush.bf16.msra.mxu0 %v5263
      %5346 = vmatpush.bf16.msra.mxu0 %v5262
      %5347 = vmatpush.bf16.msra.mxu0 %v5261
      %5348 = vmatmul.bf16.gmra.mxu0 %v5040
      %v5349 = vpop.f32.mrf.mxu0
      %v5350 = vadd.f32 %v5337, %v5349
      %v5351 = vpop.f32.mrf.mxu0
      %5352 = vdwg.mxu0
      %5353 = vst [vmem:[%s9] sm:$0xff] %v5350
    $region69: #{nlinet_forward.1} parent=1 // pred_fallthru
      _
    // Predicated region
    $region70: #{nlinet_forward.1} parent=1 // pred_check
      _
    $region71: #{nlinet_forward.1} parent=1 // pred_check_branch
      %5355 = sbr.rel (0) target = $region73
    $region72: #{nlinet_forward.1} parent=1 // pred_region
      _
    $region73: #{nlinet_forward.1} parent=1 // pred_fallthru
      _
    // Predicated region
    $region74: #{nlinet_forward.1} parent=1 // pred_check
      _
    $region75: #{nlinet_forward.1} parent=1 // pred_check_branch
      %5357 = sbr.rel (0) target = $region77
    $region76: #{nlinet_forward.1} parent=1 // pred_region
      _
    $region77: #{nlinet_forward.1} parent=1 // pred_fallthru
      _
    %5358 = vsyncpa [#allocation6], 1
    %5359 = vsyncpa [#allocation8], 1
    %5360 = vsyncpa [#allocation11], 1
    %5361 = vsyncpa [#allocation14], 1

</llo_original>
